<compile_context>
chip_gen: v7x
topology: tpu7x:2x2x1
jax: 0.10.0
libtpu: 0.0.40
codegen_flags: <defaults>
</compile_context>

<pallas_src>
import math
import functools

import jax
import jax.numpy as jnp
from jax.experimental import pallas as pl
from jax.experimental.pallas import tpu as pltpu


def _layernorm(x, w, b, eps=1e-5):
    mu = jnp.mean(x, axis=-1, keepdims=True)
    xc = x - mu
    var = jnp.mean(xc * xc, axis=-1, keepdims=True)
    return xc * jax.lax.rsqrt(var + eps) * w + b


def encoder_kernel(x_ref,
                   ln1w_ref, ln1b_ref, ln2w_ref, ln2b_ref,
                   wq_ref, bq_ref, wkv_ref, bkv_ref,
                   wo_ref, bo_ref,
                   w1_ref, b1_ref, w2_ref, b2_ref,
                   o_ref,
                   kT_ref, vT_ref, yq_ref, acc_ref,
                   *, num_heads, tq):
    nh = num_heads
    qi = pl.program_id(1)
    h = pl.program_id(2)

    S, D = x_ref.shape[1], x_ref.shape[2]
    dh = D // nh

    ln1w = ln1w_ref[0]
    ln1b = ln1b_ref[0]
    row0 = pl.multiple_of(qi * tq, tq)

    # ---- once per batch element: full-seq LN1 + fused lane-dense K/V projection ----
    @pl.when((qi == 0) & (h == 0))
    def _fill_kv_cache():
        xf = x_ref[0]                                                   # (S, D) f32
        yf = _layernorm(xf, ln1w, ln1b).astype(jnp.bfloat16)            # (S, D) bf16
        kv = jnp.dot(yf, wkv_ref[...],
                     preferred_element_type=jnp.float32) + bkv_ref[0]   # (S, 2D) f32
        kvT = kv.T                                                      # one 2-D transpose per batch element
        kT_ref[...] = kvT[:D].astype(jnp.bfloat16)                      # K^T  (D, S)
        vT_ref[...] = kvT[D:].astype(jnp.bfloat16)                      # V^T  (D, S)

    # ---- once per query tile: LN1 of the query rows + zero the attention accumulator ----
    @pl.when(h == 0)
    def _fill_q_cache():
        xq = x_ref[0, pl.ds(row0, tq), :]                               # (TQ, D) f32
        yq_ref[...] = _layernorm(xq, ln1w, ln1b).astype(jnp.bfloat16)
        acc_ref[...] = jnp.zeros_like(acc_ref)

    # ---- per head: Q slice, scores, softmax, PV, this head's share of out-proj ----
    off = pl.multiple_of(h * dh, dh)
    yq = yq_ref[...]                                                    # (TQ, D) bf16
    q_h = (jnp.dot(yq, wq_ref[h], preferred_element_type=jnp.float32)
           + bq_ref[h]).astype(jnp.bfloat16)                            # (TQ, dh); scale pre-folded
    kT_h = kT_ref[pl.ds(off, dh), :]                                    # (dh, S) bf16 (no per-step transpose)
    vT_h = vT_ref[pl.ds(off, dh), :]                                    # (dh, S) bf16

    s = jnp.dot(q_h, kT_h, preferred_element_type=jnp.float32)          # (TQ, S)
    s = s - jnp.max(s, axis=-1, keepdims=True)
    p = jnp.exp(s)
    p = p * pl.reciprocal(jnp.sum(p, axis=-1, keepdims=True), approx=True)
    o_h = jax.lax.dot_general(p.astype(jnp.bfloat16), vT_h,
                              (((1,), (1,)), ((), ())),
                              preferred_element_type=jnp.float32)        # (TQ, dh)
    acc_ref[...] += jnp.dot(o_h.astype(jnp.bfloat16), wo_ref[h],
                            preferred_element_type=jnp.float32)          # (TQ, D)

    # ---- last head: attention residual + pre-norm GELU MLP, write the output tile ----
    @pl.when(h == nh - 1)
    def _finalize():
        xq = x_ref[0, pl.ds(row0, tq), :]                               # (TQ, D) f32
        x1 = xq + acc_ref[...] + bo_ref[0]
        z = _layernorm(x1, ln2w_ref[0], ln2b_ref[0]).astype(jnp.bfloat16)
        h1 = jnp.dot(z, w1_ref[...], preferred_element_type=jnp.float32) + b1_ref[0]
        # Exact (erf) GELU to match nn.GELU() default semantics.
        g = 0.5 * h1 * (1.0 + jax.lax.erf(h1 * (1.0 / math.sqrt(2.0))))
        h2 = jnp.dot(g.astype(jnp.bfloat16), w2_ref[...],
                     preferred_element_type=jnp.float32) + b2_ref[0]
        o_ref[0] = (x1 + h2).astype(o_ref.dtype)


def _prepare_params(params, num_heads):
    """Repack PyTorch-layout params once: pre-transposed, fused, bf16 matmul
    weights; lane-dense f32 biases; head-major Wq/Wo slices; Q scale folded."""
    D = params["wo"].shape[0]
    dh = D // num_heads
    scale = 1.0 / math.sqrt(dh)

    wqkv = params["wqkv"]                     # (3D, D)  (out_features, in_features)
    bqkv = params["bqkv"][0]                  # (3D,)
    wq, wk, wv = wqkv[:D], wqkv[D:2 * D], wqkv[2 * D:]
    bq, bk, bv = bqkv[:D], bqkv[D:2 * D], bqkv[2 * D:]

    return {
        # Q: head-major (nh, D, dh) with 1/sqrt(dh) folded in.
        "wq": (wq.T * scale).reshape(D, num_heads, dh).transpose(1, 0, 2).astype(jnp.bfloat16),
        "bq": (bq * scale).reshape(num_heads, 1, dh).astype(jnp.float32),
        # K,V fused into one lane-dense (D, 2D) matmul; bias lane-dense (1, 2D).
        "wkv": jnp.concatenate([wk.T, wv.T], axis=1).astype(jnp.bfloat16),
        "bkv": jnp.concatenate([bk, bv])[None, :].astype(jnp.float32),
        # out-proj: concat_heads @ Wo.T  ->  head-major (nh, dh, D) slices of Wo.T.
        "wo": params["wo"].T.reshape(num_heads, dh, D).astype(jnp.bfloat16),
        "bo": params["bo"].astype(jnp.float32),
        "w1": params["w1"].T.astype(jnp.bfloat16),      # (D, H)
        "b1": params["b1"].astype(jnp.float32),
        "w2": params["w2"].T.astype(jnp.bfloat16),      # (H, D)
        "b2": params["b2"].astype(jnp.float32),
    }


def _vmem_capacity_bytes():
    try:
        return int(pltpu.get_tpu_info().vmem_capacity_bytes)
    except Exception:
        return 128 * 1024 * 1024


def _vmem_limit_bytes(cap):
    # Leave headroom for Mosaic-internal scratch; ~100 MiB on 128 MiB parts,
    # ~48 MiB on 64 MiB parts (v7x).
    return int(min(max(cap - 16 * 1024 * 1024, 32 * 1024 * 1024), 100 * 1024 * 1024))


def _pick_tq(S, cap):
    if S <= cap:
        return S
    t = cap
    while t >= 8:
        if S % t == 0:
            return t
        t -= 8
    # TODO(synk): falls back to TQ=S when no multiple-of-8 tile divides S; for
    # very large such S this removes S-tiling (latent VMEM pressure).
    return S


def transformer_encoder(x, params, num_heads, tq=None):
    B, S, D = x.shape
    H = params["w1"].shape[0]
    nh = num_heads
    dh = D // nh
    assert D % nh == 0

    kp = _prepare_params(params, num_heads)

    vmem_cap = _vmem_capacity_bytes()
    if tq is None:
        # Bigger query tiles amortize per-step overhead; 128 MiB parts (v5e/v6e)
        # can afford 512, v7x (64 MiB) stays at 256.
        tq = _pick_tq(S, cap=512 if vmem_cap >= 128 * 1024 * 1024 else 256)
    assert S % tq == 0
    n_q = S // tq

    kernel = functools.partial(encoder_kernel, num_heads=nh, tq=tq)
    out_shape = jax.ShapeDtypeStruct((B, S, D), jnp.float32)

    def _build_and_call(buffered_weights):
        def const_spec(shape):
            idx = lambda b, qi, h: (0,) * len(shape)
            if buffered_weights:
                # Constant index map -> re-fetch is already elided; Buffered(1)
                # halves the static weight VMEM footprint.
                return pl.BlockSpec(shape, idx, pipeline_mode=pl.Buffered(1))
            return pl.BlockSpec(shape, idx)

        in_specs = [
            # x: full sequence, fetched once per batch element (index constant in qi/h).
            pl.BlockSpec((1, S, D), lambda b, qi, h: (b, 0, 0)),
            const_spec((1, D)), const_spec((1, D)),              # ln1 w, b
            const_spec((1, D)), const_spec((1, D)),              # ln2 w, b
            const_spec((nh, D, dh)), const_spec((nh, 1, dh)),    # Wq (scaled, head-major), bq
            const_spec((D, 2 * D)), const_spec((1, 2 * D)),      # Wkv fused, bkv
            const_spec((nh, dh, D)), const_spec((1, D)),         # Wo (head-major), bo
            const_spec((D, H)), const_spec((1, H)),              # mlp fc1 (pre-T), b1
            const_spec((H, D)), const_spec((1, D)),              # mlp fc2 (pre-T), b2
        ]

        grid_spec = pltpu.PrefetchScalarGridSpec(
            num_scalar_prefetch=0,
            grid=(B, n_q, nh),
            in_specs=in_specs,
            out_specs=pl.BlockSpec((1, tq, D), lambda b, qi, h: (b, qi, 0)),
            scratch_shapes=[
                pltpu.VMEM((D, S), jnp.bfloat16),    # K^T cache (per batch element)
                pltpu.VMEM((D, S), jnp.bfloat16),    # V^T cache (per batch element)
                pltpu.VMEM((tq, D), jnp.bfloat16),   # LN1(query tile) cache
                pltpu.VMEM((tq, D), jnp.float32),    # attention-output accumulator
            ],
        )

        return pl.pallas_call(
            kernel,
            out_shape=out_shape,
            grid_spec=grid_spec,
            compiler_params=pltpu.CompilerParams(
                # qi / h carry VMEM scratch across steps -> must be "arbitrary";
                # only the batch axis is megacore-parallel.
                dimension_semantics=("parallel", "arbitrary", "arbitrary"),
                vmem_limit_bytes=_vmem_limit_bytes(vmem_cap)),
        )(x,
          params["ln1_w"], params["ln1_b"], params["ln2_w"], params["ln2_b"],
          kp["wq"], kp["bq"], kp["wkv"], kp["bkv"], kp["wo"], kp["bo"],
          kp["w1"], kp["b1"], kp["w2"], kp["b2"])

    try:
        return _build_and_call(buffered_weights=True)
    except Exception:
        # Fallback for environments where pipeline_mode / Buffered(1) is unsupported.
        return _build_and_call(buffered_weights=False)


def reference(x, params, num_heads):
    B, S, D = x.shape
    dh = D // num_heads

    def ln(v, w, b):
        mu = jnp.mean(v, -1, keepdims=True)
        var = jnp.mean((v - mu) ** 2, -1, keepdims=True)
        return (v - mu) / jnp.sqrt(var + 1e-5) * w[0] + b[0]

    y = ln(x, params["ln1_w"], params["ln1_b"])
    qkv = jnp.einsum("bsd,ed->bse", y, params["wqkv"]) + params["bqkv"][0]
    q, k, v = qkv[..., :D], qkv[..., D:2 * D], qkv[..., 2 * D:]
    q = q.reshape(B, S, num_heads, dh).transpose(0, 2, 1, 3) / math.sqrt(dh)
    k = k.reshape(B, S, num_heads, dh).transpose(0, 2, 1, 3)
    v = v.reshape(B, S, num_heads, dh).transpose(0, 2, 1, 3)
    s = jnp.einsum("bhqd,bhkd->bhqk", q, k)
    p = jax.nn.softmax(s, axis=-1)
    a = jnp.einsum("bhqk,bhkd->bhqd", p, v).transpose(0, 2, 1, 3).reshape(B, S, D)
    a = jnp.einsum("bsd,ed->bse", a, params["wo"]) + params["bo"][0]
    x1 = x + a
    z = ln(x1, params["ln2_w"], params["ln2_b"])
    h1 = jnp.einsum("bsd,hd->bsh", z, params["w1"]) + params["b1"][0]
    g = 0.5 * h1 * (1.0 + jax.lax.erf(h1 / math.sqrt(2.0)))
    h2 = jnp.einsum("bsh,dh->bsd", g, params["w2"]) + params["b2"][0]
    return x1 + h2


if __name__ == "__main__":
    B, S, D = 2, 64, 128
    num_heads = 4
    mlp_ratio = 4.0
    H = int(D * mlp_ratio)

    key = jax.random.PRNGKey(0)
    ks = jax.random.split(key, 10)
    params = {
        "ln1_w": jnp.ones((1, D), jnp.float32),
        "ln1_b": jnp.zeros((1, D), jnp.float32),
        "ln2_w": jnp.ones((1, D), jnp.float32),
        "ln2_b": jnp.zeros((1, D), jnp.float32),
        "wqkv": jax.random.normal(ks[0], (3 * D, D), jnp.float32) * 0.05,
        "bqkv": jax.random.normal(ks[1], (1, 3 * D), jnp.float32) * 0.05,
        "wo":   jax.random.normal(ks[2], (D, D), jnp.float32) * 0.05,
        "bo":   jax.random.normal(ks[3], (1, D), jnp.float32) * 0.05,
        "w1":   jax.random.normal(ks[4], (H, D), jnp.float32) * 0.05,
        "b1":   jax.random.normal(ks[5], (1, H), jnp.float32) * 0.05,
        "w2":   jax.random.normal(ks[6], (D, H), jnp.float32) * 0.05,
        "b2":   jax.random.normal(ks[7], (1, D), jnp.float32) * 0.05,
    }
    x = jax.random.normal(ks[8], (B, S, D), jnp.float32)

    ref = reference(x, params, num_heads)

    # tq=32 -> n_q=2: exercises the cross-tile K/V cache reuse and the head axis.
    out = transformer_encoder(x, params, num_heads, tq=32)
    out = jax.block_until_ready(out)

    assert out.shape == (B, S, D)
    # bf16 matmul inputs (f32 accumulation) + approx reciprocal => relaxed tol.
    assert jnp.allclose(out, ref, atol=2e-2, rtol=2e-2), "mismatch vs reference"
    print("KERNEL_OK")
</pallas_src>

<mosaic_0001>
module attributes {stable_mosaic.version = 11 : i64} {
  func.func @encoder_kernel(%arg0: i32, %arg1: i32, %arg2: i32, %arg3: memref<1x64x128xf32, #tpu.memory_space<vmem>>, %arg4: memref<1x128xf32, #tpu.memory_space<vmem>>, %arg5: memref<1x128xf32, #tpu.memory_space<vmem>>, %arg6: memref<1x128xf32, #tpu.memory_space<vmem>>, %arg7: memref<1x128xf32, #tpu.memory_space<vmem>>, %arg8: memref<4x128x32xbf16, #tpu.memory_space<vmem>>, %arg9: memref<4x1x32xf32, #tpu.memory_space<vmem>>, %arg10: memref<128x256xbf16, #tpu.memory_space<vmem>>, %arg11: memref<1x256xf32, #tpu.memory_space<vmem>>, %arg12: memref<4x32x128xbf16, #tpu.memory_space<vmem>>, %arg13: memref<1x128xf32, #tpu.memory_space<vmem>>, %arg14: memref<128x512xbf16, #tpu.memory_space<vmem>>, %arg15: memref<1x512xf32, #tpu.memory_space<vmem>>, %arg16: memref<512x128xbf16, #tpu.memory_space<vmem>>, %arg17: memref<1x128xf32, #tpu.memory_space<vmem>>, %arg18: memref<1x32x128xf32, #tpu.memory_space<vmem>>, %arg19: memref<128x64xbf16, #tpu.memory_space<vmem>>, %arg20: memref<128x64xbf16, #tpu.memory_space<vmem>>, %arg21: memref<32x128xbf16, #tpu.memory_space<vmem>>, %arg22: memref<32x128xf32, #tpu.memory_space<vmem>>) attributes {dimension_semantics = [#tpu.dimension_semantics<parallel>, #tpu.dimension_semantics<arbitrary>, #tpu.dimension_semantics<arbitrary>], iteration_bounds = array<i64: 2, 2, 4>, scalar_prefetch = 0 : i64, scratch_operands = 4 : i64, tpu.core_type = #tpu.core_type<tc>, window_params = [{transform_indices = @transform_0, window_bounds = array<i64: 1, 64, 128>}, {pipeline_mode = #tpu.pipeline_mode<synchronous>, transform_indices = @transform_1, window_bounds = array<i64: 1, 128>}, {pipeline_mode = #tpu.pipeline_mode<synchronous>, transform_indices = @transform_2, window_bounds = array<i64: 1, 128>}, {pipeline_mode = #tpu.pipeline_mode<synchronous>, transform_indices = @transform_3, window_bounds = array<i64: 1, 128>}, {pipeline_mode = #tpu.pipeline_mode<synchronous>, transform_indices = @transform_4, window_bounds = array<i64: 1, 128>}, {pipeline_mode = #tpu.pipeline_mode<synchronous>, transform_indices = @transform_5, window_bounds = array<i64: 4, 128, 32>}, {pipeline_mode = #tpu.pipeline_mode<synchronous>, transform_indices = @transform_6, window_bounds = array<i64: 4, 1, 32>}, {pipeline_mode = #tpu.pipeline_mode<synchronous>, transform_indices = @transform_7, window_bounds = array<i64: 128, 256>}, {pipeline_mode = #tpu.pipeline_mode<synchronous>, transform_indices = @transform_8, window_bounds = array<i64: 1, 256>}, {pipeline_mode = #tpu.pipeline_mode<synchronous>, transform_indices = @transform_9, window_bounds = array<i64: 4, 32, 128>}, {pipeline_mode = #tpu.pipeline_mode<synchronous>, transform_indices = @transform_10, window_bounds = array<i64: 1, 128>}, {pipeline_mode = #tpu.pipeline_mode<synchronous>, transform_indices = @transform_11, window_bounds = array<i64: 128, 512>}, {pipeline_mode = #tpu.pipeline_mode<synchronous>, transform_indices = @transform_12, window_bounds = array<i64: 1, 512>}, {pipeline_mode = #tpu.pipeline_mode<synchronous>, transform_indices = @transform_13, window_bounds = array<i64: 512, 128>}, {pipeline_mode = #tpu.pipeline_mode<synchronous>, transform_indices = @transform_14, window_bounds = array<i64: 1, 128>}, {transform_indices = @transform_15, window_bounds = array<i64: 1, 32, 128>}]} {
    %c0 = arith.constant 0 : index
    %c0_0 = arith.constant 0 : index
    %0 = vector.load %arg4[%c0, %c0_0] : memref<1x128xf32, #tpu.memory_space<vmem>>, vector<1x128xf32>
    %1 = vector.shape_cast %0 : vector<1x128xf32> to vector<128xf32>
    %c0_1 = arith.constant 0 : index
    %c0_2 = arith.constant 0 : index
    %2 = vector.load %arg5[%c0_1, %c0_2] : memref<1x128xf32, #tpu.memory_space<vmem>>, vector<1x128xf32>
    %3 = vector.shape_cast %2 : vector<1x128xf32> to vector<128xf32>
    %c32_i32 = arith.constant 32 : i32
    %4 = arith.muli %arg1, %c32_i32 : i32
    %5 = tpu.assume_multiple %4, 32 : i32
    %c0_i32 = arith.constant 0 : i32
    %6 = arith.cmpi eq, %arg1, %c0_i32 : i32
    %c0_i32_3 = arith.constant 0 : i32
    %7 = arith.cmpi eq, %arg2, %c0_i32_3 : i32
    %8 = arith.andi %6, %7 : i1
    %9 = arith.extui %8 : i1 to i32
    %c0_i32_4 = arith.constant 0 : i32
    %10 = arith.cmpi ne, %9, %c0_i32_4 : i32
    scf.if %10 {
      %c0_28 = arith.constant 0 : index
      %c0_29 = arith.constant 0 : index
      %c0_30 = arith.constant 0 : index
      %55 = vector.load %arg3[%c0_28, %c0_29, %c0_30] : memref<1x64x128xf32, #tpu.memory_space<vmem>>, vector<1x64x128xf32>
      %56 = vector.shape_cast %55 : vector<1x64x128xf32> to vector<64x128xf32>
      %cst_31 = arith.constant dense<0.000000e+00> : vector<64xf32>
      %57 = vector.multi_reduction <add>, %56, %cst_31 [1] : vector<64x128xf32> to vector<64xf32>
      %58 = vector.shape_cast %57 : vector<64xf32> to vector<64x1xf32>
      %cst_32 = arith.constant 1.280000e+02 : f32
      %59 = vector.broadcast %cst_32 : f32 to vector<64x1xf32>
      %60 = arith.divf %58, %59 : vector<64x1xf32>
      %61 = vector.broadcast %60 : vector<64x1xf32> to vector<64x128xf32>
      %62 = arith.subf %56, %61 : vector<64x128xf32>
      %63 = arith.mulf %62, %62 : vector<64x128xf32>
      %cst_33 = arith.constant dense<0.000000e+00> : vector<64xf32>
      %64 = vector.multi_reduction <add>, %63, %cst_33 [1] : vector<64x128xf32> to vector<64xf32>
      %65 = vector.shape_cast %64 : vector<64xf32> to vector<64x1xf32>
      %cst_34 = arith.constant 1.280000e+02 : f32
      %66 = vector.broadcast %cst_34 : f32 to vector<64x1xf32>
      %67 = arith.divf %65, %66 : vector<64x1xf32>
      %cst_35 = arith.constant 9.99999974E-6 : f32
      %68 = vector.broadcast %cst_35 : f32 to vector<64x1xf32>
      %69 = arith.addf %67, %68 : vector<64x1xf32>
      %70 = math.rsqrt %69 : vector<64x1xf32>
      %71 = vector.broadcast %70 : vector<64x1xf32> to vector<64x128xf32>
      %72 = arith.mulf %62, %71 : vector<64x128xf32>
      %73 = vector.shape_cast %1 : vector<128xf32> to vector<1x128xf32>
      %74 = vector.broadcast %73 : vector<1x128xf32> to vector<64x128xf32>
      %75 = arith.mulf %72, %74 : vector<64x128xf32>
      %76 = vector.shape_cast %3 : vector<128xf32> to vector<1x128xf32>
      %77 = vector.broadcast %76 : vector<1x128xf32> to vector<64x128xf32>
      %78 = arith.addf %75, %77 : vector<64x128xf32>
      %79 = arith.truncf %78 : vector<64x128xf32> to vector<64x128xbf16>
      %c0_36 = arith.constant 0 : index
      %c0_37 = arith.constant 0 : index
      %80 = vector.load %arg10[%c0_36, %c0_37] : memref<128x256xbf16, #tpu.memory_space<vmem>>, vector<128x256xbf16>
      %cst_38 = arith.constant dense<0.000000e+00> : vector<64x256xf32>
      %81 = tpu.matmul %79, %80, %cst_38 {dimension_numbers = #tpu.dot_dimension_numbers<[1], [0], [0], [1], [0, 0, 1, 1], [], []>} : vector<64x128xbf16>, vector<128x256xbf16>, vector<64x256xf32> -> vector<64x256xf32>
      %c0_39 = arith.constant 0 : index
      %c0_40 = arith.constant 0 : index
      %82 = vector.load %arg11[%c0_39, %c0_40] : memref<1x256xf32, #tpu.memory_space<vmem>>, vector<1x256xf32>
      %83 = vector.shape_cast %82 : vector<1x256xf32> to vector<256xf32>
      %84 = vector.shape_cast %83 : vector<256xf32> to vector<1x256xf32>
      %85 = vector.broadcast %84 : vector<1x256xf32> to vector<64x256xf32>
      %86 = arith.addf %81, %85 : vector<64x256xf32>
      %87 = tpu.transpose %86, [1, 0] : vector<64x256xf32> -> vector<256x64xf32>
      %88 = vector.extract_strided_slice %87 {offsets = [0, 0], sizes = [128, 64], strides = [1, 1]} : vector<256x64xf32> to vector<128x64xf32>
      %89 = arith.truncf %88 : vector<128x64xf32> to vector<128x64xbf16>
      %c0_41 = arith.constant 0 : index
      %c0_42 = arith.constant 0 : index
      %90 = vector.load %arg19[%c0_41, %c0_42] : memref<128x64xbf16, #tpu.memory_space<vmem>>, vector<128x64xbf16>
      tpu.vector_store %arg19[%c0_41, %c0_42], %89 {strides = array<i32>} : memref<128x64xbf16, #tpu.memory_space<vmem>>, vector<128x64xbf16>,
      %91 = vector.extract_strided_slice %87 {offsets = [128, 0], sizes = [128, 64], strides = [1, 1]} : vector<256x64xf32> to vector<128x64xf32>
      %92 = arith.truncf %91 : vector<128x64xf32> to vector<128x64xbf16>
      %c0_43 = arith.constant 0 : index
      %c0_44 = arith.constant 0 : index
      %93 = vector.load %arg20[%c0_43, %c0_44] : memref<128x64xbf16, #tpu.memory_space<vmem>>, vector<128x64xbf16>
      tpu.vector_store %arg20[%c0_43, %c0_44], %92 {strides = array<i32>} : memref<128x64xbf16, #tpu.memory_space<vmem>>, vector<128x64xbf16>,
    } else {
    }
    %c0_i32_5 = arith.constant 0 : i32
    %11 = arith.cmpi eq, %arg2, %c0_i32_5 : i32
    %12 = arith.extui %11 : i1 to i32
    %c0_i32_6 = arith.constant 0 : i32
    %13 = arith.cmpi ne, %12, %c0_i32_6 : i32
    scf.if %13 {
      %c0_28 = arith.constant 0 : index
      %55 = arith.index_cast %5 : i32 to index
      %c0_29 = arith.constant 0 : index
      %56 = vector.load %arg3[%c0_28, %55, %c0_29] : memref<1x64x128xf32, #tpu.memory_space<vmem>>, vector<1x32x128xf32>
      %57 = vector.shape_cast %56 : vector<1x32x128xf32> to vector<32x128xf32>
      %cst_30 = arith.constant dense<0.000000e+00> : vector<32xf32>
      %58 = vector.multi_reduction <add>, %57, %cst_30 [1] : vector<32x128xf32> to vector<32xf32>
      %59 = vector.shape_cast %58 : vector<32xf32> to vector<32x1xf32>
      %cst_31 = arith.constant 1.280000e+02 : f32
      %60 = vector.broadcast %cst_31 : f32 to vector<32x1xf32>
      %61 = arith.divf %59, %60 : vector<32x1xf32>
      %62 = vector.broadcast %61 : vector<32x1xf32> to vector<32x128xf32>
      %63 = arith.subf %57, %62 : vector<32x128xf32>
      %64 = arith.mulf %63, %63 : vector<32x128xf32>
      %cst_32 = arith.constant dense<0.000000e+00> : vector<32xf32>
      %65 = vector.multi_reduction <add>, %64, %cst_32 [1] : vector<32x128xf32> to vector<32xf32>
      %66 = vector.shape_cast %65 : vector<32xf32> to vector<32x1xf32>
      %cst_33 = arith.constant 1.280000e+02 : f32
      %67 = vector.broadcast %cst_33 : f32 to vector<32x1xf32>
      %68 = arith.divf %66, %67 : vector<32x1xf32>
      %cst_34 = arith.constant 9.99999974E-6 : f32
      %69 = vector.broadcast %cst_34 : f32 to vector<32x1xf32>
      %70 = arith.addf %68, %69 : vector<32x1xf32>
      %71 = math.rsqrt %70 : vector<32x1xf32>
      %72 = vector.broadcast %71 : vector<32x1xf32> to vector<32x128xf32>
      %73 = arith.mulf %63, %72 : vector<32x128xf32>
      %74 = vector.shape_cast %1 : vector<128xf32> to vector<1x128xf32>
      %75 = vector.broadcast %74 : vector<1x128xf32> to vector<32x128xf32>
      %76 = arith.mulf %73, %75 : vector<32x128xf32>
      %77 = vector.shape_cast %3 : vector<128xf32> to vector<1x128xf32>
      %78 = vector.broadcast %77 : vector<1x128xf32> to vector<32x128xf32>
      %79 = arith.addf %76, %78 : vector<32x128xf32>
      %80 = arith.truncf %79 : vector<32x128xf32> to vector<32x128xbf16>
      %c0_35 = arith.constant 0 : index
      %c0_36 = arith.constant 0 : index
      %81 = vector.load %arg21[%c0_35, %c0_36] : memref<32x128xbf16, #tpu.memory_space<vmem>>, vector<32x128xbf16>
      tpu.vector_store %arg21[%c0_35, %c0_36], %80 {strides = array<i32>} : memref<32x128xbf16, #tpu.memory_space<vmem>>, vector<32x128xbf16>,
      %cst_37 = arith.constant 0.000000e+00 : f32
      %82 = vector.broadcast %cst_37 : f32 to vector<32x128xf32>
      %c0_38 = arith.constant 0 : index
      %c0_39 = arith.constant 0 : index
      %83 = vector.load %arg22[%c0_38, %c0_39] : memref<32x128xf32, #tpu.memory_space<vmem>>, vector<32x128xf32>
      tpu.vector_store %arg22[%c0_38, %c0_39], %82 {strides = array<i32>} : memref<32x128xf32, #tpu.memory_space<vmem>>, vector<32x128xf32>,
    } else {
    }
    %c32_i32_7 = arith.constant 32 : i32
    %14 = arith.muli %arg2, %c32_i32_7 : i32
    %15 = tpu.assume_multiple %14, 32 : i32
    %c0_8 = arith.constant 0 : index
    %c0_9 = arith.constant 0 : index
    %16 = vector.load %arg21[%c0_8, %c0_9] : memref<32x128xbf16, #tpu.memory_space<vmem>>, vector<32x128xbf16>
    %17 = arith.index_cast %arg2 : i32 to index
    %c0_10 = arith.constant 0 : index
    %c0_11 = arith.constant 0 : index
    %18 = vector.load %arg8[%17, %c0_10, %c0_11] : memref<4x128x32xbf16, #tpu.memory_space<vmem>>, vector<1x128x32xbf16>
    %19 = vector.shape_cast %18 : vector<1x128x32xbf16> to vector<128x32xbf16>
    %cst = arith.constant dense<0.000000e+00> : vector<32x32xf32>
    %20 = tpu.matmul %16, %19, %cst {dimension_numbers = #tpu.dot_dimension_numbers<[1], [0], [0], [1], [0, 0, 1, 1], [], []>} : vector<32x128xbf16>, vector<128x32xbf16>, vector<32x32xf32> -> vector<32x32xf32>
    %21 = arith.index_cast %arg2 : i32 to index
    %c0_12 = arith.constant 0 : index
    %c0_13 = arith.constant 0 : index
    %22 = vector.load %arg9[%21, %c0_12, %c0_13] : memref<4x1x32xf32, #tpu.memory_space<vmem>>, vector<1x1x32xf32>
    %23 = vector.shape_cast %22 : vector<1x1x32xf32> to vector<1x32xf32>
    %24 = vector.broadcast %23 : vector<1x32xf32> to vector<32x32xf32>
    %25 = arith.addf %20, %24 : vector<32x32xf32>
    %26 = arith.truncf %25 : vector<32x32xf32> to vector<32x32xbf16>
    %27 = arith.index_cast %15 : i32 to index
    %c0_14 = arith.constant 0 : index
    %28 = vector.load %arg19[%27, %c0_14] : memref<128x64xbf16, #tpu.memory_space<vmem>>, vector<32x64xbf16>
    %29 = arith.index_cast %15 : i32 to index
    %c0_15 = arith.constant 0 : index
    %30 = vector.load %arg20[%29, %c0_15] : memref<128x64xbf16, #tpu.memory_space<vmem>>, vector<32x64xbf16>
    %cst_16 = arith.constant dense<0.000000e+00> : vector<32x64xf32>
    %31 = tpu.matmul %26, %28, %cst_16 {dimension_numbers = #tpu.dot_dimension_numbers<[1], [0], [0], [1], [0, 0, 1, 1], [], []>} : vector<32x32xbf16>, vector<32x64xbf16>, vector<32x64xf32> -> vector<32x64xf32>
    %cst_17 = arith.constant dense<0xFF800000> : vector<32xf32>
    %32 = vector.multi_reduction <maximumf>, %31, %cst_17 [1] : vector<32x64xf32> to vector<32xf32>
    %33 = vector.shape_cast %32 : vector<32xf32> to vector<32x1xf32>
    %34 = vector.broadcast %33 : vector<32x1xf32> to vector<32x64xf32>
    %35 = arith.subf %31, %34 : vector<32x64xf32>
    %36 = math.exp %35 : vector<32x64xf32>
    %cst_18 = arith.constant dense<0.000000e+00> : vector<32xf32>
    %37 = vector.multi_reduction <add>, %36, %cst_18 [1] : vector<32x64xf32> to vector<32xf32>
    %38 = vector.shape_cast %37 : vector<32xf32> to vector<32x1xf32>
    %39 = tpu.reciprocal %38 {approx = true} : vector<32x1xf32> -> vector<32x1xf32>
    %40 = vector.broadcast %39 : vector<32x1xf32> to vector<32x64xf32>
    %41 = arith.mulf %36, %40 : vector<32x64xf32>
    %42 = arith.truncf %41 : vector<32x64xf32> to vector<32x64xbf16>
    %cst_19 = arith.constant dense<0.000000e+00> : vector<32x32xf32>
    %43 = tpu.matmul %42, %30, %cst_19 {dimension_numbers = #tpu.dot_dimension_numbers<[1], [1], [0], [0], [0, 0, 1, 0], [], []>} : vector<32x64xbf16>, vector<32x64xbf16>, vector<32x32xf32> -> vector<32x32xf32>
    %c0_20 = arith.constant 0 : index
    %c0_21 = arith.constant 0 : index
    %44 = vector.load %arg22[%c0_20, %c0_21] : memref<32x128xf32, #tpu.memory_space<vmem>>, vector<32x128xf32>
    %45 = arith.truncf %43 : vector<32x32xf32> to vector<32x32xbf16>
    %46 = arith.index_cast %arg2 : i32 to index
    %c0_22 = arith.constant 0 : index
    %c0_23 = arith.constant 0 : index
    %47 = vector.load %arg12[%46, %c0_22, %c0_23] : memref<4x32x128xbf16, #tpu.memory_space<vmem>>, vector<1x32x128xbf16>
    %48 = vector.shape_cast %47 : vector<1x32x128xbf16> to vector<32x128xbf16>
    %cst_24 = arith.constant dense<0.000000e+00> : vector<32x128xf32>
    %49 = tpu.matmul %45, %48, %cst_24 {dimension_numbers = #tpu.dot_dimension_numbers<[1], [0], [0], [1], [0, 0, 1, 1], [], []>} : vector<32x32xbf16>, vector<32x128xbf16>, vector<32x128xf32> -> vector<32x128xf32>
    %50 = arith.addf %44, %49 : vector<32x128xf32>
    %c0_25 = arith.constant 0 : index
    %c0_26 = arith.constant 0 : index
    %51 = vector.load %arg22[%c0_25, %c0_26] : memref<32x128xf32, #tpu.memory_space<vmem>>, vector<32x128xf32>
    tpu.vector_store %arg22[%c0_25, %c0_26], %50 {strides = array<i32>} : memref<32x128xf32, #tpu.memory_space<vmem>>, vector<32x128xf32>,
    %c3_i32 = arith.constant 3 : i32
    %52 = arith.cmpi eq, %arg2, %c3_i32 : i32
    %53 = arith.extui %52 : i1 to i32
    %c0_i32_27 = arith.constant 0 : i32
    %54 = arith.cmpi ne, %53, %c0_i32_27 : i32
    scf.if %54 {
      %c0_28 = arith.constant 0 : index
      %55 = arith.index_cast %5 : i32 to index
      %c0_29 = arith.constant 0 : index
      %56 = vector.load %arg3[%c0_28, %55, %c0_29] : memref<1x64x128xf32, #tpu.memory_space<vmem>>, vector<1x32x128xf32>
      %57 = vector.shape_cast %56 : vector<1x32x128xf32> to vector<32x128xf32>
      %c0_30 = arith.constant 0 : index
      %c0_31 = arith.constant 0 : index
      %58 = vector.load %arg22[%c0_30, %c0_31] : memref<32x128xf32, #tpu.memory_space<vmem>>, vector<32x128xf32>
      %59 = arith.addf %57, %58 : vector<32x128xf32>
      %c0_32 = arith.constant 0 : index
      %c0_33 = arith.constant 0 : index
      %60 = vector.load %arg13[%c0_32, %c0_33] : memref<1x128xf32, #tpu.memory_space<vmem>>, vector<1x128xf32>
      %61 = vector.shape_cast %60 : vector<1x128xf32> to vector<128xf32>
      %62 = vector.shape_cast %61 : vector<128xf32> to vector<1x128xf32>
      %63 = vector.broadcast %62 : vector<1x128xf32> to vector<32x128xf32>
      %64 = arith.addf %59, %63 : vector<32x128xf32>
      %c0_34 = arith.constant 0 : index
      %c0_35 = arith.constant 0 : index
      %65 = vector.load %arg6[%c0_34, %c0_35] : memref<1x128xf32, #tpu.memory_space<vmem>>, vector<1x128xf32>
      %66 = vector.shape_cast %65 : vector<1x128xf32> to vector<128xf32>
      %c0_36 = arith.constant 0 : index
      %c0_37 = arith.constant 0 : index
      %67 = vector.load %arg7[%c0_36, %c0_37] : memref<1x128xf32, #tpu.memory_space<vmem>>, vector<1x128xf32>
      %68 = vector.shape_cast %67 : vector<1x128xf32> to vector<128xf32>
      %cst_38 = arith.constant dense<0.000000e+00> : vector<32xf32>
      %69 = vector.multi_reduction <add>, %64, %cst_38 [1] : vector<32x128xf32> to vector<32xf32>
      %70 = vector.shape_cast %69 : vector<32xf32> to vector<32x1xf32>
      %cst_39 = arith.constant 1.280000e+02 : f32
      %71 = vector.broadcast %cst_39 : f32 to vector<32x1xf32>
      %72 = arith.divf %70, %71 : vector<32x1xf32>
      %73 = vector.broadcast %72 : vector<32x1xf32> to vector<32x128xf32>
      %74 = arith.subf %64, %73 : vector<32x128xf32>
      %75 = arith.mulf %74, %74 : vector<32x128xf32>
      %cst_40 = arith.constant dense<0.000000e+00> : vector<32xf32>
      %76 = vector.multi_reduction <add>, %75, %cst_40 [1] : vector<32x128xf32> to vector<32xf32>
      %77 = vector.shape_cast %76 : vector<32xf32> to vector<32x1xf32>
      %cst_41 = arith.constant 1.280000e+02 : f32
      %78 = vector.broadcast %cst_41 : f32 to vector<32x1xf32>
      %79 = arith.divf %77, %78 : vector<32x1xf32>
      %cst_42 = arith.constant 9.99999974E-6 : f32
      %80 = vector.broadcast %cst_42 : f32 to vector<32x1xf32>
      %81 = arith.addf %79, %80 : vector<32x1xf32>
      %82 = math.rsqrt %81 : vector<32x1xf32>
      %83 = vector.broadcast %82 : vector<32x1xf32> to vector<32x128xf32>
      %84 = arith.mulf %74, %83 : vector<32x128xf32>
      %85 = vector.shape_cast %66 : vector<128xf32> to vector<1x128xf32>
      %86 = vector.broadcast %85 : vector<1x128xf32> to vector<32x128xf32>
      %87 = arith.mulf %84, %86 : vector<32x128xf32>
      %88 = vector.shape_cast %68 : vector<128xf32> to vector<1x128xf32>
      %89 = vector.broadcast %88 : vector<1x128xf32> to vector<32x128xf32>
      %90 = arith.addf %87, %89 : vector<32x128xf32>
      %91 = arith.truncf %90 : vector<32x128xf32> to vector<32x128xbf16>
      %c0_43 = arith.constant 0 : index
      %c0_44 = arith.constant 0 : index
      %92 = vector.load %arg14[%c0_43, %c0_44] : memref<128x512xbf16, #tpu.memory_space<vmem>>, vector<128x512xbf16>
      %cst_45 = arith.constant dense<0.000000e+00> : vector<32x512xf32>
      %93 = tpu.matmul %91, %92, %cst_45 {dimension_numbers = #tpu.dot_dimension_numbers<[1], [0], [0], [1], [0, 0, 1, 1], [], []>} : vector<32x128xbf16>, vector<128x512xbf16>, vector<32x512xf32> -> vector<32x512xf32>
      %c0_46 = arith.constant 0 : index
      %c0_47 = arith.constant 0 : index
      %94 = vector.load %arg15[%c0_46, %c0_47] : memref<1x512xf32, #tpu.memory_space<vmem>>, vector<1x512xf32>
      %95 = vector.shape_cast %94 : vector<1x512xf32> to vector<512xf32>
      %96 = vector.shape_cast %95 : vector<512xf32> to vector<1x512xf32>
      %97 = vector.broadcast %96 : vector<1x512xf32> to vector<32x512xf32>
      %98 = arith.addf %93, %97 : vector<32x512xf32>
      %cst_48 = arith.constant 5.000000e-01 : f32
      %99 = vector.broadcast %cst_48 : f32 to vector<32x512xf32>
      %100 = arith.mulf %99, %98 : vector<32x512xf32>
      %cst_49 = arith.constant 0.707106769 : f32
      %101 = vector.broadcast %cst_49 : f32 to vector<32x512xf32>
      %102 = arith.mulf %98, %101 : vector<32x512xf32>
      %103 = math.erf %102 : vector<32x512xf32>
      %cst_50 = arith.constant 1.000000e+00 : f32
      %104 = vector.broadcast %cst_50 : f32 to vector<32x512xf32>
      %105 = arith.addf %104, %103 : vector<32x512xf32>
      %106 = arith.mulf %100, %105 : vector<32x512xf32>
      %107 = arith.truncf %106 : vector<32x512xf32> to vector<32x512xbf16>
      %c0_51 = arith.constant 0 : index
      %c0_52 = arith.constant 0 : index
      %108 = vector.load %arg16[%c0_51, %c0_52] : memref<512x128xbf16, #tpu.memory_space<vmem>>, vector<512x128xbf16>
      %cst_53 = arith.constant dense<0.000000e+00> : vector<32x128xf32>
      %109 = tpu.matmul %107, %108, %cst_53 {dimension_numbers = #tpu.dot_dimension_numbers<[1], [0], [0], [1], [0, 0, 1, 1], [], []>} : vector<32x512xbf16>, vector<512x128xbf16>, vector<32x128xf32> -> vector<32x128xf32>
      %c0_54 = arith.constant 0 : index
      %c0_55 = arith.constant 0 : index
      %110 = vector.load %arg17[%c0_54, %c0_55] : memref<1x128xf32, #tpu.memory_space<vmem>>, vector<1x128xf32>
      %111 = vector.shape_cast %110 : vector<1x128xf32> to vector<128xf32>
      %112 = vector.shape_cast %111 : vector<128xf32> to vector<1x128xf32>
      %113 = vector.broadcast %112 : vector<1x128xf32> to vector<32x128xf32>
      %114 = arith.addf %109, %113 : vector<32x128xf32>
      %115 = arith.addf %64, %114 : vector<32x128xf32>
      %c0_56 = arith.constant 0 : index
      %c0_57 = arith.constant 0 : index
      %c0_58 = arith.constant 0 : index
      %116 = vector.load %arg18[%c0_56, %c0_57, %c0_58] : memref<1x32x128xf32, #tpu.memory_space<vmem>>, vector<1x32x128xf32>
      %117 = vector.shape_cast %116 : vector<1x32x128xf32> to vector<32x128xf32>
      %118 = vector.shape_cast %115 : vector<32x128xf32> to vector<1x32x128xf32>
      tpu.vector_store %arg18[%c0_56, %c0_57, %c0_58], %118 {strides = array<i32>} : memref<1x32x128xf32, #tpu.memory_space<vmem>>, vector<1x32x128xf32>,
    } else {
    }
    return
  }
  func.func @transform_0(%arg0: i32, %arg1: i32, %arg2: i32) -> (i32, i32, i32) {
    %c0_i32 = arith.constant 0 : i32
    %c0_i32_0 = arith.constant 0 : i32
    %c0_i32_1 = arith.constant 0 : i32
    return %arg0, %c0_i32, %c0_i32_0 : i32, i32, i32
  }
  func.func @transform_1(%arg0: i32, %arg1: i32, %arg2: i32) -> (i32, i32) {
    %c0_i32 = arith.constant 0 : i32
    %c0_i32_0 = arith.constant 0 : i32
    %c0_i32_1 = arith.constant 0 : i32
    return %c0_i32, %c0_i32_0 : i32, i32
  }
  func.func @transform_2(%arg0: i32, %arg1: i32, %arg2: i32) -> (i32, i32) {
    %c0_i32 = arith.constant 0 : i32
    %c0_i32_0 = arith.constant 0 : i32
    %c0_i32_1 = arith.constant 0 : i32
    return %c0_i32, %c0_i32_0 : i32, i32
  }
  func.func @transform_3(%arg0: i32, %arg1: i32, %arg2: i32) -> (i32, i32) {
    %c0_i32 = arith.constant 0 : i32
    %c0_i32_0 = arith.constant 0 : i32
    %c0_i32_1 = arith.constant 0 : i32
    return %c0_i32, %c0_i32_0 : i32, i32
  }
  func.func @transform_4(%arg0: i32, %arg1: i32, %arg2: i32) -> (i32, i32) {
    %c0_i32 = arith.constant 0 : i32
    %c0_i32_0 = arith.constant 0 : i32
    %c0_i32_1 = arith.constant 0 : i32
    return %c0_i32, %c0_i32_0 : i32, i32
  }
  func.func @transform_5(%arg0: i32, %arg1: i32, %arg2: i32) -> (i32, i32, i32) {
    %c0_i32 = arith.constant 0 : i32
    %c0_i32_0 = arith.constant 0 : i32
    %c0_i32_1 = arith.constant 0 : i32
    %c0_i32_2 = arith.constant 0 : i32
    return %c0_i32, %c0_i32_0, %c0_i32_1 : i32, i32, i32
  }
  func.func @transform_6(%arg0: i32, %arg1: i32, %arg2: i32) -> (i32, i32, i32) {
    %c0_i32 = arith.constant 0 : i32
    %c0_i32_0 = arith.constant 0 : i32
    %c0_i32_1 = arith.constant 0 : i32
    %c0_i32_2 = arith.constant 0 : i32
    return %c0_i32, %c0_i32_0, %c0_i32_1 : i32, i32, i32
  }
  func.func @transform_7(%arg0: i32, %arg1: i32, %arg2: i32) -> (i32, i32) {
    %c0_i32 = arith.constant 0 : i32
    %c0_i32_0 = arith.constant 0 : i32
    %c0_i32_1 = arith.constant 0 : i32
    return %c0_i32, %c0_i32_0 : i32, i32
  }
  func.func @transform_8(%arg0: i32, %arg1: i32, %arg2: i32) -> (i32, i32) {
    %c0_i32 = arith.constant 0 : i32
    %c0_i32_0 = arith.constant 0 : i32
    %c0_i32_1 = arith.constant 0 : i32
    return %c0_i32, %c0_i32_0 : i32, i32
  }
  func.func @transform_9(%arg0: i32, %arg1: i32, %arg2: i32) -> (i32, i32, i32) {
    %c0_i32 = arith.constant 0 : i32
    %c0_i32_0 = arith.constant 0 : i32
    %c0_i32_1 = arith.constant 0 : i32
    %c0_i32_2 = arith.constant 0 : i32
    return %c0_i32, %c0_i32_0, %c0_i32_1 : i32, i32, i32
  }
  func.func @transform_10(%arg0: i32, %arg1: i32, %arg2: i32) -> (i32, i32) {
    %c0_i32 = arith.constant 0 : i32
    %c0_i32_0 = arith.constant 0 : i32
    %c0_i32_1 = arith.constant 0 : i32
    return %c0_i32, %c0_i32_0 : i32, i32
  }
  func.func @transform_11(%arg0: i32, %arg1: i32, %arg2: i32) -> (i32, i32) {
    %c0_i32 = arith.constant 0 : i32
    %c0_i32_0 = arith.constant 0 : i32
    %c0_i32_1 = arith.constant 0 : i32
    return %c0_i32, %c0_i32_0 : i32, i32
  }
  func.func @transform_12(%arg0: i32, %arg1: i32, %arg2: i32) -> (i32, i32) {
    %c0_i32 = arith.constant 0 : i32
    %c0_i32_0 = arith.constant 0 : i32
    %c0_i32_1 = arith.constant 0 : i32
    return %c0_i32, %c0_i32_0 : i32, i32
  }
  func.func @transform_13(%arg0: i32, %arg1: i32, %arg2: i32) -> (i32, i32) {
    %c0_i32 = arith.constant 0 : i32
    %c0_i32_0 = arith.constant 0 : i32
    %c0_i32_1 = arith.constant 0 : i32
    return %c0_i32, %c0_i32_0 : i32, i32
  }
  func.func @transform_14(%arg0: i32, %arg1: i32, %arg2: i32) -> (i32, i32) {
    %c0_i32 = arith.constant 0 : i32
    %c0_i32_0 = arith.constant 0 : i32
    %c0_i32_1 = arith.constant 0 : i32
    return %c0_i32, %c0_i32_0 : i32, i32
  }
  func.func @transform_15(%arg0: i32, %arg1: i32, %arg2: i32) -> (i32, i32, i32) {
    %c0_i32 = arith.constant 0 : i32
    %c0_i32_0 = arith.constant 0 : i32
    return %arg0, %arg1, %c0_i32 : i32, i32, i32
  }
}

module attributes {stable_mosaic.version = 11 : i64} {
  func.func @encoder_kernel(%arg0: i32, %arg1: i32, %arg2: i32, %arg3: memref<1x64x128xf32, #tpu.memory_space<vmem>>, %arg4: memref<1x128xf32, #tpu.memory_space<vmem>>, %arg5: memref<1x128xf32, #tpu.memory_space<vmem>>, %arg6: memref<1x128xf32, #tpu.memory_space<vmem>>, %arg7: memref<1x128xf32, #tpu.memory_space<vmem>>, %arg8: memref<4x128x32xbf16, #tpu.memory_space<vmem>>, %arg9: memref<4x1x32xf32, #tpu.memory_space<vmem>>, %arg10: memref<128x256xbf16, #tpu.memory_space<vmem>>, %arg11: memref<1x256xf32, #tpu.memory_space<vmem>>, %arg12: memref<4x32x128xbf16, #tpu.memory_space<vmem>>, %arg13: memref<1x128xf32, #tpu.memory_space<vmem>>, %arg14: memref<128x512xbf16, #tpu.memory_space<vmem>>, %arg15: memref<1x512xf32, #tpu.memory_space<vmem>>, %arg16: memref<512x128xbf16, #tpu.memory_space<vmem>>, %arg17: memref<1x128xf32, #tpu.memory_space<vmem>>, %arg18: memref<1x32x128xf32, #tpu.memory_space<vmem>>, %arg19: memref<128x64xbf16, #tpu.memory_space<vmem>>, %arg20: memref<128x64xbf16, #tpu.memory_space<vmem>>, %arg21: memref<32x128xbf16, #tpu.memory_space<vmem>>, %arg22: memref<32x128xf32, #tpu.memory_space<vmem>>) attributes {dimension_semantics = [#tpu.dimension_semantics<parallel>, #tpu.dimension_semantics<arbitrary>, #tpu.dimension_semantics<arbitrary>], iteration_bounds = array<i64: 2, 2, 4>, scalar_prefetch = 0 : i64, scratch_operands = 4 : i64, tpu.core_type = #tpu.core_type<tc>, window_params = [{transform_indices = @transform_0, window_bounds = array<i64: 1, 64, 128>}, {pipeline_mode = #tpu.pipeline_mode<synchronous>, transform_indices = @transform_1, window_bounds = array<i64: 1, 128>}, {pipeline_mode = #tpu.pipeline_mode<synchronous>, transform_indices = @transform_2, window_bounds = array<i64: 1, 128>}, {pipeline_mode = #tpu.pipeline_mode<synchronous>, transform_indices = @transform_3, window_bounds = array<i64: 1, 128>}, {pipeline_mode = #tpu.pipeline_mode<synchronous>, transform_indices = @transform_4, window_bounds = array<i64: 1, 128>}, {pipeline_mode = #tpu.pipeline_mode<synchronous>, transform_indices = @transform_5, window_bounds = array<i64: 4, 128, 32>}, {pipeline_mode = #tpu.pipeline_mode<synchronous>, transform_indices = @transform_6, window_bounds = array<i64: 4, 1, 32>}, {pipeline_mode = #tpu.pipeline_mode<synchronous>, transform_indices = @transform_7, window_bounds = array<i64: 128, 256>}, {pipeline_mode = #tpu.pipeline_mode<synchronous>, transform_indices = @transform_8, window_bounds = array<i64: 1, 256>}, {pipeline_mode = #tpu.pipeline_mode<synchronous>, transform_indices = @transform_9, window_bounds = array<i64: 4, 32, 128>}, {pipeline_mode = #tpu.pipeline_mode<synchronous>, transform_indices = @transform_10, window_bounds = array<i64: 1, 128>}, {pipeline_mode = #tpu.pipeline_mode<synchronous>, transform_indices = @transform_11, window_bounds = array<i64: 128, 512>}, {pipeline_mode = #tpu.pipeline_mode<synchronous>, transform_indices = @transform_12, window_bounds = array<i64: 1, 512>}, {pipeline_mode = #tpu.pipeline_mode<synchronous>, transform_indices = @transform_13, window_bounds = array<i64: 512, 128>}, {pipeline_mode = #tpu.pipeline_mode<synchronous>, transform_indices = @transform_14, window_bounds = array<i64: 1, 128>}, {transform_indices = @transform_15, window_bounds = array<i64: 1, 32, 128>}]} {
    %c0 = arith.constant 0 : index
    %c0_0 = arith.constant 0 : index
    %0 = vector.load %arg4[%c0, %c0_0] : memref<1x128xf32, #tpu.memory_space<vmem>>, vector<1x128xf32>
    %1 = vector.shape_cast %0 : vector<1x128xf32> to vector<128xf32>
    %c0_1 = arith.constant 0 : index
    %c0_2 = arith.constant 0 : index
    %2 = vector.load %arg5[%c0_1, %c0_2] : memref<1x128xf32, #tpu.memory_space<vmem>>, vector<1x128xf32>
    %3 = vector.shape_cast %2 : vector<1x128xf32> to vector<128xf32>
    %c32_i32 = arith.constant 32 : i32
    %4 = arith.muli %arg1, %c32_i32 : i32
    %5 = tpu.assume_multiple %4, 32 : i32
    %c0_i32 = arith.constant 0 : i32
    %6 = arith.cmpi eq, %arg1, %c0_i32 : i32
    %c0_i32_3 = arith.constant 0 : i32
    %7 = arith.cmpi eq, %arg2, %c0_i32_3 : i32
    %8 = arith.andi %6, %7 : i1
    %9 = arith.extui %8 : i1 to i32
    %c0_i32_4 = arith.constant 0 : i32
    %10 = arith.cmpi ne, %9, %c0_i32_4 : i32
    scf.if %10 {
      %c0_28 = arith.constant 0 : index
      %c0_29 = arith.constant 0 : index
      %c0_30 = arith.constant 0 : index
      %55 = vector.load %arg3[%c0_28, %c0_29, %c0_30] : memref<1x64x128xf32, #tpu.memory_space<vmem>>, vector<1x64x128xf32>
      %56 = vector.shape_cast %55 : vector<1x64x128xf32> to vector<64x128xf32>
      %cst_31 = arith.constant dense<0.000000e+00> : vector<64xf32>
      %57 = vector.multi_reduction <add>, %56, %cst_31 [1] : vector<64x128xf32> to vector<64xf32>
      %58 = vector.shape_cast %57 : vector<64xf32> to vector<64x1xf32>
      %cst_32 = arith.constant 1.280000e+02 : f32
      %59 = vector.broadcast %cst_32 : f32 to vector<64x1xf32>
      %60 = arith.divf %58, %59 : vector<64x1xf32>
      %61 = vector.broadcast %60 : vector<64x1xf32> to vector<64x128xf32>
      %62 = arith.subf %56, %61 : vector<64x128xf32>
      %63 = arith.mulf %62, %62 : vector<64x128xf32>
      %cst_33 = arith.constant dense<0.000000e+00> : vector<64xf32>
      %64 = vector.multi_reduction <add>, %63, %cst_33 [1] : vector<64x128xf32> to vector<64xf32>
      %65 = vector.shape_cast %64 : vector<64xf32> to vector<64x1xf32>
      %cst_34 = arith.constant 1.280000e+02 : f32
      %66 = vector.broadcast %cst_34 : f32 to vector<64x1xf32>
      %67 = arith.divf %65, %66 : vector<64x1xf32>
      %cst_35 = arith.constant 9.99999974E-6 : f32
      %68 = vector.broadcast %cst_35 : f32 to vector<64x1xf32>
      %69 = arith.addf %67, %68 : vector<64x1xf32>
      %70 = math.rsqrt %69 : vector<64x1xf32>
      %71 = vector.broadcast %70 : vector<64x1xf32> to vector<64x128xf32>
      %72 = arith.mulf %62, %71 : vector<64x128xf32>
      %73 = vector.shape_cast %1 : vector<128xf32> to vector<1x128xf32>
      %74 = vector.broadcast %73 : vector<1x128xf32> to vector<64x128xf32>
      %75 = arith.mulf %72, %74 : vector<64x128xf32>
      %76 = vector.shape_cast %3 : vector<128xf32> to vector<1x128xf32>
      %77 = vector.broadcast %76 : vector<1x128xf32> to vector<64x128xf32>
      %78 = arith.addf %75, %77 : vector<64x128xf32>
      %79 = arith.truncf %78 : vector<64x128xf32> to vector<64x128xbf16>
      %c0_36 = arith.constant 0 : index
      %c0_37 = arith.constant 0 : index
      %80 = vector.load %arg10[%c0_36, %c0_37] : memref<128x256xbf16, #tpu.memory_space<vmem>>, vector<128x256xbf16>
      %cst_38 = arith.constant dense<0.000000e+00> : vector<64x256xf32>
      %81 = tpu.matmul %79, %80, %cst_38 {dimension_numbers = #tpu.dot_dimension_numbers<[1], [0], [0], [1], [0, 0, 1, 1], [], []>} : vector<64x128xbf16>, vector<128x256xbf16>, vector<64x256xf32> -> vector<64x256xf32>
      %c0_39 = arith.constant 0 : index
      %c0_40 = arith.constant 0 : index
      %82 = vector.load %arg11[%c0_39, %c0_40] : memref<1x256xf32, #tpu.memory_space<vmem>>, vector<1x256xf32>
      %83 = vector.shape_cast %82 : vector<1x256xf32> to vector<256xf32>
      %84 = vector.shape_cast %83 : vector<256xf32> to vector<1x256xf32>
      %85 = vector.broadcast %84 : vector<1x256xf32> to vector<64x256xf32>
      %86 = arith.addf %81, %85 : vector<64x256xf32>
      %87 = tpu.transpose %86, [1, 0] : vector<64x256xf32> -> vector<256x64xf32>
      %88 = vector.extract_strided_slice %87 {offsets = [0, 0], sizes = [128, 64], strides = [1, 1]} : vector<256x64xf32> to vector<128x64xf32>
      %89 = arith.truncf %88 : vector<128x64xf32> to vector<128x64xbf16>
      %c0_41 = arith.constant 0 : index
      %c0_42 = arith.constant 0 : index
      %90 = vector.load %arg19[%c0_41, %c0_42] : memref<128x64xbf16, #tpu.memory_space<vmem>>, vector<128x64xbf16>
      tpu.vector_store %arg19[%c0_41, %c0_42], %89 {strides = array<i32>} : memref<128x64xbf16, #tpu.memory_space<vmem>>, vector<128x64xbf16>,
      %91 = vector.extract_strided_slice %87 {offsets = [128, 0], sizes = [128, 64], strides = [1, 1]} : vector<256x64xf32> to vector<128x64xf32>
      %92 = arith.truncf %91 : vector<128x64xf32> to vector<128x64xbf16>
      %c0_43 = arith.constant 0 : index
      %c0_44 = arith.constant 0 : index
      %93 = vector.load %arg20[%c0_43, %c0_44] : memref<128x64xbf16, #tpu.memory_space<vmem>>, vector<128x64xbf16>
      tpu.vector_store %arg20[%c0_43, %c0_44], %92 {strides = array<i32>} : memref<128x64xbf16, #tpu.memory_space<vmem>>, vector<128x64xbf16>,
    } else {
    }
    %c0_i32_5 = arith.constant 0 : i32
    %11 = arith.cmpi eq, %arg2, %c0_i32_5 : i32
    %12 = arith.extui %11 : i1 to i32
    %c0_i32_6 = arith.constant 0 : i32
    %13 = arith.cmpi ne, %12, %c0_i32_6 : i32
    scf.if %13 {
      %c0_28 = arith.constant 0 : index
      %55 = arith.index_cast %5 : i32 to index
      %c0_29 = arith.constant 0 : index
      %56 = vector.load %arg3[%c0_28, %55, %c0_29] : memref<1x64x128xf32, #tpu.memory_space<vmem>>, vector<1x32x128xf32>
      %57 = vector.shape_cast %56 : vector<1x32x128xf32> to vector<32x128xf32>
      %cst_30 = arith.constant dense<0.000000e+00> : vector<32xf32>
      %58 = vector.multi_reduction <add>, %57, %cst_30 [1] : vector<32x128xf32> to vector<32xf32>
      %59 = vector.shape_cast %58 : vector<32xf32> to vector<32x1xf32>
      %cst_31 = arith.constant 1.280000e+02 : f32
      %60 = vector.broadcast %cst_31 : f32 to vector<32x1xf32>
      %61 = arith.divf %59, %60 : vector<32x1xf32>
      %62 = vector.broadcast %61 : vector<32x1xf32> to vector<32x128xf32>
      %63 = arith.subf %57, %62 : vector<32x128xf32>
      %64 = arith.mulf %63, %63 : vector<32x128xf32>
      %cst_32 = arith.constant dense<0.000000e+00> : vector<32xf32>
      %65 = vector.multi_reduction <add>, %64, %cst_32 [1] : vector<32x128xf32> to vector<32xf32>
      %66 = vector.shape_cast %65 : vector<32xf32> to vector<32x1xf32>
      %cst_33 = arith.constant 1.280000e+02 : f32
      %67 = vector.broadcast %cst_33 : f32 to vector<32x1xf32>
      %68 = arith.divf %66, %67 : vector<32x1xf32>
      %cst_34 = arith.constant 9.99999974E-6 : f32
      %69 = vector.broadcast %cst_34 : f32 to vector<32x1xf32>
      %70 = arith.addf %68, %69 : vector<32x1xf32>
      %71 = math.rsqrt %70 : vector<32x1xf32>
      %72 = vector.broadcast %71 : vector<32x1xf32> to vector<32x128xf32>
      %73 = arith.mulf %63, %72 : vector<32x128xf32>
      %74 = vector.shape_cast %1 : vector<128xf32> to vector<1x128xf32>
      %75 = vector.broadcast %74 : vector<1x128xf32> to vector<32x128xf32>
      %76 = arith.mulf %73, %75 : vector<32x128xf32>
      %77 = vector.shape_cast %3 : vector<128xf32> to vector<1x128xf32>
      %78 = vector.broadcast %77 : vector<1x128xf32> to vector<32x128xf32>
      %79 = arith.addf %76, %78 : vector<32x128xf32>
      %80 = arith.truncf %79 : vector<32x128xf32> to vector<32x128xbf16>
      %c0_35 = arith.constant 0 : index
      %c0_36 = arith.constant 0 : index
      %81 = vector.load %arg21[%c0_35, %c0_36] : memref<32x128xbf16, #tpu.memory_space<vmem>>, vector<32x128xbf16>
      tpu.vector_store %arg21[%c0_35, %c0_36], %80 {strides = array<i32>} : memref<32x128xbf16, #tpu.memory_space<vmem>>, vector<32x128xbf16>,
      %cst_37 = arith.constant 0.000000e+00 : f32
      %82 = vector.broadcast %cst_37 : f32 to vector<32x128xf32>
      %c0_38 = arith.constant 0 : index
      %c0_39 = arith.constant 0 : index
      %83 = vector.load %arg22[%c0_38, %c0_39] : memref<32x128xf32, #tpu.memory_space<vmem>>, vector<32x128xf32>
      tpu.vector_store %arg22[%c0_38, %c0_39], %82 {strides = array<i32>} : memref<32x128xf32, #tpu.memory_space<vmem>>, vector<32x128xf32>,
    } else {
    }
    %c32_i32_7 = arith.constant 32 : i32
    %14 = arith.muli %arg2, %c32_i32_7 : i32
    %15 = tpu.assume_multiple %14, 32 : i32
    %c0_8 = arith.constant 0 : index
    %c0_9 = arith.constant 0 : index
    %16 = vector.load %arg21[%c0_8, %c0_9] : memref<32x128xbf16, #tpu.memory_space<vmem>>, vector<32x128xbf16>
    %17 = arith.index_cast %arg2 : i32 to index
    %c0_10 = arith.constant 0 : index
    %c0_11 = arith.constant 0 : index
    %18 = vector.load %arg8[%17, %c0_10, %c0_11] : memref<4x128x32xbf16, #tpu.memory_space<vmem>>, vector<1x128x32xbf16>
    %19 = vector.shape_cast %18 : vector<1x128x32xbf16> to vector<128x32xbf16>
    %cst = arith.constant dense<0.000000e+00> : vector<32x32xf32>
    %20 = tpu.matmul %16, %19, %cst {dimension_numbers = #tpu.dot_dimension_numbers<[1], [0], [0], [1], [0, 0, 1, 1], [], []>} : vector<32x128xbf16>, vector<128x32xbf16>, vector<32x32xf32> -> vector<32x32xf32>
    %21 = arith.index_cast %arg2 : i32 to index
    %c0_12 = arith.constant 0 : index
    %c0_13 = arith.constant 0 : index
    %22 = vector.load %arg9[%21, %c0_12, %c0_13] : memref<4x1x32xf32, #tpu.memory_space<vmem>>, vector<1x1x32xf32>
    %23 = vector.shape_cast %22 : vector<1x1x32xf32> to vector<1x32xf32>
    %24 = vector.broadcast %23 : vector<1x32xf32> to vector<32x32xf32>
    %25 = arith.addf %20, %24 : vector<32x32xf32>
    %26 = arith.truncf %25 : vector<32x32xf32> to vector<32x32xbf16>
    %27 = arith.index_cast %15 : i32 to index
    %c0_14 = arith.constant 0 : index
    %28 = vector.load %arg19[%27, %c0_14] : memref<128x64xbf16, #tpu.memory_space<vmem>>, vector<32x64xbf16>
    %29 = arith.index_cast %15 : i32 to index
    %c0_15 = arith.constant 0 : index
    %30 = vector.load %arg20[%29, %c0_15] : memref<128x64xbf16, #tpu.memory_space<vmem>>, vector<32x64xbf16>
    %cst_16 = arith.constant dense<0.000000e+00> : vector<32x64xf32>
    %31 = tpu.matmul %26, %28, %cst_16 {dimension_numbers = #tpu.dot_dimension_numbers<[1], [0], [0], [1], [0, 0, 1, 1], [], []>} : vector<32x32xbf16>, vector<32x64xbf16>, vector<32x64xf32> -> vector<32x64xf32>
    %cst_17 = arith.constant dense<0xFF800000> : vector<32xf32>
    %32 = vector.multi_reduction <maximumf>, %31, %cst_17 [1] : vector<32x64xf32> to vector<32xf32>
    %33 = vector.shape_cast %32 : vector<32xf32> to vector<32x1xf32>
    %34 = vector.broadcast %33 : vector<32x1xf32> to vector<32x64xf32>
    %35 = arith.subf %31, %34 : vector<32x64xf32>
    %36 = math.exp %35 : vector<32x64xf32>
    %cst_18 = arith.constant dense<0.000000e+00> : vector<32xf32>
    %37 = vector.multi_reduction <add>, %36, %cst_18 [1] : vector<32x64xf32> to vector<32xf32>
    %38 = vector.shape_cast %37 : vector<32xf32> to vector<32x1xf32>
    %39 = tpu.reciprocal %38 {approx = true} : vector<32x1xf32> -> vector<32x1xf32>
    %40 = vector.broadcast %39 : vector<32x1xf32> to vector<32x64xf32>
    %41 = arith.mulf %36, %40 : vector<32x64xf32>
    %42 = arith.truncf %41 : vector<32x64xf32> to vector<32x64xbf16>
    %cst_19 = arith.constant dense<0.000000e+00> : vector<32x32xf32>
    %43 = tpu.matmul %42, %30, %cst_19 {dimension_numbers = #tpu.dot_dimension_numbers<[1], [1], [0], [0], [0, 0, 1, 0], [], []>} : vector<32x64xbf16>, vector<32x64xbf16>, vector<32x32xf32> -> vector<32x32xf32>
    %c0_20 = arith.constant 0 : index
    %c0_21 = arith.constant 0 : index
    %44 = vector.load %arg22[%c0_20, %c0_21] : memref<32x128xf32, #tpu.memory_space<vmem>>, vector<32x128xf32>
    %45 = arith.truncf %43 : vector<32x32xf32> to vector<32x32xbf16>
    %46 = arith.index_cast %arg2 : i32 to index
    %c0_22 = arith.constant 0 : index
    %c0_23 = arith.constant 0 : index
    %47 = vector.load %arg12[%46, %c0_22, %c0_23] : memref<4x32x128xbf16, #tpu.memory_space<vmem>>, vector<1x32x128xbf16>
    %48 = vector.shape_cast %47 : vector<1x32x128xbf16> to vector<32x128xbf16>
    %cst_24 = arith.constant dense<0.000000e+00> : vector<32x128xf32>
    %49 = tpu.matmul %45, %48, %cst_24 {dimension_numbers = #tpu.dot_dimension_numbers<[1], [0], [0], [1], [0, 0, 1, 1], [], []>} : vector<32x32xbf16>, vector<32x128xbf16>, vector<32x128xf32> -> vector<32x128xf32>
    %50 = arith.addf %44, %49 : vector<32x128xf32>
    %c0_25 = arith.constant 0 : index
    %c0_26 = arith.constant 0 : index
    %51 = vector.load %arg22[%c0_25, %c0_26] : memref<32x128xf32, #tpu.memory_space<vmem>>, vector<32x128xf32>
    tpu.vector_store %arg22[%c0_25, %c0_26], %50 {strides = array<i32>} : memref<32x128xf32, #tpu.memory_space<vmem>>, vector<32x128xf32>,
    %c3_i32 = arith.constant 3 : i32
    %52 = arith.cmpi eq, %arg2, %c3_i32 : i32
    %53 = arith.extui %52 : i1 to i32
    %c0_i32_27 = arith.constant 0 : i32
    %54 = arith.cmpi ne, %53, %c0_i32_27 : i32
    scf.if %54 {
      %c0_28 = arith.constant 0 : index
      %55 = arith.index_cast %5 : i32 to index
      %c0_29 = arith.constant 0 : index
      %56 = vector.load %arg3[%c0_28, %55, %c0_29] : memref<1x64x128xf32, #tpu.memory_space<vmem>>, vector<1x32x128xf32>
      %57 = vector.shape_cast %56 : vector<1x32x128xf32> to vector<32x128xf32>
      %c0_30 = arith.constant 0 : index
      %c0_31 = arith.constant 0 : index
      %58 = vector.load %arg22[%c0_30, %c0_31] : memref<32x128xf32, #tpu.memory_space<vmem>>, vector<32x128xf32>
      %59 = arith.addf %57, %58 : vector<32x128xf32>
      %c0_32 = arith.constant 0 : index
      %c0_33 = arith.constant 0 : index
      %60 = vector.load %arg13[%c0_32, %c0_33] : memref<1x128xf32, #tpu.memory_space<vmem>>, vector<1x128xf32>
      %61 = vector.shape_cast %60 : vector<1x128xf32> to vector<128xf32>
      %62 = vector.shape_cast %61 : vector<128xf32> to vector<1x128xf32>
      %63 = vector.broadcast %62 : vector<1x128xf32> to vector<32x128xf32>
      %64 = arith.addf %59, %63 : vector<32x128xf32>
      %c0_34 = arith.constant 0 : index
      %c0_35 = arith.constant 0 : index
      %65 = vector.load %arg6[%c0_34, %c0_35] : memref<1x128xf32, #tpu.memory_space<vmem>>, vector<1x128xf32>
      %66 = vector.shape_cast %65 : vector<1x128xf32> to vector<128xf32>
      %c0_36 = arith.constant 0 : index
      %c0_37 = arith.constant 0 : index
      %67 = vector.load %arg7[%c0_36, %c0_37] : memref<1x128xf32, #tpu.memory_space<vmem>>, vector<1x128xf32>
      %68 = vector.shape_cast %67 : vector<1x128xf32> to vector<128xf32>
      %cst_38 = arith.constant dense<0.000000e+00> : vector<32xf32>
      %69 = vector.multi_reduction <add>, %64, %cst_38 [1] : vector<32x128xf32> to vector<32xf32>
      %70 = vector.shape_cast %69 : vector<32xf32> to vector<32x1xf32>
      %cst_39 = arith.constant 1.280000e+02 : f32
      %71 = vector.broadcast %cst_39 : f32 to vector<32x1xf32>
      %72 = arith.divf %70, %71 : vector<32x1xf32>
      %73 = vector.broadcast %72 : vector<32x1xf32> to vector<32x128xf32>
      %74 = arith.subf %64, %73 : vector<32x128xf32>
      %75 = arith.mulf %74, %74 : vector<32x128xf32>
      %cst_40 = arith.constant dense<0.000000e+00> : vector<32xf32>
      %76 = vector.multi_reduction <add>, %75, %cst_40 [1] : vector<32x128xf32> to vector<32xf32>
      %77 = vector.shape_cast %76 : vector<32xf32> to vector<32x1xf32>
      %cst_41 = arith.constant 1.280000e+02 : f32
      %78 = vector.broadcast %cst_41 : f32 to vector<32x1xf32>
      %79 = arith.divf %77, %78 : vector<32x1xf32>
      %cst_42 = arith.constant 9.99999974E-6 : f32
      %80 = vector.broadcast %cst_42 : f32 to vector<32x1xf32>
      %81 = arith.addf %79, %80 : vector<32x1xf32>
      %82 = math.rsqrt %81 : vector<32x1xf32>
      %83 = vector.broadcast %82 : vector<32x1xf32> to vector<32x128xf32>
      %84 = arith.mulf %74, %83 : vector<32x128xf32>
      %85 = vector.shape_cast %66 : vector<128xf32> to vector<1x128xf32>
      %86 = vector.broadcast %85 : vector<1x128xf32> to vector<32x128xf32>
      %87 = arith.mulf %84, %86 : vector<32x128xf32>
      %88 = vector.shape_cast %68 : vector<128xf32> to vector<1x128xf32>
      %89 = vector.broadcast %88 : vector<1x128xf32> to vector<32x128xf32>
      %90 = arith.addf %87, %89 : vector<32x128xf32>
      %91 = arith.truncf %90 : vector<32x128xf32> to vector<32x128xbf16>
      %c0_43 = arith.constant 0 : index
      %c0_44 = arith.constant 0 : index
      %92 = vector.load %arg14[%c0_43, %c0_44] : memref<128x512xbf16, #tpu.memory_space<vmem>>, vector<128x512xbf16>
      %cst_45 = arith.constant dense<0.000000e+00> : vector<32x512xf32>
      %93 = tpu.matmul %91, %92, %cst_45 {dimension_numbers = #tpu.dot_dimension_numbers<[1], [0], [0], [1], [0, 0, 1, 1], [], []>} : vector<32x128xbf16>, vector<128x512xbf16>, vector<32x512xf32> -> vector<32x512xf32>
      %c0_46 = arith.constant 0 : index
      %c0_47 = arith.constant 0 : index
      %94 = vector.load %arg15[%c0_46, %c0_47] : memref<1x512xf32, #tpu.memory_space<vmem>>, vector<1x512xf32>
      %95 = vector.shape_cast %94 : vector<1x512xf32> to vector<512xf32>
      %96 = vector.shape_cast %95 : vector<512xf32> to vector<1x512xf32>
      %97 = vector.broadcast %96 : vector<1x512xf32> to vector<32x512xf32>
      %98 = arith.addf %93, %97 : vector<32x512xf32>
      %cst_48 = arith.constant 5.000000e-01 : f32
      %99 = vector.broadcast %cst_48 : f32 to vector<32x512xf32>
      %100 = arith.mulf %99, %98 : vector<32x512xf32>
      %cst_49 = arith.constant 0.707106769 : f32
      %101 = vector.broadcast %cst_49 : f32 to vector<32x512xf32>
      %102 = arith.mulf %98, %101 : vector<32x512xf32>
      %103 = math.erf %102 : vector<32x512xf32>
      %cst_50 = arith.constant 1.000000e+00 : f32
      %104 = vector.broadcast %cst_50 : f32 to vector<32x512xf32>
      %105 = arith.addf %104, %103 : vector<32x512xf32>
      %106 = arith.mulf %100, %105 : vector<32x512xf32>
      %107 = arith.truncf %106 : vector<32x512xf32> to vector<32x512xbf16>
      %c0_51 = arith.constant 0 : index
      %c0_52 = arith.constant 0 : index
      %108 = vector.load %arg16[%c0_51, %c0_52] : memref<512x128xbf16, #tpu.memory_space<vmem>>, vector<512x128xbf16>
      %cst_53 = arith.constant dense<0.000000e+00> : vector<32x128xf32>
      %109 = tpu.matmul %107, %108, %cst_53 {dimension_numbers = #tpu.dot_dimension_numbers<[1], [0], [0], [1], [0, 0, 1, 1], [], []>} : vector<32x512xbf16>, vector<512x128xbf16>, vector<32x128xf32> -> vector<32x128xf32>
      %c0_54 = arith.constant 0 : index
      %c0_55 = arith.constant 0 : index
      %110 = vector.load %arg17[%c0_54, %c0_55] : memref<1x128xf32, #tpu.memory_space<vmem>>, vector<1x128xf32>
      %111 = vector.shape_cast %110 : vector<1x128xf32> to vector<128xf32>
      %112 = vector.shape_cast %111 : vector<128xf32> to vector<1x128xf32>
      %113 = vector.broadcast %112 : vector<1x128xf32> to vector<32x128xf32>
      %114 = arith.addf %109, %113 : vector<32x128xf32>
      %115 = arith.addf %64, %114 : vector<32x128xf32>
      %c0_56 = arith.constant 0 : index
      %c0_57 = arith.constant 0 : index
      %c0_58 = arith.constant 0 : index
      %116 = vector.load %arg18[%c0_56, %c0_57, %c0_58] : memref<1x32x128xf32, #tpu.memory_space<vmem>>, vector<1x32x128xf32>
      %117 = vector.shape_cast %116 : vector<1x32x128xf32> to vector<32x128xf32>
      %118 = vector.shape_cast %115 : vector<32x128xf32> to vector<1x32x128xf32>
      tpu.vector_store %arg18[%c0_56, %c0_57, %c0_58], %118 {strides = array<i32>} : memref<1x32x128xf32, #tpu.memory_space<vmem>>, vector<1x32x128xf32>,
    } else {
    }
    return
  }
  func.func @transform_0(%arg0: i32, %arg1: i32, %arg2: i32) -> (i32, i32, i32) {
    %c0_i32 = arith.constant 0 : i32
    %c0_i32_0 = arith.constant 0 : i32
    %c0_i32_1 = arith.constant 0 : i32
    return %arg0, %c0_i32, %c0_i32_0 : i32, i32, i32
  }
  func.func @transform_1(%arg0: i32, %arg1: i32, %arg2: i32) -> (i32, i32) {
    %c0_i32 = arith.constant 0 : i32
    %c0_i32_0 = arith.constant 0 : i32
    %c0_i32_1 = arith.constant 0 : i32
    return %c0_i32, %c0_i32_0 : i32, i32
  }
  func.func @transform_2(%arg0: i32, %arg1: i32, %arg2: i32) -> (i32, i32) {
    %c0_i32 = arith.constant 0 : i32
    %c0_i32_0 = arith.constant 0 : i32
    %c0_i32_1 = arith.constant 0 : i32
    return %c0_i32, %c0_i32_0 : i32, i32
  }
  func.func @transform_3(%arg0: i32, %arg1: i32, %arg2: i32) -> (i32, i32) {
    %c0_i32 = arith.constant 0 : i32
    %c0_i32_0 = arith.constant 0 : i32
    %c0_i32_1 = arith.constant 0 : i32
    return %c0_i32, %c0_i32_0 : i32, i32
  }
  func.func @transform_4(%arg0: i32, %arg1: i32, %arg2: i32) -> (i32, i32) {
    %c0_i32 = arith.constant 0 : i32
    %c0_i32_0 = arith.constant 0 : i32
    %c0_i32_1 = arith.constant 0 : i32
    return %c0_i32, %c0_i32_0 : i32, i32
  }
  func.func @transform_5(%arg0: i32, %arg1: i32, %arg2: i32) -> (i32, i32, i32) {
    %c0_i32 = arith.constant 0 : i32
    %c0_i32_0 = arith.constant 0 : i32
    %c0_i32_1 = arith.constant 0 : i32
    %c0_i32_2 = arith.constant 0 : i32
    return %c0_i32, %c0_i32_0, %c0_i32_1 : i32, i32, i32
  }
  func.func @transform_6(%arg0: i32, %arg1: i32, %arg2: i32) -> (i32, i32, i32) {
    %c0_i32 = arith.constant 0 : i32
    %c0_i32_0 = arith.constant 0 : i32
    %c0_i32_1 = arith.constant 0 : i32
    %c0_i32_2 = arith.constant 0 : i32
    return %c0_i32, %c0_i32_0, %c0_i32_1 : i32, i32, i32
  }
  func.func @transform_7(%arg0: i32, %arg1: i32, %arg2: i32) -> (i32, i32) {
    %c0_i32 = arith.constant 0 : i32
    %c0_i32_0 = arith.constant 0 : i32
    %c0_i32_1 = arith.constant 0 : i32
    return %c0_i32, %c0_i32_0 : i32, i32
  }
  func.func @transform_8(%arg0: i32, %arg1: i32, %arg2: i32) -> (i32, i32) {
    %c0_i32 = arith.constant 0 : i32
    %c0_i32_0 = arith.constant 0 : i32
    %c0_i32_1 = arith.constant 0 : i32
    return %c0_i32, %c0_i32_0 : i32, i32
  }
  func.func @transform_9(%arg0: i32, %arg1: i32, %arg2: i32) -> (i32, i32, i32) {
    %c0_i32 = arith.constant 0 : i32
    %c0_i32_0 = arith.constant 0 : i32
    %c0_i32_1 = arith.constant 0 : i32
    %c0_i32_2 = arith.constant 0 : i32
    return %c0_i32, %c0_i32_0, %c0_i32_1 : i32, i32, i32
  }
  func.func @transform_10(%arg0: i32, %arg1: i32, %arg2: i32) -> (i32, i32) {
    %c0_i32 = arith.constant 0 : i32
    %c0_i32_0 = arith.constant 0 : i32
    %c0_i32_1 = arith.constant 0 : i32
    return %c0_i32, %c0_i32_0 : i32, i32
  }
  func.func @transform_11(%arg0: i32, %arg1: i32, %arg2: i32) -> (i32, i32) {
    %c0_i32 = arith.constant 0 : i32
    %c0_i32_0 = arith.constant 0 : i32
    %c0_i32_1 = arith.constant 0 : i32
    return %c0_i32, %c0_i32_0 : i32, i32
  }
  func.func @transform_12(%arg0: i32, %arg1: i32, %arg2: i32) -> (i32, i32) {
    %c0_i32 = arith.constant 0 : i32
    %c0_i32_0 = arith.constant 0 : i32
    %c0_i32_1 = arith.constant 0 : i32
    return %c0_i32, %c0_i32_0 : i32, i32
  }
  func.func @transform_13(%arg0: i32, %arg1: i32, %arg2: i32) -> (i32, i32) {
    %c0_i32 = arith.constant 0 : i32
    %c0_i32_0 = arith.constant 0 : i32
    %c0_i32_1 = arith.constant 0 : i32
    return %c0_i32, %c0_i32_0 : i32, i32
  }
  func.func @transform_14(%arg0: i32, %arg1: i32, %arg2: i32) -> (i32, i32) {
    %c0_i32 = arith.constant 0 : i32
    %c0_i32_0 = arith.constant 0 : i32
    %c0_i32_1 = arith.constant 0 : i32
    return %c0_i32, %c0_i32_0 : i32, i32
  }
  func.func @transform_15(%arg0: i32, %arg1: i32, %arg2: i32) -> (i32, i32, i32) {
    %c0_i32 = arith.constant 0 : i32
    %c0_i32_0 = arith.constant 0 : i32
    return %arg0, %arg1, %c0_i32 : i32, i32, i32
  }
}

</mosaic_0001>

<llo_original>
// kernel: tpu_custom_call.1
$region0: #{tpu_custom_call.1}
  #allocation0 [shape = 'u32[]', space=smem, size = 0x4, offset = 0x4, fixed_abs, tag = 'smem constant byte address 0x4 - core index']
  #allocation1 [shape = 'u32[144,128]{1,0:T(1,128)}', space=vmem, size = 0x12000, scoped, tag = 'internal scratch']
  #allocation2 [shape = 'bf16[128,64]{1,0:T(16,128)(2,1)}', space=vmem, size = 0x8000, scoped, tag = 'scratch operand']
  #allocation3 [shape = 'bf16[128,64]{1,0:T(16,128)(2,1)}', space=vmem, size = 0x8000, scoped, tag = 'scratch operand']
  #allocation4 [shape = 'bf16[32,128]{1,0:T(16,128)(2,1)}', space=vmem, size = 0x2000, scoped, tag = 'scratch operand']
  #allocation5 [shape = 'f32[32,128]{1,0:T(8,128)}', space=vmem, size = 0x4000, scoped, tag = 'scratch operand']
  %s0 = inlined_call_operand.hbm [shape: f32[2,64,128], index: 0, kind: input, shape index: {}]
  %s1 = inlined_call_operand.hbm [shape: f32[1,128], index: 1, kind: input, shape index: {}]
  %s2 = inlined_call_operand.hbm [shape: f32[1,128], index: 2, kind: input, shape index: {}]
  %s3 = inlined_call_operand.hbm [shape: f32[1,128], index: 3, kind: input, shape index: {}]
  %s4 = inlined_call_operand.hbm [shape: f32[1,128], index: 4, kind: input, shape index: {}]
  %s5 = inlined_call_operand.hbm [shape: bf16[4,128,32], index: 5, kind: input, shape index: {}]
  %s6 = inlined_call_operand.hbm [shape: f32[4,1,32], index: 6, kind: input, shape index: {}]
  %s7 = inlined_call_operand.hbm [shape: bf16[128,256], index: 7, kind: input, shape index: {}]
  %s8 = inlined_call_operand.hbm [shape: f32[1,256], index: 8, kind: input, shape index: {}]
  %s9 = inlined_call_operand.hbm [shape: bf16[4,32,128], index: 9, kind: input, shape index: {}]
  %s10 = inlined_call_operand.hbm [shape: f32[1,128], index: 10, kind: input, shape index: {}]
  %s11 = inlined_call_operand.hbm [shape: bf16[128,512], index: 11, kind: input, shape index: {}]
  %s12 = inlined_call_operand.hbm [shape: f32[1,512], index: 12, kind: input, shape index: {}]
  %s13 = inlined_call_operand.hbm [shape: bf16[512,128], index: 13, kind: input, shape index: {}]
  %s14 = inlined_call_operand.hbm [shape: f32[1,128], index: 14, kind: input, shape index: {}]
  %s15 = inlined_call_operand.hbm [shape: f32[2,64,128], index: 15, kind: output, shape index: {}]
  %s16 = sld [smem:[#allocation0]]
  $region165: #{tpu_custom_call.1} parent=0
    _
  %s18 = ssub.s32 1, %s16
  %s19 = scalar_select 0, %s18, %s16
  $region1: #{tpu_custom_call.1} parent=0
    #allocation6 [shape = 'u8[65536]{0}', space=vmem, size = 0x10000, scoped, tag = 'input window, operand 0']
    #allocation7 [shape = 's32[2]{0}', space=sflag, size = 0x8, scoped, tag = 'scoped memory for tpu_custom_call.1']
    #allocation8 [shape = 's32[2]{0}', space=sflag, size = 0x8, scoped, tag = 'scoped memory for tpu_custom_call.1']
    #allocation9 [shape = 'u8[512]{0}', space=vmem, size = 0x400, scoped, tag = 'input window, operand 1, single buffered']
    #allocation10 [shape = 's32[1]{0}', space=sflag, size = 0x4, scoped, tag = 'scoped memory for tpu_custom_call.1']
    #allocation11 [shape = 'u8[512]{0}', space=vmem, size = 0x400, scoped, tag = 'input window, operand 2, single buffered']
    #allocation12 [shape = 'u8[512]{0}', space=vmem, size = 0x400, scoped, tag = 'input window, operand 3, single buffered']
    #allocation13 [shape = 's32[1]{0}', space=sflag, size = 0x4, scoped, tag = 'scoped memory for tpu_custom_call.1']
    #allocation14 [shape = 'u8[512]{0}', space=vmem, size = 0x400, scoped, tag = 'input window, operand 4, single buffered']
    #allocation15 [shape = 'u8[131072]{0}', space=vmem, size = 0x20000, scoped, tag = 'input window, operand 5, single buffered']
    #allocation16 [shape = 's32[1]{0}', space=sflag, size = 0x4, scoped, tag = 'scoped memory for tpu_custom_call.1']
    #allocation17 [shape = 'u8[2048]{0}', space=vmem, size = 0x800, scoped, tag = 'input window, operand 6, single buffered']
    #allocation18 [shape = 'u8[65536]{0}', space=vmem, size = 0x10000, scoped, tag = 'input window, operand 7, single buffered']
    #allocation19 [shape = 's32[1]{0}', space=sflag, size = 0x4, scoped, tag = 'scoped memory for tpu_custom_call.1']
    #allocation20 [shape = 'u8[1024]{0}', space=vmem, size = 0x400, scoped, tag = 'input window, operand 8, single buffered']
    #allocation21 [shape = 'u8[32768]{0}', space=vmem, size = 0x8000, scoped, tag = 'input window, operand 9, single buffered']
    #allocation22 [shape = 's32[1]{0}', space=sflag, size = 0x4, scoped, tag = 'scoped memory for tpu_custom_call.1']
    #allocation23 [shape = 'u8[512]{0}', space=vmem, size = 0x400, scoped, tag = 'input window, operand 10, single buffered']
    #allocation24 [shape = 'u8[131072]{0}', space=vmem, size = 0x20000, scoped, tag = 'input window, operand 11, single buffered']
    #allocation25 [shape = 's32[1]{0}', space=sflag, size = 0x4, scoped, tag = 'scoped memory for tpu_custom_call.1']
    #allocation26 [shape = 'u8[2048]{0}', space=vmem, size = 0x800, scoped, tag = 'input window, operand 12, single buffered']
    #allocation27 [shape = 'u8[131072]{0}', space=vmem, size = 0x20000, scoped, tag = 'input window, operand 13, single buffered']
    #allocation28 [shape = 's32[1]{0}', space=sflag, size = 0x4, scoped, tag = 'scoped memory for tpu_custom_call.1']
    #allocation29 [shape = 'u8[512]{0}', space=vmem, size = 0x400, scoped, tag = 'input window, operand 14, single buffered']
    #allocation30 [shape = 'u8[32768]{0}', space=vmem, size = 0x8000, scoped, tag = 'output window, operand 0']
    %20 = vsyncpa [#allocation7], 0
    %s21 = scalar_lea.sflag [#allocation7], 1
    %22 = vsyncpa %s21, 0
    %23 = vsyncpa [#allocation10], 0
    %24 = vsyncpa [#allocation13], 0
    %25 = vsyncpa [#allocation16], 0
    %26 = vsyncpa [#allocation19], 0
    %27 = vsyncpa [#allocation22], 0
    %28 = vsyncpa [#allocation25], 0
    %29 = vsyncpa [#allocation28], 0
    %30 = vsyncpa [#allocation8], 0
    %s31 = scalar_lea.sflag [#allocation8], 1
    %32 = vsyncpa %s31, 0
    loop: start=0, step=1, limit=18
    $region2: #{tpu_custom_call.1} parent=1 // loop_pre_header
      _
    $region3: #{tpu_custom_call.1} parent=1 // loop_header
      %s34 = sphi 0, %s38
      %p35 = scmp.ge.s32.totalorder %s34, 18
      %s41 = sphi 0, %s60
      %s42 = sphi 0, %s56
      %s43 = sphi 0, %s52
      %s44 = sphi 0, %s41
      %s45 = sphi 0, %s42
      %s46 = sphi 0, %s43
      %s47 = sphi 0, %s44
      %s48 = sphi 0, %s45
      %s49 = sphi 0, %s46
      %s63 = sphi 0, %s65
      %s66 = sphi 0, %s63
      %s67 = sphi 0, %s66
      %s83 = sphi 0, %s67
      %s87 = sphi 0, %s87
      %s89 = sphi 0, %s87
      %s90 = sphi 0, %s89
      %s104 = sphi 0, %s90
      %s108 = sphi 0, %s108
      %s110 = sphi 0, %s108
      %s111 = sphi 0, %s110
      %s125 = sphi 0, %s111
      %s129 = sphi 0, %s129
      %s131 = sphi 0, %s129
      %s132 = sphi 0, %s131
      %s146 = sphi 0, %s132
      %s150 = sphi 0, %s150
      %s152 = sphi 0, %s150
      %s153 = sphi 0, %s152
      %s167 = sphi 0, %s153
      %s171 = sphi 0, %s171
      %s173 = sphi 0, %s171
      %s174 = sphi 0, %s173
      %s188 = sphi 0, %s174
      %s192 = sphi 0, %s192
      %s194 = sphi 0, %s192
      %s195 = sphi 0, %s194
      %s209 = sphi 0, %s195
      %s213 = sphi 0, %s213
      %s215 = sphi 0, %s213
      %s216 = sphi 0, %s215
      %s230 = sphi 0, %s216
      %s234 = sphi 0, %s234
      %s236 = sphi 0, %s234
      %s237 = sphi 0, %s236
      %s251 = sphi 0, %s237
      %s255 = sphi 0, %s255
      %s257 = sphi 0, %s255
      %s258 = sphi 0, %s257
      %s272 = sphi 0, %s258
      %s276 = sphi 0, %s276
      %s278 = sphi 0, %s276
      %s279 = sphi 0, %s278
      %s293 = sphi 0, %s279
      %s297 = sphi 0, %s297
      %s299 = sphi 0, %s297
      %s300 = sphi 0, %s299
      %s314 = sphi 0, %s300
      %s318 = sphi 0, %s318
      %s320 = sphi 0, %s318
      %s321 = sphi 0, %s320
      %s335 = sphi 0, %s321
      %s339 = sphi 0, %s339
      %s341 = sphi 0, %s339
      %s342 = sphi 0, %s341
      %s356 = sphi 0, %s342
      %s360 = sphi 0, %s360
      %s362 = sphi 0, %s360
      %s363 = sphi 0, %s362
      %s377 = sphi 0, %s363
      %s385 = sphi 0, %s387
      %s388 = sphi 0, %s385
      %s389 = sphi 0, %s388
      %s405 = sphi 0, %s389
    $region4: #{tpu_custom_call.1} parent=1 // loop_header_branch
      %37 = sbr.rel (%p35) target = $region8
    $region5: #{tpu_custom_call.1} parent=1 // loop_body
      %s39 = ssub.s32 %s34, 1
      %s40 = ssub.s32 %s34, 2
      %s50 = sadd.s32 1, %s43
      %p51 = scmp.ge.s32.totalorder %s50, 4
      %s52 = scalar_select %p51, 0, %s50
      %s53 = sadd.s32 1, %s42
      %s54 = scalar_select %p51, %s53, %s42
      %p55 = scmp.ge.s32.totalorder %s54, 2
      %s56 = scalar_select %p55, 0, %s54
      %s57 = sadd.s32 1, %s41
      %s58 = scalar_select %p55, %s57, %s41
      %p59 = scmp.ge.s32.totalorder %s58, 2
      %s60 = scalar_select %p59, 0, %s58
      %s61 = ssub.s32 %s41, %s60
      %p62 = scmp.eq.s32.totalorder %s61, 0
      %s64 = sadd.s32 %s63, 1
      %s65 = scalar_select %p62, %s63, %s64
      %p68 = pneg %p62
      %p69 = scmp.eq.s32.totalorder %s34, 15
      %p70 = por %p68, %p69
      %p71 = scmp.ne.s32.totalorder %s63, %s66
      %p72 = scmp.eq.s32.totalorder %s34, 0
      %p73 = por %p71, %p72
      %p74 = scmp.ne.s32.totalorder %s63, %s66
      %p75 = scmp.eq.s32.totalorder %s39, 15
      %p76 = por %p74, %p75
      %p77 = scmp.ne.s32.totalorder %s66, %s67
      %p78 = scmp.eq.s32.totalorder %s39, 0
      %p79 = por %p77, %p78
      %p80 = scmp.ne.s32.totalorder %s66, %s67
      %p81 = scmp.eq.s32.totalorder %s40, 15
      %p82 = por %p80, %p81
      %p84 = scmp.ne.s32.totalorder %s67, %s83
      %p85 = scmp.eq.s32.totalorder %s40, 0
      %p86 = por %p84, %p85
      %s88 = sadd.s32 %s87, 1
      %p91 = scmp.eq.s32.totalorder %s34, 15
      %p92 = scmp.ne.s32.totalorder %s87, %s89
      %p93 = scmp.eq.s32.totalorder %s34, 0
      %p94 = por %p92, %p93
      %p95 = scmp.ne.s32.totalorder %s87, %s89
      %p96 = scmp.eq.s32.totalorder %s39, 15
      %p97 = por %p95, %p96
      %p98 = scmp.ne.s32.totalorder %s89, %s90
      %p99 = scmp.eq.s32.totalorder %s39, 0
      %p100 = por %p98, %p99
      %p101 = scmp.ne.s32.totalorder %s89, %s90
      %p102 = scmp.eq.s32.totalorder %s40, 15
      %p103 = por %p101, %p102
      %p105 = scmp.ne.s32.totalorder %s90, %s104
      %p106 = scmp.eq.s32.totalorder %s40, 0
      %p107 = por %p105, %p106
      %s109 = sadd.s32 %s108, 1
      %p112 = scmp.eq.s32.totalorder %s34, 15
      %p113 = scmp.ne.s32.totalorder %s108, %s110
      %p114 = scmp.eq.s32.totalorder %s34, 0
      %p115 = por %p113, %p114
      %p116 = scmp.ne.s32.totalorder %s108, %s110
      %p117 = scmp.eq.s32.totalorder %s39, 15
      %p118 = por %p116, %p117
      %p119 = scmp.ne.s32.totalorder %s110, %s111
      %p120 = scmp.eq.s32.totalorder %s39, 0
      %p121 = por %p119, %p120
      %p122 = scmp.ne.s32.totalorder %s110, %s111
      %p123 = scmp.eq.s32.totalorder %s40, 15
      %p124 = por %p122, %p123
      %p126 = scmp.ne.s32.totalorder %s111, %s125
      %p127 = scmp.eq.s32.totalorder %s40, 0
      %p128 = por %p126, %p127
      %s130 = sadd.s32 %s129, 1
      %p133 = scmp.eq.s32.totalorder %s34, 15
      %p134 = scmp.ne.s32.totalorder %s129, %s131
      %p135 = scmp.eq.s32.totalorder %s34, 0
      %p136 = por %p134, %p135
      %p137 = scmp.ne.s32.totalorder %s129, %s131
      %p138 = scmp.eq.s32.totalorder %s39, 15
      %p139 = por %p137, %p138
      %p140 = scmp.ne.s32.totalorder %s131, %s132
      %p141 = scmp.eq.s32.totalorder %s39, 0
      %p142 = por %p140, %p141
      %p143 = scmp.ne.s32.totalorder %s131, %s132
      %p144 = scmp.eq.s32.totalorder %s40, 15
      %p145 = por %p143, %p144
      %p147 = scmp.ne.s32.totalorder %s132, %s146
      %p148 = scmp.eq.s32.totalorder %s40, 0
      %p149 = por %p147, %p148
      %s151 = sadd.s32 %s150, 1
      %p154 = scmp.eq.s32.totalorder %s34, 15
      %p155 = scmp.ne.s32.totalorder %s150, %s152
      %p156 = scmp.eq.s32.totalorder %s34, 0
      %p157 = por %p155, %p156
      %p158 = scmp.ne.s32.totalorder %s150, %s152
      %p159 = scmp.eq.s32.totalorder %s39, 15
      %p160 = por %p158, %p159
      %p161 = scmp.ne.s32.totalorder %s152, %s153
      %p162 = scmp.eq.s32.totalorder %s39, 0
      %p163 = por %p161, %p162
      %p164 = scmp.ne.s32.totalorder %s152, %s153
      %p165 = scmp.eq.s32.totalorder %s40, 15
      %p166 = por %p164, %p165
      %p168 = scmp.ne.s32.totalorder %s153, %s167
      %p169 = scmp.eq.s32.totalorder %s40, 0
      %p170 = por %p168, %p169
      %s172 = sadd.s32 %s171, 1
      %p175 = scmp.eq.s32.totalorder %s34, 15
      %p176 = scmp.ne.s32.totalorder %s171, %s173
      %p177 = scmp.eq.s32.totalorder %s34, 0
      %p178 = por %p176, %p177
      %p179 = scmp.ne.s32.totalorder %s171, %s173
      %p180 = scmp.eq.s32.totalorder %s39, 15
      %p181 = por %p179, %p180
      %p182 = scmp.ne.s32.totalorder %s173, %s174
      %p183 = scmp.eq.s32.totalorder %s39, 0
      %p184 = por %p182, %p183
      %p185 = scmp.ne.s32.totalorder %s173, %s174
      %p186 = scmp.eq.s32.totalorder %s40, 15
      %p187 = por %p185, %p186
      %p189 = scmp.ne.s32.totalorder %s174, %s188
      %p190 = scmp.eq.s32.totalorder %s40, 0
      %p191 = por %p189, %p190
      %s193 = sadd.s32 %s192, 1
      %p196 = scmp.eq.s32.totalorder %s34, 15
      %p197 = scmp.ne.s32.totalorder %s192, %s194
      %p198 = scmp.eq.s32.totalorder %s34, 0
      %p199 = por %p197, %p198
      %p200 = scmp.ne.s32.totalorder %s192, %s194
      %p201 = scmp.eq.s32.totalorder %s39, 15
      %p202 = por %p200, %p201
      %p203 = scmp.ne.s32.totalorder %s194, %s195
      %p204 = scmp.eq.s32.totalorder %s39, 0
      %p205 = por %p203, %p204
      %p206 = scmp.ne.s32.totalorder %s194, %s195
      %p207 = scmp.eq.s32.totalorder %s40, 15
      %p208 = por %p206, %p207
      %p210 = scmp.ne.s32.totalorder %s195, %s209
      %p211 = scmp.eq.s32.totalorder %s40, 0
      %p212 = por %p210, %p211
      %s214 = sadd.s32 %s213, 1
      %p217 = scmp.eq.s32.totalorder %s34, 15
      %p218 = scmp.ne.s32.totalorder %s213, %s215
      %p219 = scmp.eq.s32.totalorder %s34, 0
      %p220 = por %p218, %p219
      %p221 = scmp.ne.s32.totalorder %s213, %s215
      %p222 = scmp.eq.s32.totalorder %s39, 15
      %p223 = por %p221, %p222
      %p224 = scmp.ne.s32.totalorder %s215, %s216
      %p225 = scmp.eq.s32.totalorder %s39, 0
      %p226 = por %p224, %p225
      %p227 = scmp.ne.s32.totalorder %s215, %s216
      %p228 = scmp.eq.s32.totalorder %s40, 15
      %p229 = por %p227, %p228
      %p231 = scmp.ne.s32.totalorder %s216, %s230
      %p232 = scmp.eq.s32.totalorder %s40, 0
      %p233 = por %p231, %p232
      %s235 = sadd.s32 %s234, 1
      %p238 = scmp.eq.s32.totalorder %s34, 15
      %p239 = scmp.ne.s32.totalorder %s234, %s236
      %p240 = scmp.eq.s32.totalorder %s34, 0
      %p241 = por %p239, %p240
      %p242 = scmp.ne.s32.totalorder %s234, %s236
      %p243 = scmp.eq.s32.totalorder %s39, 15
      %p244 = por %p242, %p243
      %p245 = scmp.ne.s32.totalorder %s236, %s237
      %p246 = scmp.eq.s32.totalorder %s39, 0
      %p247 = por %p245, %p246
      %p248 = scmp.ne.s32.totalorder %s236, %s237
      %p249 = scmp.eq.s32.totalorder %s40, 15
      %p250 = por %p248, %p249
      %p252 = scmp.ne.s32.totalorder %s237, %s251
      %p253 = scmp.eq.s32.totalorder %s40, 0
      %p254 = por %p252, %p253
      %s256 = sadd.s32 %s255, 1
      %p259 = scmp.eq.s32.totalorder %s34, 15
      %p260 = scmp.ne.s32.totalorder %s255, %s257
      %p261 = scmp.eq.s32.totalorder %s34, 0
      %p262 = por %p260, %p261
      %p263 = scmp.ne.s32.totalorder %s255, %s257
      %p264 = scmp.eq.s32.totalorder %s39, 15
      %p265 = por %p263, %p264
      %p266 = scmp.ne.s32.totalorder %s257, %s258
      %p267 = scmp.eq.s32.totalorder %s39, 0
      %p268 = por %p266, %p267
      %p269 = scmp.ne.s32.totalorder %s257, %s258
      %p270 = scmp.eq.s32.totalorder %s40, 15
      %p271 = por %p269, %p270
      %p273 = scmp.ne.s32.totalorder %s258, %s272
      %p274 = scmp.eq.s32.totalorder %s40, 0
      %p275 = por %p273, %p274
      %s277 = sadd.s32 %s276, 1
      %p280 = scmp.eq.s32.totalorder %s34, 15
      %p281 = scmp.ne.s32.totalorder %s276, %s278
      %p282 = scmp.eq.s32.totalorder %s34, 0
      %p283 = por %p281, %p282
      %p284 = scmp.ne.s32.totalorder %s276, %s278
      %p285 = scmp.eq.s32.totalorder %s39, 15
      %p286 = por %p284, %p285
      %p287 = scmp.ne.s32.totalorder %s278, %s279
      %p288 = scmp.eq.s32.totalorder %s39, 0
      %p289 = por %p287, %p288
      %p290 = scmp.ne.s32.totalorder %s278, %s279
      %p291 = scmp.eq.s32.totalorder %s40, 15
      %p292 = por %p290, %p291
      %p294 = scmp.ne.s32.totalorder %s279, %s293
      %p295 = scmp.eq.s32.totalorder %s40, 0
      %p296 = por %p294, %p295
      %s298 = sadd.s32 %s297, 1
      %p301 = scmp.eq.s32.totalorder %s34, 15
      %p302 = scmp.ne.s32.totalorder %s297, %s299
      %p303 = scmp.eq.s32.totalorder %s34, 0
      %p304 = por %p302, %p303
      %p305 = scmp.ne.s32.totalorder %s297, %s299
      %p306 = scmp.eq.s32.totalorder %s39, 15
      %p307 = por %p305, %p306
      %p308 = scmp.ne.s32.totalorder %s299, %s300
      %p309 = scmp.eq.s32.totalorder %s39, 0
      %p310 = por %p308, %p309
      %p311 = scmp.ne.s32.totalorder %s299, %s300
      %p312 = scmp.eq.s32.totalorder %s40, 15
      %p313 = por %p311, %p312
      %p315 = scmp.ne.s32.totalorder %s300, %s314
      %p316 = scmp.eq.s32.totalorder %s40, 0
      %p317 = por %p315, %p316
      %s319 = sadd.s32 %s318, 1
      %p322 = scmp.eq.s32.totalorder %s34, 15
      %p323 = scmp.ne.s32.totalorder %s318, %s320
      %p324 = scmp.eq.s32.totalorder %s34, 0
      %p325 = por %p323, %p324
      %p326 = scmp.ne.s32.totalorder %s318, %s320
      %p327 = scmp.eq.s32.totalorder %s39, 15
      %p328 = por %p326, %p327
      %p329 = scmp.ne.s32.totalorder %s320, %s321
      %p330 = scmp.eq.s32.totalorder %s39, 0
      %p331 = por %p329, %p330
      %p332 = scmp.ne.s32.totalorder %s320, %s321
      %p333 = scmp.eq.s32.totalorder %s40, 15
      %p334 = por %p332, %p333
      %p336 = scmp.ne.s32.totalorder %s321, %s335
      %p337 = scmp.eq.s32.totalorder %s40, 0
      %p338 = por %p336, %p337
      %s340 = sadd.s32 %s339, 1
      %p343 = scmp.eq.s32.totalorder %s34, 15
      %p344 = scmp.ne.s32.totalorder %s339, %s341
      %p345 = scmp.eq.s32.totalorder %s34, 0
      %p346 = por %p344, %p345
      %p347 = scmp.ne.s32.totalorder %s339, %s341
      %p348 = scmp.eq.s32.totalorder %s39, 15
      %p349 = por %p347, %p348
      %p350 = scmp.ne.s32.totalorder %s341, %s342
      %p351 = scmp.eq.s32.totalorder %s39, 0
      %p352 = por %p350, %p351
      %p353 = scmp.ne.s32.totalorder %s341, %s342
      %p354 = scmp.eq.s32.totalorder %s40, 15
      %p355 = por %p353, %p354
      %p357 = scmp.ne.s32.totalorder %s342, %s356
      %p358 = scmp.eq.s32.totalorder %s40, 0
      %p359 = por %p357, %p358
      %s361 = sadd.s32 %s360, 1
      %p364 = scmp.eq.s32.totalorder %s34, 15
      %p365 = scmp.ne.s32.totalorder %s360, %s362
      %p366 = scmp.eq.s32.totalorder %s34, 0
      %p367 = por %p365, %p366
      %p368 = scmp.ne.s32.totalorder %s360, %s362
      %p369 = scmp.eq.s32.totalorder %s39, 15
      %p370 = por %p368, %p369
      %p371 = scmp.ne.s32.totalorder %s362, %s363
      %p372 = scmp.eq.s32.totalorder %s39, 0
      %p373 = por %p371, %p372
      %p374 = scmp.ne.s32.totalorder %s362, %s363
      %p375 = scmp.eq.s32.totalorder %s40, 15
      %p376 = por %p374, %p375
      %p378 = scmp.ne.s32.totalorder %s363, %s377
      %p379 = scmp.eq.s32.totalorder %s40, 0
      %p380 = por %p378, %p379
      %s381 = ssub.s32 %s41, %s60
      %s382 = ssub.s32 %s42, %s56
      %s383 = sor.u32 %s381, %s382
      %p384 = scmp.eq.s32.totalorder %s383, 0
      %s386 = sadd.s32 %s385, 1
      %s387 = scalar_select %p384, %s385, %s386
      %p390 = pneg %p384
      %p391 = scmp.eq.s32.totalorder %s34, 15
      %p392 = por %p390, %p391
      %p393 = scmp.ne.s32.totalorder %s385, %s388
      %p394 = scmp.eq.s32.totalorder %s34, 0
      %p395 = por %p393, %p394
      %p396 = scmp.ne.s32.totalorder %s385, %s388
      %p397 = scmp.eq.s32.totalorder %s39, 15
      %p398 = por %p396, %p397
      %p399 = scmp.ne.s32.totalorder %s388, %s389
      %p400 = scmp.eq.s32.totalorder %s39, 0
      %p401 = por %p399, %p400
      %p402 = scmp.ne.s32.totalorder %s388, %s389
      %p403 = scmp.eq.s32.totalorder %s40, 15
      %p404 = por %p402, %p403
      %p406 = scmp.ne.s32.totalorder %s389, %s405
      %p407 = scmp.eq.s32.totalorder %s40, 0
      %p408 = por %p406, %p407
      %p409 = scmp.le.s32.totalorder 1, %s34
      %p410 = scmp.lt.s32.totalorder %s34, 17
      %p411 = pnand %p409, %p410
      %p412 = pneg %p411
      // Predicated region
      $region9: #{tpu_custom_call.1} parent=5 // pred_check
        _
      $region10: #{tpu_custom_call.1} parent=5 // pred_check_branch
        %414 = sbr.rel (%p411) target = $region12
      $region11: #{tpu_custom_call.1} parent=5 // pred_region
        %s415 = ssub.s32 %s34, 1
        // Predicated region
        $region13: #{tpu_custom_call.1} parent=11 // pred_check
          %p416 = pneg %p100
        $region14: #{tpu_custom_call.1} parent=11 // pred_check_branch
          %418 = sbr.rel (%p416) target = $region16
        $region15: #{tpu_custom_call.1} parent=11 // pred_region
          %s420 = ssub.s32 16, 16
          %421 = vsyncadd [#allocation10], %s420
          %s423 = sshll.u32 [#allocation9], 4
          %s424 = int_to_ptr.vmem [resolvable:$true] %s423
          %426 = dma.hbm_to_vmem [thread:$0]  %s1, 16, %s424, [#allocation10]
        $region16: #{tpu_custom_call.1} parent=11 // pred_fallthru
          _
        // Predicated region
        $region17: #{tpu_custom_call.1} parent=11 // pred_check
          %p427 = pneg %p121
        $region18: #{tpu_custom_call.1} parent=11 // pred_check_branch
          %429 = sbr.rel (%p427) target = $region20
        $region19: #{tpu_custom_call.1} parent=11 // pred_region
          %s431 = ssub.s32 16, 16
          %432 = vsyncadd [#allocation10], %s431
          %s434 = sshll.u32 [#allocation11], 4
          %s435 = int_to_ptr.vmem [resolvable:$true] %s434
          %437 = dma.hbm_to_vmem [thread:$0]  %s2, 16, %s435, [#allocation10]
        $region20: #{tpu_custom_call.1} parent=11 // pred_fallthru
          _
        // Predicated region
        $region21: #{tpu_custom_call.1} parent=11 // pred_check
          %p438 = pneg %p142
        $region22: #{tpu_custom_call.1} parent=11 // pred_check_branch
          %440 = sbr.rel (%p438) target = $region24
        $region23: #{tpu_custom_call.1} parent=11 // pred_region
          %s442 = ssub.s32 16, 16
          %443 = vsyncadd [#allocation13], %s442
          %s445 = sshll.u32 [#allocation12], 4
          %s446 = int_to_ptr.vmem [resolvable:$true] %s445
          %448 = dma.hbm_to_vmem [thread:$0]  %s3, 16, %s446, [#allocation13]
        $region24: #{tpu_custom_call.1} parent=11 // pred_fallthru
          _
        // Predicated region
        $region25: #{tpu_custom_call.1} parent=11 // pred_check
          %p449 = pneg %p163
        $region26: #{tpu_custom_call.1} parent=11 // pred_check_branch
          %451 = sbr.rel (%p449) target = $region28
        $region27: #{tpu_custom_call.1} parent=11 // pred_region
          %s453 = ssub.s32 16, 16
          %454 = vsyncadd [#allocation13], %s453
          %s456 = sshll.u32 [#allocation14], 4
          %s457 = int_to_ptr.vmem [resolvable:$true] %s456
          %459 = dma.hbm_to_vmem [thread:$0]  %s4, 16, %s457, [#allocation13]
        $region28: #{tpu_custom_call.1} parent=11 // pred_fallthru
          _
        // Predicated region
        $region29: #{tpu_custom_call.1} parent=11 // pred_check
          %p460 = pneg %p184
        $region30: #{tpu_custom_call.1} parent=11 // pred_check_branch
          %462 = sbr.rel (%p460) target = $region32
        $region31: #{tpu_custom_call.1} parent=11 // pred_region
          %s464 = ssub.s32 4096, 4096
          %465 = vsyncadd [#allocation16], %s464
          %s466 = sshll.u32 [#allocation15], 4
          %s467 = int_to_ptr.vmem [resolvable:$true] %s466
          %472 = dma.hbm_to_vmem [thread:$0]  %s5, 4096, %s467, [#allocation16], 64, 64, 4
        $region32: #{tpu_custom_call.1} parent=11 // pred_fallthru
          _
        // Predicated region
        $region33: #{tpu_custom_call.1} parent=11 // pred_check
          %p473 = pneg %p205
        $region34: #{tpu_custom_call.1} parent=11 // pred_check_branch
          %475 = sbr.rel (%p473) target = $region36
        $region35: #{tpu_custom_call.1} parent=11 // pred_region
          %s477 = ssub.s32 64, 64
          %478 = vsyncadd [#allocation16], %s477
          %s479 = sshll.u32 [#allocation17], 4
          %s480 = int_to_ptr.vmem [resolvable:$true] %s479
          %485 = dma.hbm_to_vmem [thread:$0]  %s6, 64, %s480, [#allocation16], 16, 16, 1
        $region36: #{tpu_custom_call.1} parent=11 // pred_fallthru
          _
        // Predicated region
        $region37: #{tpu_custom_call.1} parent=11 // pred_check
          %p486 = pneg %p226
        $region38: #{tpu_custom_call.1} parent=11 // pred_check_branch
          %488 = sbr.rel (%p486) target = $region40
        $region39: #{tpu_custom_call.1} parent=11 // pred_region
          %s490 = ssub.s32 2048, 2048
          %491 = vsyncadd [#allocation19], %s490
          %s492 = sshll.u32 [#allocation18], 4
          %s493 = int_to_ptr.vmem [resolvable:$true] %s492
          %498 = dma.hbm_to_vmem [thread:$0]  %s7, 2048, %s493, [#allocation19], 128, 128, 8
        $region40: #{tpu_custom_call.1} parent=11 // pred_fallthru
          _
        // Predicated region
        $region41: #{tpu_custom_call.1} parent=11 // pred_check
          %p499 = pneg %p247
        $region42: #{tpu_custom_call.1} parent=11 // pred_check_branch
          %501 = sbr.rel (%p499) target = $region44
        $region43: #{tpu_custom_call.1} parent=11 // pred_region
          %s503 = ssub.s32 32, 32
          %504 = vsyncadd [#allocation19], %s503
          %s506 = sshll.u32 [#allocation20], 4
          %s507 = int_to_ptr.vmem [resolvable:$true] %s506
          %509 = dma.hbm_to_vmem [thread:$0]  %s8, 32, %s507, [#allocation19]
        $region44: #{tpu_custom_call.1} parent=11 // pred_fallthru
          _
        // Predicated region
        $region45: #{tpu_custom_call.1} parent=11 // pred_check
          %p510 = pneg %p268
        $region46: #{tpu_custom_call.1} parent=11 // pred_check_branch
          %512 = sbr.rel (%p510) target = $region48
        $region47: #{tpu_custom_call.1} parent=11 // pred_region
          %s514 = ssub.s32 1024, 1024
          %515 = vsyncadd [#allocation22], %s514
          %s516 = sshll.u32 [#allocation21], 4
          %s517 = int_to_ptr.vmem [resolvable:$true] %s516
          %522 = dma.hbm_to_vmem [thread:$0]  %s9, 1024, %s517, [#allocation22], 64, 64, 4
        $region48: #{tpu_custom_call.1} parent=11 // pred_fallthru
          _
        // Predicated region
        $region49: #{tpu_custom_call.1} parent=11 // pred_check
          %p523 = pneg %p289
        $region50: #{tpu_custom_call.1} parent=11 // pred_check_branch
          %525 = sbr.rel (%p523) target = $region52
        $region51: #{tpu_custom_call.1} parent=11 // pred_region
          %s527 = ssub.s32 16, 16
          %528 = vsyncadd [#allocation22], %s527
          %s530 = sshll.u32 [#allocation23], 4
          %s531 = int_to_ptr.vmem [resolvable:$true] %s530
          %533 = dma.hbm_to_vmem [thread:$0]  %s10, 16, %s531, [#allocation22]
        $region52: #{tpu_custom_call.1} parent=11 // pred_fallthru
          _
        // Predicated region
        $region53: #{tpu_custom_call.1} parent=11 // pred_check
          %p534 = pneg %p310
        $region54: #{tpu_custom_call.1} parent=11 // pred_check_branch
          %536 = sbr.rel (%p534) target = $region56
        $region55: #{tpu_custom_call.1} parent=11 // pred_region
          %s538 = ssub.s32 4096, 4096
          %539 = vsyncadd [#allocation25], %s538
          %s540 = sshll.u32 [#allocation24], 4
          %s541 = int_to_ptr.vmem [resolvable:$true] %s540
          %546 = dma.hbm_to_vmem [thread:$0]  %s11, 4096, %s541, [#allocation25], 256, 256, 16
        $region56: #{tpu_custom_call.1} parent=11 // pred_fallthru
          _
        // Predicated region
        $region57: #{tpu_custom_call.1} parent=11 // pred_check
          %p547 = pneg %p331
        $region58: #{tpu_custom_call.1} parent=11 // pred_check_branch
          %549 = sbr.rel (%p547) target = $region60
        $region59: #{tpu_custom_call.1} parent=11 // pred_region
          %s551 = ssub.s32 64, 64
          %552 = vsyncadd [#allocation25], %s551
          %s554 = sshll.u32 [#allocation26], 4
          %s555 = int_to_ptr.vmem [resolvable:$true] %s554
          %557 = dma.hbm_to_vmem [thread:$0]  %s12, 64, %s555, [#allocation25]
        $region60: #{tpu_custom_call.1} parent=11 // pred_fallthru
          _
        // Predicated region
        $region61: #{tpu_custom_call.1} parent=11 // pred_check
          %p558 = pneg %p352
        $region62: #{tpu_custom_call.1} parent=11 // pred_check_branch
          %560 = sbr.rel (%p558) target = $region64
        $region63: #{tpu_custom_call.1} parent=11 // pred_region
          %s562 = ssub.s32 4096, 4096
          %563 = vsyncadd [#allocation28], %s562
          %s564 = sshll.u32 [#allocation27], 4
          %s565 = int_to_ptr.vmem [resolvable:$true] %s564
          %570 = dma.hbm_to_vmem [thread:$0]  %s13, 4096, %s565, [#allocation28], 64, 64, 4
        $region64: #{tpu_custom_call.1} parent=11 // pred_fallthru
          _
        // Predicated region
        $region65: #{tpu_custom_call.1} parent=11 // pred_check
          %p571 = pneg %p373
        $region66: #{tpu_custom_call.1} parent=11 // pred_check_branch
          %573 = sbr.rel (%p571) target = $region68
        $region67: #{tpu_custom_call.1} parent=11 // pred_region
          %s575 = ssub.s32 16, 16
          %576 = vsyncadd [#allocation28], %s575
          %s578 = sshll.u32 [#allocation29], 4
          %s579 = int_to_ptr.vmem [resolvable:$true] %s578
          %581 = dma.hbm_to_vmem [thread:$0]  %s14, 16, %s579, [#allocation28]
        $region68: #{tpu_custom_call.1} parent=11 // pred_fallthru
          _
      $region12: #{tpu_custom_call.1} parent=5 // pred_fallthru
        _
      %p582 = scmp.lt.s32.totalorder %s34, 16
      // Predicated region
      $region69: #{tpu_custom_call.1} parent=5 // pred_check
        %p583 = pneg %p582
      $region70: #{tpu_custom_call.1} parent=5 // pred_check_branch
        %585 = sbr.rel (%p583) target = $region72
      $region71: #{tpu_custom_call.1} parent=5 // pred_region
        // Predicated region
        $region73: #{tpu_custom_call.1} parent=71 // pred_check
          %p586 = pneg %p73
        $region74: #{tpu_custom_call.1} parent=71 // pred_check_branch
          %588 = sbr.rel (%p586) target = $region76
        $region75: #{tpu_custom_call.1} parent=71 // pred_region
          %s589 = sand.u32 %s63, 1
          %s590 = scalar_lea.sflag [#allocation7], %s589
          %s591 = sand.u32 %s63, 1
          %s592 = smul.addr %s591, 64
          %s593 = scalar_lea.vmem [#allocation6], %s592
          %s595 = ssub.s32 1024, 1024
          %596 = vsyncadd %s590, %s595
          %s597 = smul.addr %s41, 8
          %s598 = smul.addr %s597, 128
          %s599 = scalar_lea.hbm %s0, %s598
          %s600 = sshll.u32 %s593, 4
          %s601 = int_to_ptr.vmem [resolvable:$true] %s600
          %606 = dma.hbm_to_vmem [thread:$0]  %s599, 1024, %s601, %s590, 128, 128, 8
        $region76: #{tpu_custom_call.1} parent=71 // pred_fallthru
          _
      $region72: #{tpu_custom_call.1} parent=5 // pred_fallthru
        _
      %p607 = scmp.le.s32.totalorder 1, %s34
      %p608 = scmp.lt.s32.totalorder %s34, 17
      %p609 = pnand %p607, %p608
      %p610 = pneg %p609
      // Predicated region
      $region77: #{tpu_custom_call.1} parent=5 // pred_check
        _
      $region78: #{tpu_custom_call.1} parent=5 // pred_check_branch
        %612 = sbr.rel (%p609) target = $region80
      $region79: #{tpu_custom_call.1} parent=5 // pred_region
        %s613 = ssub.s32 %s34, 1
        %s614 = sand.u32 %s66, 1
        %s615 = scalar_lea.sflag [#allocation7], %s614
        %s616 = sand.u32 %s66, 1
        %s617 = smul.addr %s616, 64
        %s618 = scalar_lea.vmem [#allocation6], %s617
        // Predicated region
        $region81: #{tpu_custom_call.1} parent=79 // pred_check
          %p619 = pneg %p79
        $region82: #{tpu_custom_call.1} parent=79 // pred_check_branch
          %621 = sbr.rel (%p619) target = $region84
        $region83: #{tpu_custom_call.1} parent=79 // pred_region
          %622 = dma.done %s615, 1024
        $region84: #{tpu_custom_call.1} parent=79 // pred_fallthru
          _
        // Predicated region
        $region85: #{tpu_custom_call.1} parent=79 // pred_check
          %p623 = pneg %p100
        $region86: #{tpu_custom_call.1} parent=79 // pred_check_branch
          %625 = sbr.rel (%p623) target = $region88
        $region87: #{tpu_custom_call.1} parent=79 // pred_region
          %626 = dma.done [#allocation10], 16
        $region88: #{tpu_custom_call.1} parent=79 // pred_fallthru
          _
        // Predicated region
        $region89: #{tpu_custom_call.1} parent=79 // pred_check
          %p627 = pneg %p121
        $region90: #{tpu_custom_call.1} parent=79 // pred_check_branch
          %629 = sbr.rel (%p627) target = $region92
        $region91: #{tpu_custom_call.1} parent=79 // pred_region
          %630 = dma.done [#allocation10], 16
        $region92: #{tpu_custom_call.1} parent=79 // pred_fallthru
          _
        // Predicated region
        $region93: #{tpu_custom_call.1} parent=79 // pred_check
          %p631 = pneg %p142
        $region94: #{tpu_custom_call.1} parent=79 // pred_check_branch
          %633 = sbr.rel (%p631) target = $region96
        $region95: #{tpu_custom_call.1} parent=79 // pred_region
          %634 = dma.done [#allocation13], 16
        $region96: #{tpu_custom_call.1} parent=79 // pred_fallthru
          _
        // Predicated region
        $region97: #{tpu_custom_call.1} parent=79 // pred_check
          %p635 = pneg %p163
        $region98: #{tpu_custom_call.1} parent=79 // pred_check_branch
          %637 = sbr.rel (%p635) target = $region100
        $region99: #{tpu_custom_call.1} parent=79 // pred_region
          %638 = dma.done [#allocation13], 16
        $region100: #{tpu_custom_call.1} parent=79 // pred_fallthru
          _
        // Predicated region
        $region101: #{tpu_custom_call.1} parent=79 // pred_check
          %p639 = pneg %p184
        $region102: #{tpu_custom_call.1} parent=79 // pred_check_branch
          %641 = sbr.rel (%p639) target = $region104
        $region103: #{tpu_custom_call.1} parent=79 // pred_region
          %642 = dma.done [#allocation16], 4096
        $region104: #{tpu_custom_call.1} parent=79 // pred_fallthru
          _
        // Predicated region
        $region105: #{tpu_custom_call.1} parent=79 // pred_check
          %p643 = pneg %p205
        $region106: #{tpu_custom_call.1} parent=79 // pred_check_branch
          %645 = sbr.rel (%p643) target = $region108
        $region107: #{tpu_custom_call.1} parent=79 // pred_region
          %646 = dma.done [#allocation16], 64
        $region108: #{tpu_custom_call.1} parent=79 // pred_fallthru
          _
        // Predicated region
        $region109: #{tpu_custom_call.1} parent=79 // pred_check
          %p647 = pneg %p226
        $region110: #{tpu_custom_call.1} parent=79 // pred_check_branch
          %649 = sbr.rel (%p647) target = $region112
        $region111: #{tpu_custom_call.1} parent=79 // pred_region
          %650 = dma.done [#allocation19], 2048
        $region112: #{tpu_custom_call.1} parent=79 // pred_fallthru
          _
        // Predicated region
        $region113: #{tpu_custom_call.1} parent=79 // pred_check
          %p651 = pneg %p247
        $region114: #{tpu_custom_call.1} parent=79 // pred_check_branch
          %653 = sbr.rel (%p651) target = $region116
        $region115: #{tpu_custom_call.1} parent=79 // pred_region
          %654 = dma.done [#allocation19], 32
        $region116: #{tpu_custom_call.1} parent=79 // pred_fallthru
          _
        // Predicated region
        $region117: #{tpu_custom_call.1} parent=79 // pred_check
          %p655 = pneg %p268
        $region118: #{tpu_custom_call.1} parent=79 // pred_check_branch
          %657 = sbr.rel (%p655) target = $region120
        $region119: #{tpu_custom_call.1} parent=79 // pred_region
          %658 = dma.done [#allocation22], 1024
        $region120: #{tpu_custom_call.1} parent=79 // pred_fallthru
          _
        // Predicated region
        $region121: #{tpu_custom_call.1} parent=79 // pred_check
          %p659 = pneg %p289
        $region122: #{tpu_custom_call.1} parent=79 // pred_check_branch
          %661 = sbr.rel (%p659) target = $region124
        $region123: #{tpu_custom_call.1} parent=79 // pred_region
          %662 = dma.done [#allocation22], 16
        $region124: #{tpu_custom_call.1} parent=79 // pred_fallthru
          _
        // Predicated region
        $region125: #{tpu_custom_call.1} parent=79 // pred_check
          %p663 = pneg %p310
        $region126: #{tpu_custom_call.1} parent=79 // pred_check_branch
          %665 = sbr.rel (%p663) target = $region128
        $region127: #{tpu_custom_call.1} parent=79 // pred_region
          %666 = dma.done [#allocation25], 4096
        $region128: #{tpu_custom_call.1} parent=79 // pred_fallthru
          _
        // Predicated region
        $region129: #{tpu_custom_call.1} parent=79 // pred_check
          %p667 = pneg %p331
        $region130: #{tpu_custom_call.1} parent=79 // pred_check_branch
          %669 = sbr.rel (%p667) target = $region132
        $region131: #{tpu_custom_call.1} parent=79 // pred_region
          %670 = dma.done [#allocation25], 64
        $region132: #{tpu_custom_call.1} parent=79 // pred_fallthru
          _
        // Predicated region
        $region133: #{tpu_custom_call.1} parent=79 // pred_check
          %p671 = pneg %p352
        $region134: #{tpu_custom_call.1} parent=79 // pred_check_branch
          %673 = sbr.rel (%p671) target = $region136
        $region135: #{tpu_custom_call.1} parent=79 // pred_region
          %674 = dma.done [#allocation28], 4096
        $region136: #{tpu_custom_call.1} parent=79 // pred_fallthru
          _
        // Predicated region
        $region137: #{tpu_custom_call.1} parent=79 // pred_check
          %p675 = pneg %p373
        $region138: #{tpu_custom_call.1} parent=79 // pred_check_branch
          %677 = sbr.rel (%p675) target = $region140
        $region139: #{tpu_custom_call.1} parent=79 // pred_region
          %678 = dma.done [#allocation28], 16
        $region140: #{tpu_custom_call.1} parent=79 // pred_fallthru
          _
        %s679 = sand.u32 %s66, 1
        %s680 = scalar_lea.sflag [#allocation7], %s679
        %s681 = sand.u32 %s66, 1
        %s682 = smul.addr %s681, 64
        %s683 = scalar_lea.vmem [#allocation6], %s682
        %p684 = pneg %p79
        %p685 = pneg %p76
        %p686 = pneg %p100
        %p687 = pneg %p97
        %p688 = pneg %p121
        %p689 = pneg %p118
        %p690 = pneg %p142
        %p691 = pneg %p139
        %p692 = pneg %p163
        %p693 = pneg %p160
        %p694 = pneg %p184
        %p695 = pneg %p181
        %p696 = pneg %p205
        %p697 = pneg %p202
        %p698 = pneg %p226
        %p699 = pneg %p223
        %p700 = pneg %p247
        %p701 = pneg %p244
        %p702 = pneg %p268
        %p703 = pneg %p265
        %p704 = pneg %p289
        %p705 = pneg %p286
        %p706 = pneg %p310
        %p707 = pneg %p307
        %p708 = pneg %p331
        %p709 = pneg %p328
        %p710 = pneg %p352
        %p711 = pneg %p349
        %p712 = pneg %p373
        %p713 = pneg %p370
        %p714 = pneg %p401
        %p715 = pneg %p398
        %s716 = sand.u32 %s388, 1
        %s717 = scalar_lea.sflag [#allocation8], %s716
        %s718 = sand.u32 %s388, 1
        %s719 = smul.addr %s718, 32
        %s720 = scalar_lea.vmem [#allocation30], %s719
        %s721 = smul.u32 4, %s45
        %v723 = vld [vmem:[#allocation9] sm:$0x1]
        %v724 = vld [vmem:[#allocation11] sm:$0x1]
        %s725 = smul.u32 %s45, 32
        %p726 = scmp.eq.s32.totalorder %s45, 0
        %p727 = scmp.eq.s32.totalorder %s46, 0
        %p728 = pnand %p726, %p727
        %p729 = pneg %p728
        // Predicated region
        $region141: #{tpu_custom_call.1} parent=79 // pred_check
          _
        $region142: #{tpu_custom_call.1} parent=79 // pred_check_branch
          %731 = sbr.rel (%p728) target = $region144
        $region143: #{tpu_custom_call.1} parent=79 // pred_region
          %v732 = vld [vmem:[%s618] sm:$0xff]
          %v733 = vld [vmem:[%s618 + $0x8] sm:$0xff]
          %v734 = vld [vmem:[%s618 + $0x10] sm:$0xff]
          %v735 = vld [vmem:[%s618 + $0x18] sm:$0xff]
          %v736 = vld [vmem:[%s618 + $0x20] sm:$0xff]
          %v737 = vld [vmem:[%s618 + $0x28] sm:$0xff]
          %v738 = vld [vmem:[%s618 + $0x30] sm:$0xff]
          %v739 = vld [vmem:[%s618 + $0x38] sm:$0xff]
          %740 = vadd.xlane.f32.xlu0 %v732
          %v741 = vpop.xlane.xlu0 %740
          %742 = vadd.xlane.f32.xlu0 %v733
          %v743 = vpop.xlane.xlu0 %742
          %744 = vadd.xlane.f32.xlu0 %v734
          %v745 = vpop.xlane.xlu0 %744
          %746 = vadd.xlane.f32.xlu0 %v735
          %v747 = vpop.xlane.xlu0 %746
          %748 = vadd.xlane.f32.xlu0 %v736
          %v749 = vpop.xlane.xlu0 %748
          %750 = vadd.xlane.f32.xlu0 %v737
          %v751 = vpop.xlane.xlu0 %750
          %752 = vadd.xlane.f32.xlu0 %v738
          %v753 = vpop.xlane.xlu0 %752
          %754 = vadd.xlane.f32.xlu0 %v739
          %v755 = vpop.xlane.xlu0 %754
          %v756 = vrcp.pop 128.0
          %v757 = vmul.f32 %v741, %v756
          %v758 = vmul.f32 %v743, %v756
          %v759 = vmul.f32 %v745, %v756
          %v760 = vmul.f32 %v747, %v756
          %v761 = vmul.f32 %v749, %v756
          %v762 = vmul.f32 %v751, %v756
          %v763 = vmul.f32 %v753, %v756
          %v764 = vmul.f32 %v755, %v756
          %v765 = vsub.f32 %v732, %v757
          %v766 = vsub.f32 %v733, %v758
          %v767 = vsub.f32 %v734, %v759
          %v768 = vsub.f32 %v735, %v760
          %v769 = vsub.f32 %v736, %v761
          %v770 = vsub.f32 %v737, %v762
          %v771 = vsub.f32 %v738, %v763
          %v772 = vsub.f32 %v739, %v764
          %v773 = vmul.f32 %v765, %v765
          %v774 = vmul.f32 %v766, %v766
          %v775 = vmul.f32 %v767, %v767
          %v776 = vmul.f32 %v768, %v768
          %v777 = vmul.f32 %v769, %v769
          %v778 = vmul.f32 %v770, %v770
          %v779 = vmul.f32 %v771, %v771
          %v780 = vmul.f32 %v772, %v772
          %781 = vadd.xlane.f32.xlu0 %v773
          %v782 = vpop.xlane.xlu0 %781
          %783 = vadd.xlane.f32.xlu0 %v774
          %v784 = vpop.xlane.xlu0 %783
          %785 = vadd.xlane.f32.xlu0 %v775
          %v786 = vpop.xlane.xlu0 %785
          %787 = vadd.xlane.f32.xlu0 %v776
          %v788 = vpop.xlane.xlu0 %787
          %789 = vadd.xlane.f32.xlu0 %v777
          %v790 = vpop.xlane.xlu0 %789
          %791 = vadd.xlane.f32.xlu0 %v778
          %v792 = vpop.xlane.xlu0 %791
          %793 = vadd.xlane.f32.xlu0 %v779
          %v794 = vpop.xlane.xlu0 %793
          %795 = vadd.xlane.f32.xlu0 %v780
          %v796 = vpop.xlane.xlu0 %795
          %v797 = vmul.f32 %v782, %v756
          %v798 = vmul.f32 %v784, %v756
          %v799 = vmul.f32 %v786, %v756
          %v800 = vmul.f32 %v788, %v756
          %v801 = vmul.f32 %v790, %v756
          %v802 = vmul.f32 %v792, %v756
          %v803 = vmul.f32 %v794, %v756
          %v804 = vmul.f32 %v796, %v756
          %v805 = vadd.f32 %v797, 1e-05
          %v806 = vadd.f32 %v798, 1e-05
          %v807 = vadd.f32 %v799, 1e-05
          %v808 = vadd.f32 %v800, 1e-05
          %v809 = vadd.f32 %v801, 1e-05
          %v810 = vadd.f32 %v802, 1e-05
          %v811 = vadd.f32 %v803, 1e-05
          %v812 = vadd.f32 %v804, 1e-05
          %v813 = vrsqrt.pop %v805
          %v814 = vrsqrt.pop %v806
          %v815 = vrsqrt.pop %v807
          %v816 = vrsqrt.pop %v808
          %v817 = vrsqrt.pop %v809
          %v818 = vrsqrt.pop %v810
          %v819 = vrsqrt.pop %v811
          %v820 = vrsqrt.pop %v812
          %v821 = vmul.f32 %v765, %v813
          %v822 = vmul.f32 %v766, %v814
          %v823 = vmul.f32 %v767, %v815
          %v824 = vmul.f32 %v768, %v816
          %v825 = vmul.f32 %v769, %v817
          %v826 = vmul.f32 %v770, %v818
          %v827 = vmul.f32 %v771, %v819
          %v828 = vmul.f32 %v772, %v820
          %v830 = vlaneseq
          %v831 = vshrl.u32 %v830, 7
          %v832 = vsub.s32 0, %v831
          %v833 = vrot.slane %v723, %v832
          %v835 = vmul.f32 %v821, %v833
          %v836 = vmul.f32 %v822, %v833
          %v837 = vmul.f32 %v823, %v833
          %v838 = vmul.f32 %v824, %v833
          %v839 = vmul.f32 %v825, %v833
          %v840 = vmul.f32 %v826, %v833
          %v841 = vmul.f32 %v827, %v833
          %v842 = vmul.f32 %v828, %v833
          %v844 = vlaneseq
          %v845 = vshrl.u32 %v844, 7
          %v846 = vsub.s32 0, %v845
          %v847 = vrot.slane %v724, %v846
          %v849 = vadd.f32 %v835, %v847
          %v850 = vadd.f32 %v836, %v847
          %v851 = vadd.f32 %v837, %v847
          %v852 = vadd.f32 %v838, %v847
          %v853 = vadd.f32 %v839, %v847
          %v854 = vadd.f32 %v840, %v847
          %v855 = vadd.f32 %v841, %v847
          %v856 = vadd.f32 %v842, %v847
          %v857 = vpack.c.bf16 %v850, %v849
          %v858 = vpack.c.bf16 %v852, %v851
          %v859 = vpack.c.bf16 %v854, %v853
          %v860 = vpack.c.bf16 %v856, %v855
          %v861 = vld [vmem:[#allocation18] sm:$0xff]
          %v862 = vld [vmem:[#allocation18 + $0x8] sm:$0xff]
          %v863 = vld [vmem:[#allocation18 + $0x10] sm:$0xff]
          %v864 = vld [vmem:[#allocation18 + $0x18] sm:$0xff]
          %v865 = vld [vmem:[#allocation18 + $0x20] sm:$0xff]
          %v866 = vld [vmem:[#allocation18 + $0x28] sm:$0xff]
          %v867 = vld [vmem:[#allocation18 + $0x30] sm:$0xff]
          %v868 = vld [vmem:[#allocation18 + $0x38] sm:$0xff]
          %v869 = vld [vmem:[#allocation18 + $0x40] sm:$0xff]
          %v870 = vld [vmem:[#allocation18 + $0x48] sm:$0xff]
          %v871 = vld [vmem:[#allocation18 + $0x50] sm:$0xff]
          %v872 = vld [vmem:[#allocation18 + $0x58] sm:$0xff]
          %v873 = vld [vmem:[#allocation18 + $0x60] sm:$0xff]
          %v874 = vld [vmem:[#allocation18 + $0x68] sm:$0xff]
          %v875 = vld [vmem:[#allocation18 + $0x70] sm:$0xff]
          %v876 = vld [vmem:[#allocation18 + $0x78] sm:$0xff]
          %v877 = vld [vmem:[#allocation20] sm:$0x3]
          %v879 = vlaneseq
          %v880 = vshrl.u32 %v879, 7
          %v881 = vsub.s32 0, %v880
          %v882 = vrot.slane %v877, %v881
          %v883 = vlaneseq
          %v884 = vshrl.u32 %v883, 7
          %v885 = vsub.s32 1, %v884
          %v886 = vrot.slane %v877, %v885
          %v905 = vunpack.c.l.b16 %v861
          %v906 = vunpack.c.h.b16 %v861
          %v907 = vunpack.c.l.b16 %v862
          %v908 = vunpack.c.h.b16 %v862
          %v909 = vunpack.c.l.b16 %v863
          %v910 = vunpack.c.h.b16 %v863
          %v911 = vunpack.c.l.b16 %v864
          %v912 = vunpack.c.h.b16 %v864
          %v913 = vunpack.c.l.b16 %v865
          %v914 = vunpack.c.h.b16 %v865
          %v915 = vunpack.c.l.b16 %v866
          %v916 = vunpack.c.h.b16 %v866
          %v917 = vunpack.c.l.b16 %v867
          %v918 = vunpack.c.h.b16 %v867
          %v919 = vunpack.c.l.b16 %v868
          %v920 = vunpack.c.h.b16 %v868
          %v921 = vunpack.c.l.b16 %v869
          %v922 = vunpack.c.h.b16 %v869
          %v923 = vunpack.c.l.b16 %v870
          %v924 = vunpack.c.h.b16 %v870
          %v925 = vunpack.c.l.b16 %v871
          %v926 = vunpack.c.h.b16 %v871
          %v927 = vunpack.c.l.b16 %v872
          %v928 = vunpack.c.h.b16 %v872
          %v929 = vunpack.c.l.b16 %v873
          %v930 = vunpack.c.h.b16 %v873
          %v931 = vunpack.c.l.b16 %v874
          %v932 = vunpack.c.h.b16 %v874
          %v933 = vunpack.c.l.b16 %v875
          %v934 = vunpack.c.h.b16 %v875
          %v935 = vunpack.c.l.b16 %v876
          %v936 = vunpack.c.h.b16 %v876
          %v937 = vpack.c.b16 %v907, %v905
          %v938 = vpack.c.b16 %v908, %v906
          %v939 = vpack.c.b16 %v911, %v909
          %v940 = vpack.c.b16 %v912, %v910
          %v941 = vpack.c.b16 %v915, %v913
          %v942 = vpack.c.b16 %v916, %v914
          %v943 = vpack.c.b16 %v919, %v917
          %v944 = vpack.c.b16 %v920, %v918
          %v945 = vpack.c.b16 %v923, %v921
          %v946 = vpack.c.b16 %v924, %v922
          %v947 = vpack.c.b16 %v927, %v925
          %v948 = vpack.c.b16 %v928, %v926
          %v949 = vpack.c.b16 %v931, %v929
          %v950 = vpack.c.b16 %v932, %v930
          %v951 = vpack.c.b16 %v935, %v933
          %v952 = vpack.c.b16 %v936, %v934
          %969 = vmatprep.subr.bf16.mxu0 %v938
          %970 = vmatpush1.bf16.msra.mxu0 %v937
          %971 = vmatprep.subr.bf16.mxu0 %v940
          %972 = vmatpush1.bf16.msra.mxu0 %v939
          %973 = vmatprep.subr.bf16.mxu0 %v942
          %974 = vmatpush1.bf16.msra.mxu0 %v941
          %975 = vmatprep.subr.bf16.mxu0 %v944
          %976 = vmatpush1.bf16.msra.mxu0 %v943
          %977 = vmatprep.subr.bf16.mxu0 %v946
          %978 = vmatpush1.bf16.msra.mxu0 %v945
          %979 = vmatprep.subr.bf16.mxu0 %v948
          %980 = vmatpush1.bf16.msra.mxu0 %v947
          %981 = vmatprep.subr.bf16.mxu0 %v950
          %982 = vmatpush1.bf16.msra.mxu0 %v949
          %983 = vmatprep.subr.bf16.mxu0 %v952
          %984 = vmatpush1.bf16.msra.mxu0 %v951
          %985 = vmatprep.subr.bf16.mxu0 0
          %986 = vmatpush1.bf16.msra.mxu0 0
          %987 = vmatprep.subr.bf16.mxu0 0
          %988 = vmatpush1.bf16.msra.mxu0 0
          %989 = vmatprep.subr.bf16.mxu0 0
          %990 = vmatpush1.bf16.msra.mxu0 0
          %991 = vmatprep.subr.bf16.mxu0 0
          %992 = vmatpush1.bf16.msra.mxu0 0
          %993 = vmatprep.subr.bf16.mxu0 0
          %994 = vmatpush1.bf16.msra.mxu0 0
          %995 = vmatprep.subr.bf16.mxu0 0
          %996 = vmatpush1.bf16.msra.mxu0 0
          %997 = vmatprep.subr.bf16.mxu0 0
          %998 = vmatpush1.bf16.msra.mxu0 0
          %999 = vmatprep.subr.bf16.mxu0 0
          %1000 = vmatpush1.bf16.msra.mxu0 0
          %1001 = vmatprep.mubr.bf16.mxu0 0
          %1002 = vmatmul.mubr.bf16.gmra.mrb[0].mxu0 %v857
          %v1003 = vpop.f32.mrb[0].mxu0
          %v1004 = vadd.f32 %v882, %v1003
          %v1005 = vpop.f32.mrb[0].mxu0
          %v1006 = vadd.f32 %v886, %v1005
          %v1007 = vpop.f32.mrb[0].mxu0
          %v1008 = vadd.f32 %v882, %v1007
          %v1009 = vpop.f32.mrb[0].mxu0
          %v1010 = vadd.f32 %v886, %v1009
          %1011 = vmatprep.mubr.bf16.mxu0 0
          %1012 = vmatmul.mubr.bf16.gmra.mrb[0].mxu0 %v858
          %v1013 = vpop.f32.mrb[0].mxu0
          %v1014 = vadd.f32 %v882, %v1013
          %v1015 = vpop.f32.mrb[0].mxu0
          %v1016 = vadd.f32 %v886, %v1015
          %v1017 = vpop.f32.mrb[0].mxu0
          %v1018 = vadd.f32 %v882, %v1017
          %v1019 = vpop.f32.mrb[0].mxu0
          %v1020 = vadd.f32 %v886, %v1019
          %1021 = vmatprep.mubr.bf16.mxu0 0
          %1022 = vmatmul.mubr.bf16.gmra.mrb[0].mxu0 %v859
          %v1023 = vpop.f32.mrb[0].mxu0
          %v1024 = vadd.f32 %v882, %v1023
          %v1025 = vpop.f32.mrb[0].mxu0
          %v1026 = vadd.f32 %v886, %v1025
          %v1027 = vpop.f32.mrb[0].mxu0
          %v1028 = vadd.f32 %v882, %v1027
          %v1029 = vpop.f32.mrb[0].mxu0
          %v1030 = vadd.f32 %v886, %v1029
          %1031 = vmatprep.mubr.bf16.mxu0 0
          %1032 = vmatmul.mubr.bf16.gmra.mrb[0].mxu0 %v860
          %v1033 = vpop.f32.mrb[0].mxu0
          %v1034 = vadd.f32 %v882, %v1033
          %v1035 = vpop.f32.mrb[0].mxu0
          %v1036 = vadd.f32 %v886, %v1035
          %v1037 = vpop.f32.mrb[0].mxu0
          %v1038 = vadd.f32 %v882, %v1037
          %v1039 = vpop.f32.mrb[0].mxu0
          %v1040 = vadd.f32 %v886, %v1039
          %1041 = vdwg.mxu0
          %1042 = vxpose.xlu0.b32.start [1/16] %v1004, 128
          %1043 = vxpose.xlu0.b32.cont [2/16] %v1008, 128
          %1044 = vxpose.xlu0.b32.cont [3/16] %v1014, 128
          %1045 = vxpose.xlu0.b32.cont [4/16] %v1018, 128
          %1046 = vxpose.xlu0.b32.cont [5/16] %v1024, 128
          %1047 = vxpose.xlu0.b32.cont [6/16] %v1028, 128
          %1048 = vxpose.xlu0.b32.cont [7/16] %v1034, 128
          %1049 = vxpose.xlu0.b32.cont [8/16] %v1038, 128
          %1050 = vxpose.xlu0.b32.cont [9/16] 0.0, 128
          %1051 = vxpose.xlu0.b32.cont [10/16] 0.0, 128
          %1052 = vxpose.xlu0.b32.cont [11/16] 0.0, 128
          %1053 = vxpose.xlu0.b32.cont [12/16] 0.0, 128
          %1054 = vxpose.xlu0.b32.cont [13/16] 0.0, 128
          %1055 = vxpose.xlu0.b32.cont [14/16] 0.0, 128
          %1056 = vxpose.xlu0.b32.cont [15/16] 0.0, 128
          %1057 = vxpose.xlu0.b32.end [16/16] 0.0, 128
          %v1058 = vpop.trf.xlu0
          %v1059 = vpop.trf.xlu0
          %v1060 = vpop.trf.xlu0
          %v1061 = vpop.trf.xlu0
          %v1062 = vpop.trf.xlu0
          %v1063 = vpop.trf.xlu0
          %v1064 = vpop.trf.xlu0
          %v1065 = vpop.trf.xlu0
          %v1066 = vpop.trf.xlu0
          %v1067 = vpop.trf.xlu0
          %v1068 = vpop.trf.xlu0
          %v1069 = vpop.trf.xlu0
          %v1070 = vpop.trf.xlu0
          %v1071 = vpop.trf.xlu0
          %v1072 = vpop.trf.xlu0
          %v1073 = vpop.trf.xlu0
          %1074 = vxpose.xlu0.b32.start [1/16] %v1006, 128
          %1075 = vxpose.xlu0.b32.cont [2/16] %v1010, 128
          %1076 = vxpose.xlu0.b32.cont [3/16] %v1016, 128
          %1077 = vxpose.xlu0.b32.cont [4/16] %v1020, 128
          %1078 = vxpose.xlu0.b32.cont [5/16] %v1026, 128
          %1079 = vxpose.xlu0.b32.cont [6/16] %v1030, 128
          %1080 = vxpose.xlu0.b32.cont [7/16] %v1036, 128
          %1081 = vxpose.xlu0.b32.cont [8/16] %v1040, 128
          %1082 = vxpose.xlu0.b32.cont [9/16] 0.0, 128
          %1083 = vxpose.xlu0.b32.cont [10/16] 0.0, 128
          %1084 = vxpose.xlu0.b32.cont [11/16] 0.0, 128
          %1085 = vxpose.xlu0.b32.cont [12/16] 0.0, 128
          %1086 = vxpose.xlu0.b32.cont [13/16] 0.0, 128
          %1087 = vxpose.xlu0.b32.cont [14/16] 0.0, 128
          %1088 = vxpose.xlu0.b32.cont [15/16] 0.0, 128
          %1089 = vxpose.xlu0.b32.end [16/16] 0.0, 128
          %v1090 = vpop.trf.xlu0
          %v1091 = vpop.trf.xlu0
          %v1092 = vpop.trf.xlu0
          %v1093 = vpop.trf.xlu0
          %v1094 = vpop.trf.xlu0
          %v1095 = vpop.trf.xlu0
          %v1096 = vpop.trf.xlu0
          %v1097 = vpop.trf.xlu0
          %v1098 = vpop.trf.xlu0
          %v1099 = vpop.trf.xlu0
          %v1100 = vpop.trf.xlu0
          %v1101 = vpop.trf.xlu0
          %v1102 = vpop.trf.xlu0
          %v1103 = vpop.trf.xlu0
          %v1104 = vpop.trf.xlu0
          %v1105 = vpop.trf.xlu0
          %v1106 = vpack.c.bf16 %v1059, %v1058
          %v1107 = vpack.c.bf16 %v1061, %v1060
          %v1108 = vpack.c.bf16 %v1063, %v1062
          %v1109 = vpack.c.bf16 %v1065, %v1064
          %v1110 = vpack.c.bf16 %v1067, %v1066
          %v1111 = vpack.c.bf16 %v1069, %v1068
          %v1112 = vpack.c.bf16 %v1071, %v1070
          %v1113 = vpack.c.bf16 %v1073, %v1072
          %vm1114 = vcmask 523264
          %1115 = vst.msk [vmem:[#allocation2] sm:$0xff] %vm1114, %v1106
          %1116 = vst.msk [vmem:[#allocation2 + $0x8] sm:$0xff] %vm1114, %v1107
          %1117 = vst.msk [vmem:[#allocation2 + $0x10] sm:$0xff] %vm1114, %v1108
          %1118 = vst.msk [vmem:[#allocation2 + $0x18] sm:$0xff] %vm1114, %v1109
          %1119 = vst.msk [vmem:[#allocation2 + $0x20] sm:$0xff] %vm1114, %v1110
          %1120 = vst.msk [vmem:[#allocation2 + $0x28] sm:$0xff] %vm1114, %v1111
          %1121 = vst.msk [vmem:[#allocation2 + $0x30] sm:$0xff] %vm1114, %v1112
          %1122 = vst.msk [vmem:[#allocation2 + $0x38] sm:$0xff] %vm1114, %v1113
          %v1123 = vpack.c.bf16 %v1091, %v1090
          %v1124 = vpack.c.bf16 %v1093, %v1092
          %v1125 = vpack.c.bf16 %v1095, %v1094
          %v1126 = vpack.c.bf16 %v1097, %v1096
          %v1127 = vpack.c.bf16 %v1099, %v1098
          %v1128 = vpack.c.bf16 %v1101, %v1100
          %v1129 = vpack.c.bf16 %v1103, %v1102
          %v1130 = vpack.c.bf16 %v1105, %v1104
          %1131 = vst.msk [vmem:[#allocation3] sm:$0xff] %vm1114, %v1123
          %1132 = vst.msk [vmem:[#allocation3 + $0x8] sm:$0xff] %vm1114, %v1124
          %1133 = vst.msk [vmem:[#allocation3 + $0x10] sm:$0xff] %vm1114, %v1125
          %1134 = vst.msk [vmem:[#allocation3 + $0x18] sm:$0xff] %vm1114, %v1126
          %1135 = vst.msk [vmem:[#allocation3 + $0x20] sm:$0xff] %vm1114, %v1127
          %1136 = vst.msk [vmem:[#allocation3 + $0x28] sm:$0xff] %vm1114, %v1128
          %1137 = vst.msk [vmem:[#allocation3 + $0x30] sm:$0xff] %vm1114, %v1129
          %1138 = vst.msk [vmem:[#allocation3 + $0x38] sm:$0xff] %vm1114, %v1130
        $region144: #{tpu_custom_call.1} parent=79 // pred_fallthru
          _
        // Predicated region
        $region145: #{tpu_custom_call.1} parent=79 // pred_check
          %p1139 = pneg %p727
        $region146: #{tpu_custom_call.1} parent=79 // pred_check_branch
          %1141 = sbr.rel (%p1139) target = $region148
        $region147: #{tpu_custom_call.1} parent=79 // pred_region
          %s1142 = scalar_lea.vmem %s618, %s725 [#allocation6]
          %v1143 = vld [vmem:[%s1142] sm:$0xff]
          %v1144 = vld [vmem:[%s1142 + $0x8] sm:$0xff]
          %v1145 = vld [vmem:[%s1142 + $0x10] sm:$0xff]
          %v1146 = vld [vmem:[%s1142 + $0x18] sm:$0xff]
          %1147 = vadd.xlane.f32.xlu0 %v1143
          %v1148 = vpop.xlane.xlu0 %1147
          %1149 = vadd.xlane.f32.xlu0 %v1144
          %v1150 = vpop.xlane.xlu0 %1149
          %1151 = vadd.xlane.f32.xlu0 %v1145
          %v1152 = vpop.xlane.xlu0 %1151
          %1153 = vadd.xlane.f32.xlu0 %v1146
          %v1154 = vpop.xlane.xlu0 %1153
          %v1155 = vrcp.pop 128.0
          %v1156 = vmul.f32 %v1148, %v1155
          %v1157 = vmul.f32 %v1150, %v1155
          %v1158 = vmul.f32 %v1152, %v1155
          %v1159 = vmul.f32 %v1154, %v1155
          %v1160 = vsub.f32 %v1143, %v1156
          %v1161 = vsub.f32 %v1144, %v1157
          %v1162 = vsub.f32 %v1145, %v1158
          %v1163 = vsub.f32 %v1146, %v1159
          %v1164 = vmul.f32 %v1160, %v1160
          %v1165 = vmul.f32 %v1161, %v1161
          %v1166 = vmul.f32 %v1162, %v1162
          %v1167 = vmul.f32 %v1163, %v1163
          %1168 = vadd.xlane.f32.xlu0 %v1164
          %v1169 = vpop.xlane.xlu0 %1168
          %1170 = vadd.xlane.f32.xlu0 %v1165
          %v1171 = vpop.xlane.xlu0 %1170
          %1172 = vadd.xlane.f32.xlu0 %v1166
          %v1173 = vpop.xlane.xlu0 %1172
          %1174 = vadd.xlane.f32.xlu0 %v1167
          %v1175 = vpop.xlane.xlu0 %1174
          %v1176 = vmul.f32 %v1169, %v1155
          %v1177 = vmul.f32 %v1171, %v1155
          %v1178 = vmul.f32 %v1173, %v1155
          %v1179 = vmul.f32 %v1175, %v1155
          %v1180 = vadd.f32 %v1176, 1e-05
          %v1181 = vadd.f32 %v1177, 1e-05
          %v1182 = vadd.f32 %v1178, 1e-05
          %v1183 = vadd.f32 %v1179, 1e-05
          %v1184 = vrsqrt.pop %v1180
          %v1185 = vrsqrt.pop %v1181
          %v1186 = vrsqrt.pop %v1182
          %v1187 = vrsqrt.pop %v1183
          %v1188 = vmul.f32 %v1160, %v1184
          %v1189 = vmul.f32 %v1161, %v1185
          %v1190 = vmul.f32 %v1162, %v1186
          %v1191 = vmul.f32 %v1163, %v1187
          %v1193 = vlaneseq
          %v1194 = vshrl.u32 %v1193, 7
          %v1195 = vsub.s32 0, %v1194
          %v1196 = vrot.slane %v723, %v1195
          %v1198 = vmul.f32 %v1188, %v1196
          %v1199 = vmul.f32 %v1189, %v1196
          %v1200 = vmul.f32 %v1190, %v1196
          %v1201 = vmul.f32 %v1191, %v1196
          %v1203 = vlaneseq
          %v1204 = vshrl.u32 %v1203, 7
          %v1205 = vsub.s32 0, %v1204
          %v1206 = vrot.slane %v724, %v1205
          %v1208 = vadd.f32 %v1198, %v1206
          %v1209 = vadd.f32 %v1199, %v1206
          %v1210 = vadd.f32 %v1200, %v1206
          %v1211 = vadd.f32 %v1201, %v1206
          %v1212 = vpack.c.bf16 %v1209, %v1208
          %v1213 = vpack.c.bf16 %v1211, %v1210
          %1214 = vst [vmem:[#allocation4] sm:$0xff] %v1212
          %1215 = vst [vmem:[#allocation4 + $0x8] sm:$0xff] %v1213
          %1216 = vst [vmem:[#allocation5] sm:$0xff] 0.0
          %1217 = vst [vmem:[#allocation5 + $0x8] sm:$0xff] 0.0
          %1218 = vst [vmem:[#allocation5 + $0x10] sm:$0xff] 0.0
          %1219 = vst [vmem:[#allocation5 + $0x18] sm:$0xff] 0.0
        $region148: #{tpu_custom_call.1} parent=79 // pred_fallthru
          _
        %s1220 = smul.u32 %s46, 32
        %v1221 = vld [vmem:[#allocation4] sm:$0xff]
        %v1222 = vld [vmem:[#allocation4 + $0x8] sm:$0xff]
        %s1223 = smul.u32 %s46, 16
        %s1224 = smul.addr %s1223, 4
        %s1225 = scalar_lea.vmem [#allocation15], %s1224
        %v1226 = vld [vmem:[%s1225] sm:$0xf]
        %v1227 = vld [vmem:[%s1225 + $0x4] sm:$0xf]
        %v1228 = vld [vmem:[%s1225 + $0x8] sm:$0xf]
        %v1229 = vld [vmem:[%s1225 + $0xc] sm:$0xf]
        %v1230 = vld [vmem:[%s1225 + $0x10] sm:$0xf]
        %v1231 = vld [vmem:[%s1225 + $0x14] sm:$0xf]
        %v1232 = vld [vmem:[%s1225 + $0x18] sm:$0xf]
        %v1233 = vld [vmem:[%s1225 + $0x1c] sm:$0xf]
        %v1234 = vld [vmem:[%s1225 + $0x20] sm:$0xf]
        %v1235 = vld [vmem:[%s1225 + $0x24] sm:$0xf]
        %v1236 = vld [vmem:[%s1225 + $0x28] sm:$0xf]
        %v1237 = vld [vmem:[%s1225 + $0x2c] sm:$0xf]
        %v1238 = vld [vmem:[%s1225 + $0x30] sm:$0xf]
        %v1239 = vld [vmem:[%s1225 + $0x34] sm:$0xf]
        %v1240 = vld [vmem:[%s1225 + $0x38] sm:$0xf]
        %v1241 = vld [vmem:[%s1225 + $0x3c] sm:$0xf]
        %s1242 = scalar_lea.vmem [#allocation17], %s46
        %v1243 = vld [vmem:[%s1242] sm:$0x1]
        %v1245 = vlaneseq
        %v1246 = vshrl.u32 %v1245, 7
        %v1247 = vsub.s32 0, %v1246
        %v1248 = vrot.slane %v1243, %v1247
        %v1266 = vunpack.c.l.b16 %v1226
        %v1267 = vunpack.c.l.b16 %v1227
        %v1268 = vunpack.c.l.b16 %v1228
        %v1269 = vunpack.c.l.b16 %v1229
        %v1270 = vunpack.c.l.b16 %v1230
        %v1271 = vunpack.c.l.b16 %v1231
        %v1272 = vunpack.c.l.b16 %v1232
        %v1273 = vunpack.c.l.b16 %v1233
        %v1274 = vunpack.c.l.b16 %v1234
        %v1275 = vunpack.c.l.b16 %v1235
        %v1276 = vunpack.c.l.b16 %v1236
        %v1277 = vunpack.c.l.b16 %v1237
        %v1278 = vunpack.c.l.b16 %v1238
        %v1279 = vunpack.c.l.b16 %v1239
        %v1280 = vunpack.c.l.b16 %v1240
        %v1281 = vunpack.c.l.b16 %v1241
        %v1282 = vpack.c.b16 %v1267, %v1266
        %v1283 = vpack.c.b16 %v1269, %v1268
        %v1284 = vpack.c.b16 %v1271, %v1270
        %v1285 = vpack.c.b16 %v1273, %v1272
        %v1286 = vpack.c.b16 %v1275, %v1274
        %v1287 = vpack.c.b16 %v1277, %v1276
        %v1288 = vpack.c.b16 %v1279, %v1278
        %v1289 = vpack.c.b16 %v1281, %v1280
        %1298 = vmatprep.subr.bf16.mxu0 0
        %1299 = vmatpush1.bf16.msra.mxu0 %v1282
        %1300 = vmatprep.subr.bf16.mxu0 0
        %1301 = vmatpush1.bf16.msra.mxu0 %v1283
        %1302 = vmatprep.subr.bf16.mxu0 0
        %1303 = vmatpush1.bf16.msra.mxu0 %v1284
        %1304 = vmatprep.subr.bf16.mxu0 0
        %1305 = vmatpush1.bf16.msra.mxu0 %v1285
        %1306 = vmatprep.subr.bf16.mxu0 0
        %1307 = vmatpush1.bf16.msra.mxu0 %v1286
        %1308 = vmatprep.subr.bf16.mxu0 0
        %1309 = vmatpush1.bf16.msra.mxu0 %v1287
        %1310 = vmatprep.subr.bf16.mxu0 0
        %1311 = vmatpush1.bf16.msra.mxu0 %v1288
        %1312 = vmatprep.subr.bf16.mxu0 0
        %1313 = vmatpush1.bf16.msra.mxu0 %v1289
        %1314 = vmatprep.subr.bf16.mxu0 0
        %1315 = vmatpush1.bf16.msra.mxu0 0
        %1316 = vmatprep.subr.bf16.mxu0 0
        %1317 = vmatpush1.bf16.msra.mxu0 0
        %1318 = vmatprep.subr.bf16.mxu0 0
        %1319 = vmatpush1.bf16.msra.mxu0 0
        %1320 = vmatprep.subr.bf16.mxu0 0
        %1321 = vmatpush1.bf16.msra.mxu0 0
        %1322 = vmatprep.subr.bf16.mxu0 0
        %1323 = vmatpush1.bf16.msra.mxu0 0
        %1324 = vmatprep.subr.bf16.mxu0 0
        %1325 = vmatpush1.bf16.msra.mxu0 0
        %1326 = vmatprep.subr.bf16.mxu0 0
        %1327 = vmatpush1.bf16.msra.mxu0 0
        %1328 = vmatprep.subr.bf16.mxu0 0
        %1329 = vmatpush1.bf16.msra.mxu0 0
        %1330 = vmatprep.mubr.bf16.mxu0 0
        %1331 = vmatmul.mubr.bf16.gmra.mrb[0].mxu0 %v1221
        %v1332 = vpop.f32.mrb[0].mxu0
        %v1333 = vadd.f32 %v1248, %v1332
        %v1334 = vpop.f32.mrb[0].mxu0
        %v1335 = vpop.f32.mrb[0].mxu0
        %v1336 = vadd.f32 %v1248, %v1335
        %v1337 = vpop.f32.mrb[0].mxu0
        %1338 = vmatprep.mubr.bf16.mxu0 0
        %1339 = vmatmul.mubr.bf16.gmra.mrb[0].mxu0 %v1222
        %v1340 = vpop.f32.mrb[0].mxu0
        %v1341 = vadd.f32 %v1248, %v1340
        %v1342 = vpop.f32.mrb[0].mxu0
        %v1343 = vpop.f32.mrb[0].mxu0
        %v1344 = vadd.f32 %v1248, %v1343
        %v1345 = vpop.f32.mrb[0].mxu0
        %1346 = vdwg.mxu0
        %v1347 = vpack.c.bf16 %v1336, %v1333
        %v1348 = vpack.c.bf16 %v1344, %v1341
        %s1349 = sshra.s32 %s1220, 4
        %s1350 = sand.u32 %s1220, 15
        %s1351 = smul.addr %s1349, 8
        %s1352 = scalar_lea.vmem [#allocation2], %s1351
        %v1353 = vld [vmem:[%s1352] sm:$0xff]
        %v1354 = vld [vmem:[%s1352 + $0x8] sm:$0xff]
        %s1355 = smul.addr %s1349, 8
        %s1356 = scalar_lea.vmem [#allocation3], %s1355
        %v1357 = vld [vmem:[%s1356] sm:$0xff]
        %v1358 = vld [vmem:[%s1356 + $0x8] sm:$0xff]
        %vm1359 = vcmask 261120
        %v1361 = vsel %vm1359, %v1347, 0
        %v1364 = vsel %vm1359, %v1348, 0
        %1366 = vmatprep.subr.bf16.mxu0 0
        %1367 = vmatpush1.bf16.msra.mxu0 %v1353
        %1368 = vmatprep.subr.bf16.mxu0 0
        %1369 = vmatpush1.bf16.msra.mxu0 %v1354
        %1370 = vmatprep.subr.bf16.mxu0 0
        %1371 = vmatpush1.bf16.msra.mxu0 0
        %1372 = vmatprep.subr.bf16.mxu0 0
        %1373 = vmatpush1.bf16.msra.mxu0 0
        %1374 = vmatprep.subr.bf16.mxu0 0
        %1375 = vmatpush1.bf16.msra.mxu0 0
        %1376 = vmatprep.subr.bf16.mxu0 0
        %1377 = vmatpush1.bf16.msra.mxu0 0
        %1378 = vmatprep.subr.bf16.mxu0 0
        %1379 = vmatpush1.bf16.msra.mxu0 0
        %1380 = vmatprep.subr.bf16.mxu0 0
        %1381 = vmatpush1.bf16.msra.mxu0 0
        %1382 = vmatprep.subr.bf16.mxu0 0
        %1383 = vmatpush1.bf16.msra.mxu0 0
        %1384 = vmatprep.subr.bf16.mxu0 0
        %1385 = vmatpush1.bf16.msra.mxu0 0
        %1386 = vmatprep.subr.bf16.mxu0 0
        %1387 = vmatpush1.bf16.msra.mxu0 0
        %1388 = vmatprep.subr.bf16.mxu0 0
        %1389 = vmatpush1.bf16.msra.mxu0 0
        %1390 = vmatprep.subr.bf16.mxu0 0
        %1391 = vmatpush1.bf16.msra.mxu0 0
        %1392 = vmatprep.subr.bf16.mxu0 0
        %1393 = vmatpush1.bf16.msra.mxu0 0
        %1394 = vmatprep.subr.bf16.mxu0 0
        %1395 = vmatpush1.bf16.msra.mxu0 0
        %1396 = vmatprep.subr.bf16.mxu0 0
        %1397 = vmatpush1.bf16.msra.mxu0 0
        %1398 = vmatprep.mubr.bf16.mxu0 0
        %1399 = vmatmul.mubr.bf16.gmra.mrb[0].mxu0 %v1361
        %v1400 = vpop.f32.mrb[0].mxu0
        %v1401 = vadd.f32 0.0, %v1400
        %v1402 = vpop.f32.mrb[0].mxu0
        %v1403 = vpop.f32.mrb[0].mxu0
        %v1404 = vadd.f32 0.0, %v1403
        %v1405 = vpop.f32.mrb[0].mxu0
        %1406 = vmatprep.mubr.bf16.mxu0 0
        %1407 = vmatmul.mubr.bf16.gmra.mrb[0].mxu0 %v1364
        %v1408 = vpop.f32.mrb[0].mxu0
        %v1409 = vadd.f32 0.0, %v1408
        %v1410 = vpop.f32.mrb[0].mxu0
        %v1411 = vpop.f32.mrb[0].mxu0
        %v1412 = vadd.f32 0.0, %v1411
        %v1413 = vpop.f32.mrb[0].mxu0
        %1414 = vdwg.mxu0
        %vm1415 = vcmask 523264
        %v1416 = vsel %vm1415, %v1401, -inf
        %1417 = vmax.xlane.f32.xlu0 %v1416
        %v1418 = vpop.xlane.xlu0 %1417
        %v1419 = vsel %vm1415, %v1404, -inf
        %1420 = vmax.xlane.f32.xlu0 %v1419
        %v1421 = vpop.xlane.xlu0 %1420
        %v1422 = vsel %vm1415, %v1409, -inf
        %1423 = vmax.xlane.f32.xlu0 %v1422
        %v1424 = vpop.xlane.xlu0 %1423
        %v1425 = vsel %vm1415, %v1412, -inf
        %1426 = vmax.xlane.f32.xlu0 %v1425
        %v1427 = vpop.xlane.xlu0 %1426
        %v1428 = vsub.f32 %v1401, %v1418
        %v1429 = vsub.f32 %v1404, %v1421
        %v1430 = vsub.f32 %v1409, %v1424
        %v1431 = vsub.f32 %v1412, %v1427
        %v1432 = vmul.f32 %v1428, 1.442695
        %v1433 = vpow.pop %v1432
        %v1434 = vmul.f32 %v1429, 1.442695
        %v1435 = vpow.pop %v1434
        %v1436 = vmul.f32 %v1430, 1.442695
        %v1437 = vpow.pop %v1436
        %v1438 = vmul.f32 %v1431, 1.442695
        %v1439 = vpow.pop %v1438
        %v1440 = vsel %vm1415, %v1433, 0.0
        %1441 = vadd.xlane.f32.xlu0 %v1440
        %v1442 = vpop.xlane.xlu0 %1441
        %v1443 = vsel %vm1415, %v1435, 0.0
        %1444 = vadd.xlane.f32.xlu0 %v1443
        %v1445 = vpop.xlane.xlu0 %1444
        %v1446 = vsel %vm1415, %v1437, 0.0
        %1447 = vadd.xlane.f32.xlu0 %v1446
        %v1448 = vpop.xlane.xlu0 %1447
        %v1449 = vsel %vm1415, %v1439, 0.0
        %1450 = vadd.xlane.f32.xlu0 %v1449
        %v1451 = vpop.xlane.xlu0 %1450
        %v1452 = vrcp.pop %v1442
        %v1453 = vrcp.pop %v1445
        %v1454 = vrcp.pop %v1448
        %v1455 = vrcp.pop %v1451
        %v1456 = vmul.f32 %v1433, %v1452
        %v1457 = vmul.f32 %v1435, %v1453
        %v1458 = vmul.f32 %v1437, %v1454
        %v1459 = vmul.f32 %v1439, %v1455
        %v1460 = vpack.c.bf16 %v1457, %v1456
        %v1461 = vpack.c.bf16 %v1459, %v1458
        %v1463 = vsel %vm1415, %v1460, 0
        %v1466 = vsel %vm1415, %v1461, 0
        %v1469 = vsel %vm1415, %v1357, 0
        %v1472 = vsel %vm1415, %v1358, 0
        %1474 = vmatprep.subr.bf16.mxu0 0
        %1475 = vmatpush1.bf16.xpose.msra.mxu0 %v1469
        %1476 = vmatprep.subr.bf16.mxu0 0
        %1477 = vmatpush1.bf16.xpose.msra.mxu0 %v1472
        %1478 = vmatprep.subr.bf16.mxu0 0
        %1479 = vmatpush1.bf16.xpose.msra.mxu0 0
        %1480 = vmatprep.subr.bf16.mxu0 0
        %1481 = vmatpush1.bf16.xpose.msra.mxu0 0
        %1482 = vmatprep.subr.bf16.mxu0 0
        %1483 = vmatpush1.bf16.xpose.msra.mxu0 0
        %1484 = vmatprep.subr.bf16.mxu0 0
        %1485 = vmatpush1.bf16.xpose.msra.mxu0 0
        %1486 = vmatprep.subr.bf16.mxu0 0
        %1487 = vmatpush1.bf16.xpose.msra.mxu0 0
        %1488 = vmatprep.subr.bf16.mxu0 0
        %1489 = vmatpush1.bf16.xpose.msra.mxu0 0
        %1490 = vmatprep.subr.bf16.mxu0 0
        %1491 = vmatpush1.bf16.xpose.msra.mxu0 0
        %1492 = vmatprep.subr.bf16.mxu0 0
        %1493 = vmatpush1.bf16.xpose.msra.mxu0 0
        %1494 = vmatprep.subr.bf16.mxu0 0
        %1495 = vmatpush1.bf16.xpose.msra.mxu0 0
        %1496 = vmatprep.subr.bf16.mxu0 0
        %1497 = vmatpush1.bf16.xpose.msra.mxu0 0
        %1498 = vmatprep.subr.bf16.mxu0 0
        %1499 = vmatpush1.bf16.xpose.msra.mxu0 0
        %1500 = vmatprep.subr.bf16.mxu0 0
        %1501 = vmatpush1.bf16.xpose.msra.mxu0 0
        %1502 = vmatprep.subr.bf16.mxu0 0
        %1503 = vmatpush1.bf16.xpose.msra.mxu0 0
        %1504 = vmatprep.subr.bf16.mxu0 0
        %1505 = vmatpush1.bf16.xpose.msra.mxu0 0
        %1506 = vmatprep.mubr.bf16.mxu0 0
        %1507 = vmatmul.mubr.bf16.gmra.mrb[0].mxu0 %v1463
        %v1508 = vpop.f32.mrb[0].mxu0
        %v1509 = vadd.f32 0.0, %v1508
        %v1510 = vpop.f32.mrb[0].mxu0
        %v1511 = vpop.f32.mrb[0].mxu0
        %v1512 = vadd.f32 0.0, %v1511
        %v1513 = vpop.f32.mrb[0].mxu0
        %1514 = vmatprep.mubr.bf16.mxu0 0
        %1515 = vmatmul.mubr.bf16.gmra.mrb[0].mxu0 %v1466
        %v1516 = vpop.f32.mrb[0].mxu0
        %v1517 = vadd.f32 0.0, %v1516
        %v1518 = vpop.f32.mrb[0].mxu0
        %v1519 = vpop.f32.mrb[0].mxu0
        %v1520 = vadd.f32 0.0, %v1519
        %v1521 = vpop.f32.mrb[0].mxu0
        %1522 = vdwg.mxu0
        %v1523 = vld [vmem:[#allocation5] sm:$0xff]
        %v1524 = vld [vmem:[#allocation5 + $0x8] sm:$0xff]
        %v1525 = vld [vmem:[#allocation5 + $0x10] sm:$0xff]
        %v1526 = vld [vmem:[#allocation5 + $0x18] sm:$0xff]
        %v1527 = vpack.c.bf16 %v1512, %v1509
        %v1528 = vpack.c.bf16 %v1520, %v1517
        %s1529 = smul.u32 %s46, 4
        %s1530 = smul.addr %s1529, 4
        %s1531 = scalar_lea.vmem [#allocation21], %s1530
        %v1532 = vld [vmem:[%s1531] sm:$0xf]
        %v1533 = vld [vmem:[%s1531 + $0x4] sm:$0xf]
        %v1534 = vld [vmem:[%s1531 + $0x8] sm:$0xf]
        %v1535 = vld [vmem:[%s1531 + $0xc] sm:$0xf]
        %v1540 = vunpack.c.l.b16 %v1532
        %v1541 = vunpack.c.l.b16 %v1533
        %v1542 = vunpack.c.l.b16 %v1534
        %v1543 = vunpack.c.l.b16 %v1535
        %v1544 = vpack.c.b16 %v1541, %v1540
        %v1545 = vpack.c.b16 %v1543, %v1542
        %v1549 = vsel %vm1359, %v1527, 0
        %v1552 = vsel %vm1359, %v1528, 0
        %1554 = vmatprep.subr.bf16.mxu0 0
        %1555 = vmatpush1.bf16.msra.mxu0 %v1544
        %1556 = vmatprep.subr.bf16.mxu0 0
        %1557 = vmatpush1.bf16.msra.mxu0 %v1545
        %1558 = vmatprep.subr.bf16.mxu0 0
        %1559 = vmatpush1.bf16.msra.mxu0 0
        %1560 = vmatprep.subr.bf16.mxu0 0
        %1561 = vmatpush1.bf16.msra.mxu0 0
        %1562 = vmatprep.subr.bf16.mxu0 0
        %1563 = vmatpush1.bf16.msra.mxu0 0
        %1564 = vmatprep.subr.bf16.mxu0 0
        %1565 = vmatpush1.bf16.msra.mxu0 0
        %1566 = vmatprep.subr.bf16.mxu0 0
        %1567 = vmatpush1.bf16.msra.mxu0 0
        %1568 = vmatprep.subr.bf16.mxu0 0
        %1569 = vmatpush1.bf16.msra.mxu0 0
        %1570 = vmatprep.subr.bf16.mxu0 0
        %1571 = vmatpush1.bf16.msra.mxu0 0
        %1572 = vmatprep.subr.bf16.mxu0 0
        %1573 = vmatpush1.bf16.msra.mxu0 0
        %1574 = vmatprep.subr.bf16.mxu0 0
        %1575 = vmatpush1.bf16.msra.mxu0 0
        %1576 = vmatprep.subr.bf16.mxu0 0
        %1577 = vmatpush1.bf16.msra.mxu0 0
        %1578 = vmatprep.subr.bf16.mxu0 0
        %1579 = vmatpush1.bf16.msra.mxu0 0
        %1580 = vmatprep.subr.bf16.mxu0 0
        %1581 = vmatpush1.bf16.msra.mxu0 0
        %1582 = vmatprep.subr.bf16.mxu0 0
        %1583 = vmatpush1.bf16.msra.mxu0 0
        %1584 = vmatprep.subr.bf16.mxu0 0
        %1585 = vmatpush1.bf16.msra.mxu0 0
        %1586 = vmatprep.mubr.bf16.mxu0 0
        %1587 = vmatmul.mubr.bf16.gmra.mrb[0].mxu0 %v1549
        %v1588 = vpop.f32.mrb[0].mxu0
        %v1589 = vadd.f32 0.0, %v1588
        %v1590 = vpop.f32.mrb[0].mxu0
        %v1591 = vpop.f32.mrb[0].mxu0
        %v1592 = vadd.f32 0.0, %v1591
        %v1593 = vpop.f32.mrb[0].mxu0
        %1594 = vmatprep.mubr.bf16.mxu0 0
        %1595 = vmatmul.mubr.bf16.gmra.mrb[0].mxu0 %v1552
        %v1596 = vpop.f32.mrb[0].mxu0
        %v1597 = vadd.f32 0.0, %v1596
        %v1598 = vpop.f32.mrb[0].mxu0
        %v1599 = vpop.f32.mrb[0].mxu0
        %v1600 = vadd.f32 0.0, %v1599
        %v1601 = vpop.f32.mrb[0].mxu0
        %1602 = vdwg.mxu0
        %v1603 = vadd.f32 %v1523, %v1589
        %v1604 = vadd.f32 %v1524, %v1592
        %v1605 = vadd.f32 %v1525, %v1597
        %v1606 = vadd.f32 %v1526, %v1600
        %1607 = vst [vmem:[#allocation5] sm:$0xff] %v1603
        %1608 = vst [vmem:[#allocation5 + $0x8] sm:$0xff] %v1604
        %1609 = vst [vmem:[#allocation5 + $0x10] sm:$0xff] %v1605
        %1610 = vst [vmem:[#allocation5 + $0x18] sm:$0xff] %v1606
        %p1611 = scmp.eq.s32.totalorder %s46, 3
        // Predicated region
        $region149: #{tpu_custom_call.1} parent=79 // pred_check
          %p1612 = pneg %p1611
        $region150: #{tpu_custom_call.1} parent=79 // pred_check_branch
          %1614 = sbr.rel (%p1612) target = $region152
        $region151: #{tpu_custom_call.1} parent=79 // pred_region
          %s1615 = scalar_lea.vmem %s618, %s725 [#allocation6]
          %v1616 = vld [vmem:[%s1615] sm:$0xff]
          %v1617 = vld [vmem:[%s1615 + $0x8] sm:$0xff]
          %v1618 = vld [vmem:[%s1615 + $0x10] sm:$0xff]
          %v1619 = vld [vmem:[%s1615 + $0x18] sm:$0xff]
          %v1620 = vld [vmem:[#allocation5] sm:$0xff]
          %v1621 = vld [vmem:[#allocation5 + $0x8] sm:$0xff]
          %v1622 = vld [vmem:[#allocation5 + $0x10] sm:$0xff]
          %v1623 = vld [vmem:[#allocation5 + $0x18] sm:$0xff]
          %v1624 = vadd.f32 %v1616, %v1620
          %v1625 = vadd.f32 %v1617, %v1621
          %v1626 = vadd.f32 %v1618, %v1622
          %v1627 = vadd.f32 %v1619, %v1623
          %v1628 = vld [vmem:[#allocation23] sm:$0x1]
          %v1630 = vlaneseq
          %v1631 = vshrl.u32 %v1630, 7
          %v1632 = vsub.s32 0, %v1631
          %v1633 = vrot.slane %v1628, %v1632
          %v1635 = vadd.f32 %v1624, %v1633
          %v1636 = vadd.f32 %v1625, %v1633
          %v1637 = vadd.f32 %v1626, %v1633
          %v1638 = vadd.f32 %v1627, %v1633
          %v1639 = vld [vmem:[#allocation12] sm:$0x1]
          %v1640 = vld [vmem:[#allocation14] sm:$0x1]
          %1641 = vadd.xlane.f32.xlu0 %v1635
          %v1642 = vpop.xlane.xlu0 %1641
          %1643 = vadd.xlane.f32.xlu0 %v1636
          %v1644 = vpop.xlane.xlu0 %1643
          %1645 = vadd.xlane.f32.xlu0 %v1637
          %v1646 = vpop.xlane.xlu0 %1645
          %1647 = vadd.xlane.f32.xlu0 %v1638
          %v1648 = vpop.xlane.xlu0 %1647
          %v1649 = vrcp.pop 128.0
          %v1650 = vmul.f32 %v1642, %v1649
          %v1651 = vmul.f32 %v1644, %v1649
          %v1652 = vmul.f32 %v1646, %v1649
          %v1653 = vmul.f32 %v1648, %v1649
          %v1654 = vsub.f32 %v1635, %v1650
          %v1655 = vsub.f32 %v1636, %v1651
          %v1656 = vsub.f32 %v1637, %v1652
          %v1657 = vsub.f32 %v1638, %v1653
          %v1658 = vmul.f32 %v1654, %v1654
          %v1659 = vmul.f32 %v1655, %v1655
          %v1660 = vmul.f32 %v1656, %v1656
          %v1661 = vmul.f32 %v1657, %v1657
          %1662 = vadd.xlane.f32.xlu0 %v1658
          %v1663 = vpop.xlane.xlu0 %1662
          %1664 = vadd.xlane.f32.xlu0 %v1659
          %v1665 = vpop.xlane.xlu0 %1664
          %1666 = vadd.xlane.f32.xlu0 %v1660
          %v1667 = vpop.xlane.xlu0 %1666
          %1668 = vadd.xlane.f32.xlu0 %v1661
          %v1669 = vpop.xlane.xlu0 %1668
          %v1670 = vmul.f32 %v1663, %v1649
          %v1671 = vmul.f32 %v1665, %v1649
          %v1672 = vmul.f32 %v1667, %v1649
          %v1673 = vmul.f32 %v1669, %v1649
          %v1674 = vadd.f32 %v1670, 1e-05
          %v1675 = vadd.f32 %v1671, 1e-05
          %v1676 = vadd.f32 %v1672, 1e-05
          %v1677 = vadd.f32 %v1673, 1e-05
          %v1678 = vrsqrt.pop %v1674
          %v1679 = vrsqrt.pop %v1675
          %v1680 = vrsqrt.pop %v1676
          %v1681 = vrsqrt.pop %v1677
          %v1682 = vmul.f32 %v1654, %v1678
          %v1683 = vmul.f32 %v1655, %v1679
          %v1684 = vmul.f32 %v1656, %v1680
          %v1685 = vmul.f32 %v1657, %v1681
          %v1687 = vlaneseq
          %v1688 = vshrl.u32 %v1687, 7
          %v1689 = vsub.s32 0, %v1688
          %v1690 = vrot.slane %v1639, %v1689
          %v1692 = vmul.f32 %v1682, %v1690
          %v1693 = vmul.f32 %v1683, %v1690
          %v1694 = vmul.f32 %v1684, %v1690
          %v1695 = vmul.f32 %v1685, %v1690
          %v1697 = vlaneseq
          %v1698 = vshrl.u32 %v1697, 7
          %v1699 = vsub.s32 0, %v1698
          %v1700 = vrot.slane %v1640, %v1699
          %v1702 = vadd.f32 %v1692, %v1700
          %v1703 = vadd.f32 %v1693, %v1700
          %v1704 = vadd.f32 %v1694, %v1700
          %v1705 = vadd.f32 %v1695, %v1700
          %v1706 = vpack.c.bf16 %v1703, %v1702
          %v1707 = vpack.c.bf16 %v1705, %v1704
          %v1708 = vld [vmem:[#allocation24] sm:$0xff]
          %v1709 = vld [vmem:[#allocation24 + $0x8] sm:$0xff]
          %v1710 = vld [vmem:[#allocation24 + $0x10] sm:$0xff]
          %v1711 = vld [vmem:[#allocation24 + $0x18] sm:$0xff]
          %v1712 = vld [vmem:[#allocation24 + $0x20] sm:$0xff]
          %v1713 = vld [vmem:[#allocation24 + $0x28] sm:$0xff]
          %v1714 = vld [vmem:[#allocation24 + $0x30] sm:$0xff]
          %v1715 = vld [vmem:[#allocation24 + $0x38] sm:$0xff]
          %v1716 = vld [vmem:[#allocation24 + $0x40] sm:$0xff]
          %v1717 = vld [vmem:[#allocation24 + $0x48] sm:$0xff]
          %v1718 = vld [vmem:[#allocation24 + $0x50] sm:$0xff]
          %v1719 = vld [vmem:[#allocation24 + $0x58] sm:$0xff]
          %v1720 = vld [vmem:[#allocation24 + $0x60] sm:$0xff]
          %v1721 = vld [vmem:[#allocation24 + $0x68] sm:$0xff]
          %v1722 = vld [vmem:[#allocation24 + $0x70] sm:$0xff]
          %v1723 = vld [vmem:[#allocation24 + $0x78] sm:$0xff]
          %v1724 = vld [vmem:[#allocation24 + $0x80] sm:$0xff]
          %v1725 = vld [vmem:[#allocation24 + $0x88] sm:$0xff]
          %v1726 = vld [vmem:[#allocation24 + $0x90] sm:$0xff]
          %v1727 = vld [vmem:[#allocation24 + $0x98] sm:$0xff]
          %v1728 = vld [vmem:[#allocation24 + $0xa0] sm:$0xff]
          %v1729 = vld [vmem:[#allocation24 + $0xa8] sm:$0xff]
          %v1730 = vld [vmem:[#allocation24 + $0xb0] sm:$0xff]
          %v1731 = vld [vmem:[#allocation24 + $0xb8] sm:$0xff]
          %v1732 = vld [vmem:[#allocation24 + $0xc0] sm:$0xff]
          %v1733 = vld [vmem:[#allocation24 + $0xc8] sm:$0xff]
          %v1734 = vld [vmem:[#allocation24 + $0xd0] sm:$0xff]
          %v1735 = vld [vmem:[#allocation24 + $0xd8] sm:$0xff]
          %v1736 = vld [vmem:[#allocation24 + $0xe0] sm:$0xff]
          %v1737 = vld [vmem:[#allocation24 + $0xe8] sm:$0xff]
          %v1738 = vld [vmem:[#allocation24 + $0xf0] sm:$0xff]
          %v1739 = vld [vmem:[#allocation24 + $0xf8] sm:$0xff]
          %v1740 = vld [vmem:[#allocation26] sm:$0xf]
          %v1742 = vlaneseq
          %v1743 = vshrl.u32 %v1742, 7
          %v1744 = vsub.s32 0, %v1743
          %v1745 = vrot.slane %v1740, %v1744
          %v1746 = vlaneseq
          %v1747 = vshrl.u32 %v1746, 7
          %v1748 = vsub.s32 1, %v1747
          %v1749 = vrot.slane %v1740, %v1748
          %v1750 = vlaneseq
          %v1751 = vshrl.u32 %v1750, 7
          %v1752 = vsub.s32 2, %v1751
          %v1753 = vrot.slane %v1740, %v1752
          %v1754 = vlaneseq
          %v1755 = vshrl.u32 %v1754, 7
          %v1756 = vsub.s32 3, %v1755
          %v1757 = vrot.slane %v1740, %v1756
          %v1794 = vunpack.c.l.b16 %v1708
          %v1795 = vunpack.c.h.b16 %v1708
          %v1796 = vunpack.c.l.b16 %v1709
          %v1797 = vunpack.c.h.b16 %v1709
          %v1798 = vunpack.c.l.b16 %v1710
          %v1799 = vunpack.c.h.b16 %v1710
          %v1800 = vunpack.c.l.b16 %v1711
          %v1801 = vunpack.c.h.b16 %v1711
          %v1802 = vunpack.c.l.b16 %v1712
          %v1803 = vunpack.c.h.b16 %v1712
          %v1804 = vunpack.c.l.b16 %v1713
          %v1805 = vunpack.c.h.b16 %v1713
          %v1806 = vunpack.c.l.b16 %v1714
          %v1807 = vunpack.c.h.b16 %v1714
          %v1808 = vunpack.c.l.b16 %v1715
          %v1809 = vunpack.c.h.b16 %v1715
          %v1810 = vunpack.c.l.b16 %v1716
          %v1811 = vunpack.c.h.b16 %v1716
          %v1812 = vunpack.c.l.b16 %v1717
          %v1813 = vunpack.c.h.b16 %v1717
          %v1814 = vunpack.c.l.b16 %v1718
          %v1815 = vunpack.c.h.b16 %v1718
          %v1816 = vunpack.c.l.b16 %v1719
          %v1817 = vunpack.c.h.b16 %v1719
          %v1818 = vunpack.c.l.b16 %v1720
          %v1819 = vunpack.c.h.b16 %v1720
          %v1820 = vunpack.c.l.b16 %v1721
          %v1821 = vunpack.c.h.b16 %v1721
          %v1822 = vunpack.c.l.b16 %v1722
          %v1823 = vunpack.c.h.b16 %v1722
          %v1824 = vunpack.c.l.b16 %v1723
          %v1825 = vunpack.c.h.b16 %v1723
          %v1826 = vunpack.c.l.b16 %v1724
          %v1827 = vunpack.c.h.b16 %v1724
          %v1828 = vunpack.c.l.b16 %v1725
          %v1829 = vunpack.c.h.b16 %v1725
          %v1830 = vunpack.c.l.b16 %v1726
          %v1831 = vunpack.c.h.b16 %v1726
          %v1832 = vunpack.c.l.b16 %v1727
          %v1833 = vunpack.c.h.b16 %v1727
          %v1834 = vunpack.c.l.b16 %v1728
          %v1835 = vunpack.c.h.b16 %v1728
          %v1836 = vunpack.c.l.b16 %v1729
          %v1837 = vunpack.c.h.b16 %v1729
          %v1838 = vunpack.c.l.b16 %v1730
          %v1839 = vunpack.c.h.b16 %v1730
          %v1840 = vunpack.c.l.b16 %v1731
          %v1841 = vunpack.c.h.b16 %v1731
          %v1842 = vunpack.c.l.b16 %v1732
          %v1843 = vunpack.c.h.b16 %v1732
          %v1844 = vunpack.c.l.b16 %v1733
          %v1845 = vunpack.c.h.b16 %v1733
          %v1846 = vunpack.c.l.b16 %v1734
          %v1847 = vunpack.c.h.b16 %v1734
          %v1848 = vunpack.c.l.b16 %v1735
          %v1849 = vunpack.c.h.b16 %v1735
          %v1850 = vunpack.c.l.b16 %v1736
          %v1851 = vunpack.c.h.b16 %v1736
          %v1852 = vunpack.c.l.b16 %v1737
          %v1853 = vunpack.c.h.b16 %v1737
          %v1854 = vunpack.c.l.b16 %v1738
          %v1855 = vunpack.c.h.b16 %v1738
          %v1856 = vunpack.c.l.b16 %v1739
          %v1857 = vunpack.c.h.b16 %v1739
          %v1858 = vpack.c.b16 %v1798, %v1794
          %v1859 = vpack.c.b16 %v1799, %v1795
          %v1860 = vpack.c.b16 %v1800, %v1796
          %v1861 = vpack.c.b16 %v1801, %v1797
          %v1862 = vpack.c.b16 %v1806, %v1802
          %v1863 = vpack.c.b16 %v1807, %v1803
          %v1864 = vpack.c.b16 %v1808, %v1804
          %v1865 = vpack.c.b16 %v1809, %v1805
          %v1866 = vpack.c.b16 %v1814, %v1810
          %v1867 = vpack.c.b16 %v1815, %v1811
          %v1868 = vpack.c.b16 %v1816, %v1812
          %v1869 = vpack.c.b16 %v1817, %v1813
          %v1870 = vpack.c.b16 %v1822, %v1818
          %v1871 = vpack.c.b16 %v1823, %v1819
          %v1872 = vpack.c.b16 %v1824, %v1820
          %v1873 = vpack.c.b16 %v1825, %v1821
          %v1874 = vpack.c.b16 %v1830, %v1826
          %v1875 = vpack.c.b16 %v1831, %v1827
          %v1876 = vpack.c.b16 %v1832, %v1828
          %v1877 = vpack.c.b16 %v1833, %v1829
          %v1878 = vpack.c.b16 %v1838, %v1834
          %v1879 = vpack.c.b16 %v1839, %v1835
          %v1880 = vpack.c.b16 %v1840, %v1836
          %v1881 = vpack.c.b16 %v1841, %v1837
          %v1882 = vpack.c.b16 %v1846, %v1842
          %v1883 = vpack.c.b16 %v1847, %v1843
          %v1884 = vpack.c.b16 %v1848, %v1844
          %v1885 = vpack.c.b16 %v1849, %v1845
          %v1886 = vpack.c.b16 %v1854, %v1850
          %v1887 = vpack.c.b16 %v1855, %v1851
          %v1888 = vpack.c.b16 %v1856, %v1852
          %v1889 = vpack.c.b16 %v1857, %v1853
          %1922 = vmatprep.subr.bf16.mxu0 %v1859
          %1923 = vmatpush1.bf16.msra.mxu0 %v1858
          %1924 = vmatprep.subr.bf16.mxu0 %v1863
          %1925 = vmatpush1.bf16.msra.mxu0 %v1862
          %1926 = vmatprep.subr.bf16.mxu0 %v1867
          %1927 = vmatpush1.bf16.msra.mxu0 %v1866
          %1928 = vmatprep.subr.bf16.mxu0 %v1871
          %1929 = vmatpush1.bf16.msra.mxu0 %v1870
          %1930 = vmatprep.subr.bf16.mxu0 %v1875
          %1931 = vmatpush1.bf16.msra.mxu0 %v1874
          %1932 = vmatprep.subr.bf16.mxu0 %v1879
          %1933 = vmatpush1.bf16.msra.mxu0 %v1878
          %1934 = vmatprep.subr.bf16.mxu0 %v1883
          %1935 = vmatpush1.bf16.msra.mxu0 %v1882
          %1936 = vmatprep.subr.bf16.mxu0 %v1887
          %1937 = vmatpush1.bf16.msra.mxu0 %v1886
          %1938 = vmatprep.subr.bf16.mxu0 0
          %1939 = vmatpush1.bf16.msra.mxu0 0
          %1940 = vmatprep.subr.bf16.mxu0 0
          %1941 = vmatpush1.bf16.msra.mxu0 0
          %1942 = vmatprep.subr.bf16.mxu0 0
          %1943 = vmatpush1.bf16.msra.mxu0 0
          %1944 = vmatprep.subr.bf16.mxu0 0
          %1945 = vmatpush1.bf16.msra.mxu0 0
          %1946 = vmatprep.subr.bf16.mxu0 0
          %1947 = vmatpush1.bf16.msra.mxu0 0
          %1948 = vmatprep.subr.bf16.mxu0 0
          %1949 = vmatpush1.bf16.msra.mxu0 0
          %1950 = vmatprep.subr.bf16.mxu0 0
          %1951 = vmatpush1.bf16.msra.mxu0 0
          %1952 = vmatprep.subr.bf16.mxu0 0
          %1953 = vmatpush1.bf16.msra.mxu0 0
          %1954 = vmatprep.mubr.bf16.mxu0 0
          %1955 = vmatmul.mubr.bf16.gmra.mrb[0].mxu0 %v1706
          %v1956 = vpop.f32.mrb[0].mxu0
          %v1957 = vadd.f32 %v1745, %v1956
          %v1958 = vpop.f32.mrb[0].mxu0
          %v1959 = vadd.f32 %v1749, %v1958
          %v1960 = vpop.f32.mrb[0].mxu0
          %v1961 = vadd.f32 %v1745, %v1960
          %v1962 = vpop.f32.mrb[0].mxu0
          %v1963 = vadd.f32 %v1749, %v1962
          %1964 = vmatprep.mubr.bf16.mxu0 0
          %1965 = vmatmul.mubr.bf16.gmra.mrb[0].mxu0 %v1707
          %v1966 = vpop.f32.mrb[0].mxu0
          %v1967 = vadd.f32 %v1745, %v1966
          %v1968 = vpop.f32.mrb[0].mxu0
          %v1969 = vadd.f32 %v1749, %v1968
          %v1970 = vpop.f32.mrb[0].mxu0
          %v1971 = vadd.f32 %v1745, %v1970
          %v1972 = vpop.f32.mrb[0].mxu0
          %v1973 = vadd.f32 %v1749, %v1972
          %1974 = vdwg.mxu0
          %1975 = vmatprep.subr.bf16.mxu0 %v1861
          %1976 = vmatpush1.bf16.msra.mxu0 %v1860
          %1977 = vmatprep.subr.bf16.mxu0 %v1865
          %1978 = vmatpush1.bf16.msra.mxu0 %v1864
          %1979 = vmatprep.subr.bf16.mxu0 %v1869
          %1980 = vmatpush1.bf16.msra.mxu0 %v1868
          %1981 = vmatprep.subr.bf16.mxu0 %v1873
          %1982 = vmatpush1.bf16.msra.mxu0 %v1872
          %1983 = vmatprep.subr.bf16.mxu0 %v1877
          %1984 = vmatpush1.bf16.msra.mxu0 %v1876
          %1985 = vmatprep.subr.bf16.mxu0 %v1881
          %1986 = vmatpush1.bf16.msra.mxu0 %v1880
          %1987 = vmatprep.subr.bf16.mxu0 %v1885
          %1988 = vmatpush1.bf16.msra.mxu0 %v1884
          %1989 = vmatprep.subr.bf16.mxu0 %v1889
          %1990 = vmatpush1.bf16.msra.mxu0 %v1888
          %1991 = vmatprep.subr.bf16.mxu0 0
          %1992 = vmatpush1.bf16.msra.mxu0 0
          %1993 = vmatprep.subr.bf16.mxu0 0
          %1994 = vmatpush1.bf16.msra.mxu0 0
          %1995 = vmatprep.subr.bf16.mxu0 0
          %1996 = vmatpush1.bf16.msra.mxu0 0
          %1997 = vmatprep.subr.bf16.mxu0 0
          %1998 = vmatpush1.bf16.msra.mxu0 0
          %1999 = vmatprep.subr.bf16.mxu0 0
          %2000 = vmatpush1.bf16.msra.mxu0 0
          %2001 = vmatprep.subr.bf16.mxu0 0
          %2002 = vmatpush1.bf16.msra.mxu0 0
          %2003 = vmatprep.subr.bf16.mxu0 0
          %2004 = vmatpush1.bf16.msra.mxu0 0
          %2005 = vmatprep.subr.bf16.mxu0 0
          %2006 = vmatpush1.bf16.msra.mxu0 0
          %2007 = vmatprep.mubr.bf16.mxu0 0
          %2008 = vmatmul.mubr.bf16.gmra.mrb[0].mxu0 %v1706
          %v2009 = vpop.f32.mrb[0].mxu0
          %v2010 = vadd.f32 %v1753, %v2009
          %v2011 = vpop.f32.mrb[0].mxu0
          %v2012 = vadd.f32 %v1757, %v2011
          %v2013 = vpop.f32.mrb[0].mxu0
          %v2014 = vadd.f32 %v1753, %v2013
          %v2015 = vpop.f32.mrb[0].mxu0
          %v2016 = vadd.f32 %v1757, %v2015
          %2017 = vmatprep.mubr.bf16.mxu0 0
          %2018 = vmatmul.mubr.bf16.gmra.mrb[0].mxu0 %v1707
          %v2019 = vpop.f32.mrb[0].mxu0
          %v2020 = vadd.f32 %v1753, %v2019
          %v2021 = vpop.f32.mrb[0].mxu0
          %v2022 = vadd.f32 %v1757, %v2021
          %v2023 = vpop.f32.mrb[0].mxu0
          %v2024 = vadd.f32 %v1753, %v2023
          %v2025 = vpop.f32.mrb[0].mxu0
          %v2026 = vadd.f32 %v1757, %v2025
          %2027 = vdwg.mxu0
          %v2028 = vmul.f32 %v1957, 0.5
          %v2029 = vmul.f32 %v1959, 0.5
          %v2030 = vmul.f32 %v2010, 0.5
          %v2031 = vmul.f32 %v2012, 0.5
          %v2032 = vmul.f32 %v1961, 0.5
          %v2033 = vmul.f32 %v1963, 0.5
          %v2034 = vmul.f32 %v2014, 0.5
          %v2035 = vmul.f32 %v2016, 0.5
          %v2036 = vmul.f32 %v1967, 0.5
          %v2037 = vmul.f32 %v1969, 0.5
          %v2038 = vmul.f32 %v2020, 0.5
          %v2039 = vmul.f32 %v2022, 0.5
          %v2040 = vmul.f32 %v1971, 0.5
          %v2041 = vmul.f32 %v1973, 0.5
          %v2042 = vmul.f32 %v2024, 0.5
          %v2043 = vmul.f32 %v2026, 0.5
          %v2044 = vmul.f32 %v1957, 0.70710677
          %v2045 = vmul.f32 %v1959, 0.70710677
          %v2046 = vmul.f32 %v2010, 0.70710677
          %v2047 = vmul.f32 %v2012, 0.70710677
          %v2048 = vmul.f32 %v1961, 0.70710677
          %v2049 = vmul.f32 %v1963, 0.70710677
          %v2050 = vmul.f32 %v2014, 0.70710677
          %v2051 = vmul.f32 %v2016, 0.70710677
          %v2052 = vmul.f32 %v1967, 0.70710677
          %v2053 = vmul.f32 %v1969, 0.70710677
          %v2054 = vmul.f32 %v2020, 0.70710677
          %v2055 = vmul.f32 %v2022, 0.70710677
          %v2056 = vmul.f32 %v1971, 0.70710677
          %v2057 = vmul.f32 %v1973, 0.70710677
          %v2058 = vmul.f32 %v2024, 0.70710677
          %v2059 = vmul.f32 %v2026, 0.70710677
          %v2060 = verf.f32.pop %v2044
          %v2061 = verf.f32.pop %v2045
          %v2062 = verf.f32.pop %v2046
          %v2063 = verf.f32.pop %v2047
          %v2064 = verf.f32.pop %v2048
          %v2065 = verf.f32.pop %v2049
          %v2066 = verf.f32.pop %v2050
          %v2067 = verf.f32.pop %v2051
          %v2068 = verf.f32.pop %v2052
          %v2069 = verf.f32.pop %v2053
          %v2070 = verf.f32.pop %v2054
          %v2071 = verf.f32.pop %v2055
          %v2072 = verf.f32.pop %v2056
          %v2073 = verf.f32.pop %v2057
          %v2074 = verf.f32.pop %v2058
          %v2075 = verf.f32.pop %v2059
          %v2076 = vadd.f32 %v2060, 1.0
          %v2077 = vadd.f32 %v2061, 1.0
          %v2078 = vadd.f32 %v2062, 1.0
          %v2079 = vadd.f32 %v2063, 1.0
          %v2080 = vadd.f32 %v2064, 1.0
          %v2081 = vadd.f32 %v2065, 1.0
          %v2082 = vadd.f32 %v2066, 1.0
          %v2083 = vadd.f32 %v2067, 1.0
          %v2084 = vadd.f32 %v2068, 1.0
          %v2085 = vadd.f32 %v2069, 1.0
          %v2086 = vadd.f32 %v2070, 1.0
          %v2087 = vadd.f32 %v2071, 1.0
          %v2088 = vadd.f32 %v2072, 1.0
          %v2089 = vadd.f32 %v2073, 1.0
          %v2090 = vadd.f32 %v2074, 1.0
          %v2091 = vadd.f32 %v2075, 1.0
          %v2092 = vmul.f32 %v2028, %v2076
          %v2093 = vmul.f32 %v2029, %v2077
          %v2094 = vmul.f32 %v2030, %v2078
          %v2095 = vmul.f32 %v2031, %v2079
          %v2096 = vmul.f32 %v2032, %v2080
          %v2097 = vmul.f32 %v2033, %v2081
          %v2098 = vmul.f32 %v2034, %v2082
          %v2099 = vmul.f32 %v2035, %v2083
          %v2100 = vmul.f32 %v2036, %v2084
          %v2101 = vmul.f32 %v2037, %v2085
          %v2102 = vmul.f32 %v2038, %v2086
          %v2103 = vmul.f32 %v2039, %v2087
          %v2104 = vmul.f32 %v2040, %v2088
          %v2105 = vmul.f32 %v2041, %v2089
          %v2106 = vmul.f32 %v2042, %v2090
          %v2107 = vmul.f32 %v2043, %v2091
          %v2108 = vpack.c.bf16 %v2096, %v2092
          %v2109 = vpack.c.bf16 %v2097, %v2093
          %v2110 = vpack.c.bf16 %v2098, %v2094
          %v2111 = vpack.c.bf16 %v2099, %v2095
          %v2112 = vpack.c.bf16 %v2104, %v2100
          %v2113 = vpack.c.bf16 %v2105, %v2101
          %v2114 = vpack.c.bf16 %v2106, %v2102
          %v2115 = vpack.c.bf16 %v2107, %v2103
          %v2116 = vld [vmem:[#allocation27] sm:$0xf]
          %v2117 = vld [vmem:[#allocation27 + $0x4] sm:$0xf]
          %v2118 = vld [vmem:[#allocation27 + $0x8] sm:$0xf]
          %v2119 = vld [vmem:[#allocation27 + $0xc] sm:$0xf]
          %v2120 = vld [vmem:[#allocation27 + $0x10] sm:$0xf]
          %v2121 = vld [vmem:[#allocation27 + $0x14] sm:$0xf]
          %v2122 = vld [vmem:[#allocation27 + $0x18] sm:$0xf]
          %v2123 = vld [vmem:[#allocation27 + $0x1c] sm:$0xf]
          %v2124 = vld [vmem:[#allocation27 + $0x20] sm:$0xf]
          %v2125 = vld [vmem:[#allocation27 + $0x24] sm:$0xf]
          %v2126 = vld [vmem:[#allocation27 + $0x28] sm:$0xf]
          %v2127 = vld [vmem:[#allocation27 + $0x2c] sm:$0xf]
          %v2128 = vld [vmem:[#allocation27 + $0x30] sm:$0xf]
          %v2129 = vld [vmem:[#allocation27 + $0x34] sm:$0xf]
          %v2130 = vld [vmem:[#allocation27 + $0x38] sm:$0xf]
          %v2131 = vld [vmem:[#allocation27 + $0x3c] sm:$0xf]
          %v2132 = vld [vmem:[#allocation27 + $0x40] sm:$0xf]
          %v2133 = vld [vmem:[#allocation27 + $0x44] sm:$0xf]
          %v2134 = vld [vmem:[#allocation27 + $0x48] sm:$0xf]
          %v2135 = vld [vmem:[#allocation27 + $0x4c] sm:$0xf]
          %v2136 = vld [vmem:[#allocation27 + $0x50] sm:$0xf]
          %v2137 = vld [vmem:[#allocation27 + $0x54] sm:$0xf]
          %v2138 = vld [vmem:[#allocation27 + $0x58] sm:$0xf]
          %v2139 = vld [vmem:[#allocation27 + $0x5c] sm:$0xf]
          %v2140 = vld [vmem:[#allocation27 + $0x60] sm:$0xf]
          %v2141 = vld [vmem:[#allocation27 + $0x64] sm:$0xf]
          %v2142 = vld [vmem:[#allocation27 + $0x68] sm:$0xf]
          %v2143 = vld [vmem:[#allocation27 + $0x6c] sm:$0xf]
          %v2144 = vld [vmem:[#allocation27 + $0x70] sm:$0xf]
          %v2145 = vld [vmem:[#allocation27 + $0x74] sm:$0xf]
          %v2146 = vld [vmem:[#allocation27 + $0x78] sm:$0xf]
          %v2147 = vld [vmem:[#allocation27 + $0x7c] sm:$0xf]
          %v2148 = vld [vmem:[#allocation27 + $0x80] sm:$0xf]
          %v2149 = vld [vmem:[#allocation27 + $0x84] sm:$0xf]
          %v2150 = vld [vmem:[#allocation27 + $0x88] sm:$0xf]
          %v2151 = vld [vmem:[#allocation27 + $0x8c] sm:$0xf]
          %v2152 = vld [vmem:[#allocation27 + $0x90] sm:$0xf]
          %v2153 = vld [vmem:[#allocation27 + $0x94] sm:$0xf]
          %v2154 = vld [vmem:[#allocation27 + $0x98] sm:$0xf]
          %v2155 = vld [vmem:[#allocation27 + $0x9c] sm:$0xf]
          %v2156 = vld [vmem:[#allocation27 + $0xa0] sm:$0xf]
          %v2157 = vld [vmem:[#allocation27 + $0xa4] sm:$0xf]
          %v2158 = vld [vmem:[#allocation27 + $0xa8] sm:$0xf]
          %v2159 = vld [vmem:[#allocation27 + $0xac] sm:$0xf]
          %v2160 = vld [vmem:[#allocation27 + $0xb0] sm:$0xf]
          %v2161 = vld [vmem:[#allocation27 + $0xb4] sm:$0xf]
          %v2162 = vld [vmem:[#allocation27 + $0xb8] sm:$0xf]
          %v2163 = vld [vmem:[#allocation27 + $0xbc] sm:$0xf]
          %v2164 = vld [vmem:[#allocation27 + $0xc0] sm:$0xf]
          %v2165 = vld [vmem:[#allocation27 + $0xc4] sm:$0xf]
          %v2166 = vld [vmem:[#allocation27 + $0xc8] sm:$0xf]
          %v2167 = vld [vmem:[#allocation27 + $0xcc] sm:$0xf]
          %v2168 = vld [vmem:[#allocation27 + $0xd0] sm:$0xf]
          %v2169 = vld [vmem:[#allocation27 + $0xd4] sm:$0xf]
          %v2170 = vld [vmem:[#allocation27 + $0xd8] sm:$0xf]
          %v2171 = vld [vmem:[#allocation27 + $0xdc] sm:$0xf]
          %v2172 = vld [vmem:[#allocation27 + $0xe0] sm:$0xf]
          %v2173 = vld [vmem:[#allocation27 + $0xe4] sm:$0xf]
          %v2174 = vld [vmem:[#allocation27 + $0xe8] sm:$0xf]
          %v2175 = vld [vmem:[#allocation27 + $0xec] sm:$0xf]
          %v2176 = vld [vmem:[#allocation27 + $0xf0] sm:$0xf]
          %v2177 = vld [vmem:[#allocation27 + $0xf4] sm:$0xf]
          %v2178 = vld [vmem:[#allocation27 + $0xf8] sm:$0xf]
          %v2179 = vld [vmem:[#allocation27 + $0xfc] sm:$0xf]
          %v2180 = vld [vmem:[#allocation29] sm:$0x1]
          %v2182 = vlaneseq
          %v2183 = vshrl.u32 %v2182, 7
          %v2184 = vsub.s32 0, %v2183
          %v2185 = vrot.slane %v2180, %v2184
          %v2251 = vunpack.c.l.b16 %v2116
          %v2252 = vunpack.c.l.b16 %v2117
          %v2253 = vunpack.c.l.b16 %v2118
          %v2254 = vunpack.c.l.b16 %v2119
          %v2255 = vunpack.c.l.b16 %v2120
          %v2256 = vunpack.c.l.b16 %v2121
          %v2257 = vunpack.c.l.b16 %v2122
          %v2258 = vunpack.c.l.b16 %v2123
          %v2259 = vunpack.c.l.b16 %v2124
          %v2260 = vunpack.c.l.b16 %v2125
          %v2261 = vunpack.c.l.b16 %v2126
          %v2262 = vunpack.c.l.b16 %v2127
          %v2263 = vunpack.c.l.b16 %v2128
          %v2264 = vunpack.c.l.b16 %v2129
          %v2265 = vunpack.c.l.b16 %v2130
          %v2266 = vunpack.c.l.b16 %v2131
          %v2267 = vunpack.c.l.b16 %v2132
          %v2268 = vunpack.c.l.b16 %v2133
          %v2269 = vunpack.c.l.b16 %v2134
          %v2270 = vunpack.c.l.b16 %v2135
          %v2271 = vunpack.c.l.b16 %v2136
          %v2272 = vunpack.c.l.b16 %v2137
          %v2273 = vunpack.c.l.b16 %v2138
          %v2274 = vunpack.c.l.b16 %v2139
          %v2275 = vunpack.c.l.b16 %v2140
          %v2276 = vunpack.c.l.b16 %v2141
          %v2277 = vunpack.c.l.b16 %v2142
          %v2278 = vunpack.c.l.b16 %v2143
          %v2279 = vunpack.c.l.b16 %v2144
          %v2280 = vunpack.c.l.b16 %v2145
          %v2281 = vunpack.c.l.b16 %v2146
          %v2282 = vunpack.c.l.b16 %v2147
          %v2283 = vunpack.c.l.b16 %v2148
          %v2284 = vunpack.c.l.b16 %v2149
          %v2285 = vunpack.c.l.b16 %v2150
          %v2286 = vunpack.c.l.b16 %v2151
          %v2287 = vunpack.c.l.b16 %v2152
          %v2288 = vunpack.c.l.b16 %v2153
          %v2289 = vunpack.c.l.b16 %v2154
          %v2290 = vunpack.c.l.b16 %v2155
          %v2291 = vunpack.c.l.b16 %v2156
          %v2292 = vunpack.c.l.b16 %v2157
          %v2293 = vunpack.c.l.b16 %v2158
          %v2294 = vunpack.c.l.b16 %v2159
          %v2295 = vunpack.c.l.b16 %v2160
          %v2296 = vunpack.c.l.b16 %v2161
          %v2297 = vunpack.c.l.b16 %v2162
          %v2298 = vunpack.c.l.b16 %v2163
          %v2299 = vunpack.c.l.b16 %v2164
          %v2300 = vunpack.c.l.b16 %v2165
          %v2301 = vunpack.c.l.b16 %v2166
          %v2302 = vunpack.c.l.b16 %v2167
          %v2303 = vunpack.c.l.b16 %v2168
          %v2304 = vunpack.c.l.b16 %v2169
          %v2305 = vunpack.c.l.b16 %v2170
          %v2306 = vunpack.c.l.b16 %v2171
          %v2307 = vunpack.c.l.b16 %v2172
          %v2308 = vunpack.c.l.b16 %v2173
          %v2309 = vunpack.c.l.b16 %v2174
          %v2310 = vunpack.c.l.b16 %v2175
          %v2311 = vunpack.c.l.b16 %v2176
          %v2312 = vunpack.c.l.b16 %v2177
          %v2313 = vunpack.c.l.b16 %v2178
          %v2314 = vunpack.c.l.b16 %v2179
          %v2315 = vpack.c.b16 %v2252, %v2251
          %v2316 = vpack.c.b16 %v2254, %v2253
          %v2317 = vpack.c.b16 %v2256, %v2255
          %v2318 = vpack.c.b16 %v2258, %v2257
          %v2319 = vpack.c.b16 %v2260, %v2259
          %v2320 = vpack.c.b16 %v2262, %v2261
          %v2321 = vpack.c.b16 %v2264, %v2263
          %v2322 = vpack.c.b16 %v2266, %v2265
          %v2323 = vpack.c.b16 %v2268, %v2267
          %v2324 = vpack.c.b16 %v2270, %v2269
          %v2325 = vpack.c.b16 %v2272, %v2271
          %v2326 = vpack.c.b16 %v2274, %v2273
          %v2327 = vpack.c.b16 %v2276, %v2275
          %v2328 = vpack.c.b16 %v2278, %v2277
          %v2329 = vpack.c.b16 %v2280, %v2279
          %v2330 = vpack.c.b16 %v2282, %v2281
          %v2331 = vpack.c.b16 %v2284, %v2283
          %v2332 = vpack.c.b16 %v2286, %v2285
          %v2333 = vpack.c.b16 %v2288, %v2287
          %v2334 = vpack.c.b16 %v2290, %v2289
          %v2335 = vpack.c.b16 %v2292, %v2291
          %v2336 = vpack.c.b16 %v2294, %v2293
          %v2337 = vpack.c.b16 %v2296, %v2295
          %v2338 = vpack.c.b16 %v2298, %v2297
          %v2339 = vpack.c.b16 %v2300, %v2299
          %v2340 = vpack.c.b16 %v2302, %v2301
          %v2341 = vpack.c.b16 %v2304, %v2303
          %v2342 = vpack.c.b16 %v2306, %v2305
          %v2343 = vpack.c.b16 %v2308, %v2307
          %v2344 = vpack.c.b16 %v2310, %v2309
          %v2345 = vpack.c.b16 %v2312, %v2311
          %v2346 = vpack.c.b16 %v2314, %v2313
          %2379 = vmatprep.subr.bf16.mxu0 0
          %2380 = vmatpush1.bf16.msra.mxu0 %v2315
          %2381 = vmatprep.subr.bf16.mxu0 0
          %2382 = vmatpush1.bf16.msra.mxu0 %v2316
          %2383 = vmatprep.subr.bf16.mxu0 0
          %2384 = vmatpush1.bf16.msra.mxu0 %v2317
          %2385 = vmatprep.subr.bf16.mxu0 0
          %2386 = vmatpush1.bf16.msra.mxu0 %v2318
          %2387 = vmatprep.subr.bf16.mxu0 0
          %2388 = vmatpush1.bf16.msra.mxu0 %v2319
          %2389 = vmatprep.subr.bf16.mxu0 0
          %2390 = vmatpush1.bf16.msra.mxu0 %v2320
          %2391 = vmatprep.subr.bf16.mxu0 0
          %2392 = vmatpush1.bf16.msra.mxu0 %v2321
          %2393 = vmatprep.subr.bf16.mxu0 0
          %2394 = vmatpush1.bf16.msra.mxu0 %v2322
          %2395 = vmatprep.subr.bf16.mxu0 0
          %2396 = vmatpush1.bf16.msra.mxu0 %v2323
          %2397 = vmatprep.subr.bf16.mxu0 0
          %2398 = vmatpush1.bf16.msra.mxu0 %v2324
          %2399 = vmatprep.subr.bf16.mxu0 0
          %2400 = vmatpush1.bf16.msra.mxu0 %v2325
          %2401 = vmatprep.subr.bf16.mxu0 0
          %2402 = vmatpush1.bf16.msra.mxu0 %v2326
          %2403 = vmatprep.subr.bf16.mxu0 0
          %2404 = vmatpush1.bf16.msra.mxu0 %v2327
          %2405 = vmatprep.subr.bf16.mxu0 0
          %2406 = vmatpush1.bf16.msra.mxu0 %v2328
          %2407 = vmatprep.subr.bf16.mxu0 0
          %2408 = vmatpush1.bf16.msra.mxu0 %v2329
          %2409 = vmatprep.subr.bf16.mxu0 0
          %2410 = vmatpush1.bf16.msra.mxu0 %v2330
          %2411 = vmatprep.mubr.bf16.mxu0 %v2109
          %2412 = vmatmul.mubr.bf16.gmra.mrb[0].mxu0 %v2108
          %v2413 = vpop.f32.mrb[0].mxu0
          %v2414 = vadd.f32 %v2185, %v2413
          %v2415 = vpop.f32.mrb[0].mxu0
          %v2416 = vpop.f32.mrb[0].mxu0
          %v2417 = vadd.f32 %v2185, %v2416
          %v2418 = vpop.f32.mrb[0].mxu0
          %2419 = vmatprep.mubr.bf16.mxu0 %v2113
          %2420 = vmatmul.mubr.bf16.gmra.mrb[0].mxu0 %v2112
          %v2421 = vpop.f32.mrb[0].mxu0
          %v2422 = vadd.f32 %v2185, %v2421
          %v2423 = vpop.f32.mrb[0].mxu0
          %v2424 = vpop.f32.mrb[0].mxu0
          %v2425 = vadd.f32 %v2185, %v2424
          %v2426 = vpop.f32.mrb[0].mxu0
          %2427 = vdwg.mxu0
          %2428 = vmatprep.subr.bf16.mxu0 0
          %2429 = vmatpush1.bf16.msra.mxu0 %v2331
          %2430 = vmatprep.subr.bf16.mxu0 0
          %2431 = vmatpush1.bf16.msra.mxu0 %v2332
          %2432 = vmatprep.subr.bf16.mxu0 0
          %2433 = vmatpush1.bf16.msra.mxu0 %v2333
          %2434 = vmatprep.subr.bf16.mxu0 0
          %2435 = vmatpush1.bf16.msra.mxu0 %v2334
          %2436 = vmatprep.subr.bf16.mxu0 0
          %2437 = vmatpush1.bf16.msra.mxu0 %v2335
          %2438 = vmatprep.subr.bf16.mxu0 0
          %2439 = vmatpush1.bf16.msra.mxu0 %v2336
          %2440 = vmatprep.subr.bf16.mxu0 0
          %2441 = vmatpush1.bf16.msra.mxu0 %v2337
          %2442 = vmatprep.subr.bf16.mxu0 0
          %2443 = vmatpush1.bf16.msra.mxu0 %v2338
          %2444 = vmatprep.subr.bf16.mxu0 0
          %2445 = vmatpush1.bf16.msra.mxu0 %v2339
          %2446 = vmatprep.subr.bf16.mxu0 0
          %2447 = vmatpush1.bf16.msra.mxu0 %v2340
          %2448 = vmatprep.subr.bf16.mxu0 0
          %2449 = vmatpush1.bf16.msra.mxu0 %v2341
          %2450 = vmatprep.subr.bf16.mxu0 0
          %2451 = vmatpush1.bf16.msra.mxu0 %v2342
          %2452 = vmatprep.subr.bf16.mxu0 0
          %2453 = vmatpush1.bf16.msra.mxu0 %v2343
          %2454 = vmatprep.subr.bf16.mxu0 0
          %2455 = vmatpush1.bf16.msra.mxu0 %v2344
          %2456 = vmatprep.subr.bf16.mxu0 0
          %2457 = vmatpush1.bf16.msra.mxu0 %v2345
          %2458 = vmatprep.subr.bf16.mxu0 0
          %2459 = vmatpush1.bf16.msra.mxu0 %v2346
          %2460 = vmatprep.mubr.bf16.mxu0 %v2111
          %2461 = vmatmul.mubr.bf16.gmra.mrb[0].mxu0 %v2110
          %v2462 = vpop.f32.mrb[0].mxu0
          %v2463 = vadd.f32 %v2414, %v2462
          %v2464 = vpop.f32.mrb[0].mxu0
          %v2465 = vpop.f32.mrb[0].mxu0
          %v2466 = vadd.f32 %v2417, %v2465
          %v2467 = vpop.f32.mrb[0].mxu0
          %2468 = vmatprep.mubr.bf16.mxu0 %v2115
          %2469 = vmatmul.mubr.bf16.gmra.mrb[0].mxu0 %v2114
          %v2470 = vpop.f32.mrb[0].mxu0
          %v2471 = vadd.f32 %v2422, %v2470
          %v2472 = vpop.f32.mrb[0].mxu0
          %v2473 = vpop.f32.mrb[0].mxu0
          %v2474 = vadd.f32 %v2425, %v2473
          %v2475 = vpop.f32.mrb[0].mxu0
          %2476 = vdwg.mxu0
          %v2477 = vadd.f32 %v1635, %v2463
          %v2478 = vadd.f32 %v1636, %v2466
          %v2479 = vadd.f32 %v1637, %v2471
          %v2480 = vadd.f32 %v1638, %v2474
          %2481 = vst [vmem:[%s720] sm:$0xff] %v2477
          %2482 = vst [vmem:[%s720 + $0x8] sm:$0xff] %v2478
          %2483 = vst [vmem:[%s720 + $0x10] sm:$0xff] %v2479
          %2484 = vst [vmem:[%s720 + $0x18] sm:$0xff] %v2480
        $region152: #{tpu_custom_call.1} parent=79 // pred_fallthru
          _
        %s2485 = sand.u32 %s388, 1
        %s2486 = scalar_lea.sflag [#allocation8], %s2485
        %s2487 = sand.u32 %s388, 1
        %s2488 = smul.addr %s2487, 32
        %s2489 = scalar_lea.vmem [#allocation30], %s2488
        // Predicated region
        $region153: #{tpu_custom_call.1} parent=79 // pred_check
          %p2490 = pneg %p398
        $region154: #{tpu_custom_call.1} parent=79 // pred_check_branch
          %2492 = sbr.rel (%p2490) target = $region156
        $region155: #{tpu_custom_call.1} parent=79 // pred_region
          %s2493 = smul.u32 4, %s45
          %s2495 = ssub.s32 512, 512
          %2496 = vsyncadd %s2486, %s2495
          %s2497 = smul.addr %s44, 8
          %s2498 = sadd.s32 %s2493, %s2497
          %s2499 = smul.addr %s2498, 128
          %s2500 = scalar_lea.hbm %s15, %s2499
          %s2501 = sshll.u32 %s2489, 4
          %s2502 = int_to_ptr.vmem [resolvable:$true] %s2501
          %2507 = dma.vmem_to_hbm [thread:$0]  %s2502, 512, %s2500, %s2486, 128, 128, 8
        $region156: #{tpu_custom_call.1} parent=79 // pred_fallthru
          _
      $region80: #{tpu_custom_call.1} parent=5 // pred_fallthru
        _
      %p2508 = scmp.le.s32.totalorder 2, %s34
      // Predicated region
      $region157: #{tpu_custom_call.1} parent=5 // pred_check
        %p2509 = pneg %p2508
      $region158: #{tpu_custom_call.1} parent=5 // pred_check_branch
        %2511 = sbr.rel (%p2509) target = $region160
      $region159: #{tpu_custom_call.1} parent=5 // pred_region
        %s2512 = ssub.s32 %s34, 2
        // Predicated region
        $region161: #{tpu_custom_call.1} parent=159 // pred_check
          %p2513 = pneg %p404
        $region162: #{tpu_custom_call.1} parent=159 // pred_check_branch
          %2515 = sbr.rel (%p2513) target = $region164
        $region163: #{tpu_custom_call.1} parent=159 // pred_region
          %s2516 = sand.u32 %s389, 1
          %s2517 = scalar_lea.sflag [#allocation8], %s2516
          %s2518 = sand.u32 %s389, 1
          %s2519 = smul.addr %s2518, 32
          %s2520 = scalar_lea.vmem [#allocation30], %s2519
          %2521 = dma.done %s2517, 512
        $region164: #{tpu_custom_call.1} parent=159 // pred_fallthru
          _
      $region160: #{tpu_custom_call.1} parent=5 // pred_fallthru
        _
    $region6: #{tpu_custom_call.1} parent=1 // loop_footer
      %s38 = sadd.s32 1, %s34
    $region7: #{tpu_custom_call.1} parent=1 // loop_footer_branch
      %33 = sbr.rel target = $region3
    $region8: #{tpu_custom_call.1} parent=1 // loop_exit
      _
    %2522 = vsyncpa [#allocation7], 1
    %s2523 = scalar_lea.sflag [#allocation7], 1
    %2524 = vsyncpa %s2523, 1
    %2525 = vsyncpa [#allocation10], 1
    %2526 = vsyncpa [#allocation13], 1
    %2527 = vsyncpa [#allocation16], 1
    %2528 = vsyncpa [#allocation19], 1
    %2529 = vsyncpa [#allocation22], 1
    %2530 = vsyncpa [#allocation25], 1
    %2531 = vsyncpa [#allocation28], 1
    %2532 = vsyncpa [#allocation8], 1
    %s2533 = scalar_lea.sflag [#allocation8], 1
    %2534 = vsyncpa %s2533, 1

// kernel: tpu_custom_call.1
$region0: #{tpu_custom_call.1}
  #allocation0 [shape = 'u32[]', space=smem, size = 0x4, offset = 0x4, fixed_abs, tag = 'smem constant byte address 0x4 - core index']
  #allocation1 [shape = 'u32[144,128]{1,0:T(1,128)}', space=vmem, size = 0x12000, scoped, tag = 'internal scratch']
  #allocation2 [shape = 'bf16[128,64]{1,0:T(16,128)(2,1)}', space=vmem, size = 0x8000, scoped, tag = 'scratch operand']
  #allocation3 [shape = 'bf16[128,64]{1,0:T(16,128)(2,1)}', space=vmem, size = 0x8000, scoped, tag = 'scratch operand']
  #allocation4 [shape = 'bf16[32,128]{1,0:T(16,128)(2,1)}', space=vmem, size = 0x2000, scoped, tag = 'scratch operand']
  #allocation5 [shape = 'f32[32,128]{1,0:T(8,128)}', space=vmem, size = 0x4000, scoped, tag = 'scratch operand']
  %s0 = inlined_call_operand.hbm [shape: f32[2,64,128], index: 0, kind: input, shape index: {}]
  %s1 = inlined_call_operand.hbm [shape: f32[1,128], index: 1, kind: input, shape index: {}]
  %s2 = inlined_call_operand.hbm [shape: f32[1,128], index: 2, kind: input, shape index: {}]
  %s3 = inlined_call_operand.hbm [shape: f32[1,128], index: 3, kind: input, shape index: {}]
  %s4 = inlined_call_operand.hbm [shape: f32[1,128], index: 4, kind: input, shape index: {}]
  %s5 = inlined_call_operand.hbm [shape: bf16[4,128,32], index: 5, kind: input, shape index: {}]
  %s6 = inlined_call_operand.hbm [shape: f32[4,1,32], index: 6, kind: input, shape index: {}]
  %s7 = inlined_call_operand.hbm [shape: bf16[128,256], index: 7, kind: input, shape index: {}]
  %s8 = inlined_call_operand.hbm [shape: f32[1,256], index: 8, kind: input, shape index: {}]
  %s9 = inlined_call_operand.hbm [shape: bf16[4,32,128], index: 9, kind: input, shape index: {}]
  %s10 = inlined_call_operand.hbm [shape: f32[1,128], index: 10, kind: input, shape index: {}]
  %s11 = inlined_call_operand.hbm [shape: bf16[128,512], index: 11, kind: input, shape index: {}]
  %s12 = inlined_call_operand.hbm [shape: f32[1,512], index: 12, kind: input, shape index: {}]
  %s13 = inlined_call_operand.hbm [shape: bf16[512,128], index: 13, kind: input, shape index: {}]
  %s14 = inlined_call_operand.hbm [shape: f32[1,128], index: 14, kind: input, shape index: {}]
  %s15 = inlined_call_operand.hbm [shape: f32[2,64,128], index: 15, kind: output, shape index: {}]
  %s16 = sld [smem:[#allocation0]]
  $region165: #{tpu_custom_call.1} parent=0
    _
  %s18 = ssub.s32 1, %s16
  %s19 = scalar_select 0, %s18, %s16
  $region1: #{tpu_custom_call.1} parent=0
    #allocation6 [shape = 'u8[65536]{0}', space=vmem, size = 0x10000, scoped, tag = 'input window, operand 0']
    #allocation7 [shape = 's32[2]{0}', space=sflag, size = 0x8, scoped, tag = 'scoped memory for tpu_custom_call.1']
    #allocation8 [shape = 's32[2]{0}', space=sflag, size = 0x8, scoped, tag = 'scoped memory for tpu_custom_call.1']
    #allocation9 [shape = 'u8[512]{0}', space=vmem, size = 0x400, scoped, tag = 'input window, operand 1, single buffered']
    #allocation10 [shape = 's32[1]{0}', space=sflag, size = 0x4, scoped, tag = 'scoped memory for tpu_custom_call.1']
    #allocation11 [shape = 'u8[512]{0}', space=vmem, size = 0x400, scoped, tag = 'input window, operand 2, single buffered']
    #allocation12 [shape = 'u8[512]{0}', space=vmem, size = 0x400, scoped, tag = 'input window, operand 3, single buffered']
    #allocation13 [shape = 's32[1]{0}', space=sflag, size = 0x4, scoped, tag = 'scoped memory for tpu_custom_call.1']
    #allocation14 [shape = 'u8[512]{0}', space=vmem, size = 0x400, scoped, tag = 'input window, operand 4, single buffered']
    #allocation15 [shape = 'u8[131072]{0}', space=vmem, size = 0x20000, scoped, tag = 'input window, operand 5, single buffered']
    #allocation16 [shape = 's32[1]{0}', space=sflag, size = 0x4, scoped, tag = 'scoped memory for tpu_custom_call.1']
    #allocation17 [shape = 'u8[2048]{0}', space=vmem, size = 0x800, scoped, tag = 'input window, operand 6, single buffered']
    #allocation18 [shape = 'u8[65536]{0}', space=vmem, size = 0x10000, scoped, tag = 'input window, operand 7, single buffered']
    #allocation19 [shape = 's32[1]{0}', space=sflag, size = 0x4, scoped, tag = 'scoped memory for tpu_custom_call.1']
    #allocation20 [shape = 'u8[1024]{0}', space=vmem, size = 0x400, scoped, tag = 'input window, operand 8, single buffered']
    #allocation21 [shape = 'u8[32768]{0}', space=vmem, size = 0x8000, scoped, tag = 'input window, operand 9, single buffered']
    #allocation22 [shape = 's32[1]{0}', space=sflag, size = 0x4, scoped, tag = 'scoped memory for tpu_custom_call.1']
    #allocation23 [shape = 'u8[512]{0}', space=vmem, size = 0x400, scoped, tag = 'input window, operand 10, single buffered']
    #allocation24 [shape = 'u8[131072]{0}', space=vmem, size = 0x20000, scoped, tag = 'input window, operand 11, single buffered']
    #allocation25 [shape = 's32[1]{0}', space=sflag, size = 0x4, scoped, tag = 'scoped memory for tpu_custom_call.1']
    #allocation26 [shape = 'u8[2048]{0}', space=vmem, size = 0x800, scoped, tag = 'input window, operand 12, single buffered']
    #allocation27 [shape = 'u8[131072]{0}', space=vmem, size = 0x20000, scoped, tag = 'input window, operand 13, single buffered']
    #allocation28 [shape = 's32[1]{0}', space=sflag, size = 0x4, scoped, tag = 'scoped memory for tpu_custom_call.1']
    #allocation29 [shape = 'u8[512]{0}', space=vmem, size = 0x400, scoped, tag = 'input window, operand 14, single buffered']
    #allocation30 [shape = 'u8[32768]{0}', space=vmem, size = 0x8000, scoped, tag = 'output window, operand 0']
    %20 = vsyncpa [#allocation7], 0
    %s21 = scalar_lea.sflag [#allocation7], 1
    %22 = vsyncpa %s21, 0
    %23 = vsyncpa [#allocation10], 0
    %24 = vsyncpa [#allocation13], 0
    %25 = vsyncpa [#allocation16], 0
    %26 = vsyncpa [#allocation19], 0
    %27 = vsyncpa [#allocation22], 0
    %28 = vsyncpa [#allocation25], 0
    %29 = vsyncpa [#allocation28], 0
    %30 = vsyncpa [#allocation8], 0
    %s31 = scalar_lea.sflag [#allocation8], 1
    %32 = vsyncpa %s31, 0
    loop: start=0, step=1, limit=18
    $region2: #{tpu_custom_call.1} parent=1 // loop_pre_header
      _
    $region3: #{tpu_custom_call.1} parent=1 // loop_header
      %s34 = sphi 0, %s38
      %p35 = scmp.ge.s32.totalorder %s34, 18
      %s41 = sphi 0, %s60
      %s42 = sphi 0, %s56
      %s43 = sphi 0, %s52
      %s44 = sphi 0, %s41
      %s45 = sphi 0, %s42
      %s46 = sphi 0, %s43
      %s47 = sphi 0, %s44
      %s48 = sphi 0, %s45
      %s49 = sphi 0, %s46
      %s63 = sphi 0, %s65
      %s66 = sphi 0, %s63
      %s67 = sphi 0, %s66
      %s83 = sphi 0, %s67
      %s87 = sphi 0, %s87
      %s89 = sphi 0, %s87
      %s90 = sphi 0, %s89
      %s104 = sphi 0, %s90
      %s108 = sphi 0, %s108
      %s110 = sphi 0, %s108
      %s111 = sphi 0, %s110
      %s125 = sphi 0, %s111
      %s129 = sphi 0, %s129
      %s131 = sphi 0, %s129
      %s132 = sphi 0, %s131
      %s146 = sphi 0, %s132
      %s150 = sphi 0, %s150
      %s152 = sphi 0, %s150
      %s153 = sphi 0, %s152
      %s167 = sphi 0, %s153
      %s171 = sphi 0, %s171
      %s173 = sphi 0, %s171
      %s174 = sphi 0, %s173
      %s188 = sphi 0, %s174
      %s192 = sphi 0, %s192
      %s194 = sphi 0, %s192
      %s195 = sphi 0, %s194
      %s209 = sphi 0, %s195
      %s213 = sphi 0, %s213
      %s215 = sphi 0, %s213
      %s216 = sphi 0, %s215
      %s230 = sphi 0, %s216
      %s234 = sphi 0, %s234
      %s236 = sphi 0, %s234
      %s237 = sphi 0, %s236
      %s251 = sphi 0, %s237
      %s255 = sphi 0, %s255
      %s257 = sphi 0, %s255
      %s258 = sphi 0, %s257
      %s272 = sphi 0, %s258
      %s276 = sphi 0, %s276
      %s278 = sphi 0, %s276
      %s279 = sphi 0, %s278
      %s293 = sphi 0, %s279
      %s297 = sphi 0, %s297
      %s299 = sphi 0, %s297
      %s300 = sphi 0, %s299
      %s314 = sphi 0, %s300
      %s318 = sphi 0, %s318
      %s320 = sphi 0, %s318
      %s321 = sphi 0, %s320
      %s335 = sphi 0, %s321
      %s339 = sphi 0, %s339
      %s341 = sphi 0, %s339
      %s342 = sphi 0, %s341
      %s356 = sphi 0, %s342
      %s360 = sphi 0, %s360
      %s362 = sphi 0, %s360
      %s363 = sphi 0, %s362
      %s377 = sphi 0, %s363
      %s385 = sphi 0, %s387
      %s388 = sphi 0, %s385
      %s389 = sphi 0, %s388
      %s405 = sphi 0, %s389
    $region4: #{tpu_custom_call.1} parent=1 // loop_header_branch
      %37 = sbr.rel (%p35) target = $region8
    $region5: #{tpu_custom_call.1} parent=1 // loop_body
      %s39 = ssub.s32 %s34, 1
      %s40 = ssub.s32 %s34, 2
      %s50 = sadd.s32 1, %s43
      %p51 = scmp.ge.s32.totalorder %s50, 4
      %s52 = scalar_select %p51, 0, %s50
      %s53 = sadd.s32 1, %s42
      %s54 = scalar_select %p51, %s53, %s42
      %p55 = scmp.ge.s32.totalorder %s54, 2
      %s56 = scalar_select %p55, 0, %s54
      %s57 = sadd.s32 1, %s41
      %s58 = scalar_select %p55, %s57, %s41
      %p59 = scmp.ge.s32.totalorder %s58, 2
      %s60 = scalar_select %p59, 0, %s58
      %s61 = ssub.s32 %s41, %s60
      %p62 = scmp.eq.s32.totalorder %s61, 0
      %s64 = sadd.s32 %s63, 1
      %s65 = scalar_select %p62, %s63, %s64
      %p68 = pneg %p62
      %p69 = scmp.eq.s32.totalorder %s34, 15
      %p70 = por %p68, %p69
      %p71 = scmp.ne.s32.totalorder %s63, %s66
      %p72 = scmp.eq.s32.totalorder %s34, 0
      %p73 = por %p71, %p72
      %p74 = scmp.ne.s32.totalorder %s63, %s66
      %p75 = scmp.eq.s32.totalorder %s39, 15
      %p76 = por %p74, %p75
      %p77 = scmp.ne.s32.totalorder %s66, %s67
      %p78 = scmp.eq.s32.totalorder %s39, 0
      %p79 = por %p77, %p78
      %p80 = scmp.ne.s32.totalorder %s66, %s67
      %p81 = scmp.eq.s32.totalorder %s40, 15
      %p82 = por %p80, %p81
      %p84 = scmp.ne.s32.totalorder %s67, %s83
      %p85 = scmp.eq.s32.totalorder %s40, 0
      %p86 = por %p84, %p85
      %s88 = sadd.s32 %s87, 1
      %p91 = scmp.eq.s32.totalorder %s34, 15
      %p92 = scmp.ne.s32.totalorder %s87, %s89
      %p93 = scmp.eq.s32.totalorder %s34, 0
      %p94 = por %p92, %p93
      %p95 = scmp.ne.s32.totalorder %s87, %s89
      %p96 = scmp.eq.s32.totalorder %s39, 15
      %p97 = por %p95, %p96
      %p98 = scmp.ne.s32.totalorder %s89, %s90
      %p99 = scmp.eq.s32.totalorder %s39, 0
      %p100 = por %p98, %p99
      %p101 = scmp.ne.s32.totalorder %s89, %s90
      %p102 = scmp.eq.s32.totalorder %s40, 15
      %p103 = por %p101, %p102
      %p105 = scmp.ne.s32.totalorder %s90, %s104
      %p106 = scmp.eq.s32.totalorder %s40, 0
      %p107 = por %p105, %p106
      %s109 = sadd.s32 %s108, 1
      %p112 = scmp.eq.s32.totalorder %s34, 15
      %p113 = scmp.ne.s32.totalorder %s108, %s110
      %p114 = scmp.eq.s32.totalorder %s34, 0
      %p115 = por %p113, %p114
      %p116 = scmp.ne.s32.totalorder %s108, %s110
      %p117 = scmp.eq.s32.totalorder %s39, 15
      %p118 = por %p116, %p117
      %p119 = scmp.ne.s32.totalorder %s110, %s111
      %p120 = scmp.eq.s32.totalorder %s39, 0
      %p121 = por %p119, %p120
      %p122 = scmp.ne.s32.totalorder %s110, %s111
      %p123 = scmp.eq.s32.totalorder %s40, 15
      %p124 = por %p122, %p123
      %p126 = scmp.ne.s32.totalorder %s111, %s125
      %p127 = scmp.eq.s32.totalorder %s40, 0
      %p128 = por %p126, %p127
      %s130 = sadd.s32 %s129, 1
      %p133 = scmp.eq.s32.totalorder %s34, 15
      %p134 = scmp.ne.s32.totalorder %s129, %s131
      %p135 = scmp.eq.s32.totalorder %s34, 0
      %p136 = por %p134, %p135
      %p137 = scmp.ne.s32.totalorder %s129, %s131
      %p138 = scmp.eq.s32.totalorder %s39, 15
      %p139 = por %p137, %p138
      %p140 = scmp.ne.s32.totalorder %s131, %s132
      %p141 = scmp.eq.s32.totalorder %s39, 0
      %p142 = por %p140, %p141
      %p143 = scmp.ne.s32.totalorder %s131, %s132
      %p144 = scmp.eq.s32.totalorder %s40, 15
      %p145 = por %p143, %p144
      %p147 = scmp.ne.s32.totalorder %s132, %s146
      %p148 = scmp.eq.s32.totalorder %s40, 0
      %p149 = por %p147, %p148
      %s151 = sadd.s32 %s150, 1
      %p154 = scmp.eq.s32.totalorder %s34, 15
      %p155 = scmp.ne.s32.totalorder %s150, %s152
      %p156 = scmp.eq.s32.totalorder %s34, 0
      %p157 = por %p155, %p156
      %p158 = scmp.ne.s32.totalorder %s150, %s152
      %p159 = scmp.eq.s32.totalorder %s39, 15
      %p160 = por %p158, %p159
      %p161 = scmp.ne.s32.totalorder %s152, %s153
      %p162 = scmp.eq.s32.totalorder %s39, 0
      %p163 = por %p161, %p162
      %p164 = scmp.ne.s32.totalorder %s152, %s153
      %p165 = scmp.eq.s32.totalorder %s40, 15
      %p166 = por %p164, %p165
      %p168 = scmp.ne.s32.totalorder %s153, %s167
      %p169 = scmp.eq.s32.totalorder %s40, 0
      %p170 = por %p168, %p169
      %s172 = sadd.s32 %s171, 1
      %p175 = scmp.eq.s32.totalorder %s34, 15
      %p176 = scmp.ne.s32.totalorder %s171, %s173
      %p177 = scmp.eq.s32.totalorder %s34, 0
      %p178 = por %p176, %p177
      %p179 = scmp.ne.s32.totalorder %s171, %s173
      %p180 = scmp.eq.s32.totalorder %s39, 15
      %p181 = por %p179, %p180
      %p182 = scmp.ne.s32.totalorder %s173, %s174
      %p183 = scmp.eq.s32.totalorder %s39, 0
      %p184 = por %p182, %p183
      %p185 = scmp.ne.s32.totalorder %s173, %s174
      %p186 = scmp.eq.s32.totalorder %s40, 15
      %p187 = por %p185, %p186
      %p189 = scmp.ne.s32.totalorder %s174, %s188
      %p190 = scmp.eq.s32.totalorder %s40, 0
      %p191 = por %p189, %p190
      %s193 = sadd.s32 %s192, 1
      %p196 = scmp.eq.s32.totalorder %s34, 15
      %p197 = scmp.ne.s32.totalorder %s192, %s194
      %p198 = scmp.eq.s32.totalorder %s34, 0
      %p199 = por %p197, %p198
      %p200 = scmp.ne.s32.totalorder %s192, %s194
      %p201 = scmp.eq.s32.totalorder %s39, 15
      %p202 = por %p200, %p201
      %p203 = scmp.ne.s32.totalorder %s194, %s195
      %p204 = scmp.eq.s32.totalorder %s39, 0
      %p205 = por %p203, %p204
      %p206 = scmp.ne.s32.totalorder %s194, %s195
      %p207 = scmp.eq.s32.totalorder %s40, 15
      %p208 = por %p206, %p207
      %p210 = scmp.ne.s32.totalorder %s195, %s209
      %p211 = scmp.eq.s32.totalorder %s40, 0
      %p212 = por %p210, %p211
      %s214 = sadd.s32 %s213, 1
      %p217 = scmp.eq.s32.totalorder %s34, 15
      %p218 = scmp.ne.s32.totalorder %s213, %s215
      %p219 = scmp.eq.s32.totalorder %s34, 0
      %p220 = por %p218, %p219
      %p221 = scmp.ne.s32.totalorder %s213, %s215
      %p222 = scmp.eq.s32.totalorder %s39, 15
      %p223 = por %p221, %p222
      %p224 = scmp.ne.s32.totalorder %s215, %s216
      %p225 = scmp.eq.s32.totalorder %s39, 0
      %p226 = por %p224, %p225
      %p227 = scmp.ne.s32.totalorder %s215, %s216
      %p228 = scmp.eq.s32.totalorder %s40, 15
      %p229 = por %p227, %p228
      %p231 = scmp.ne.s32.totalorder %s216, %s230
      %p232 = scmp.eq.s32.totalorder %s40, 0
      %p233 = por %p231, %p232
      %s235 = sadd.s32 %s234, 1
      %p238 = scmp.eq.s32.totalorder %s34, 15
      %p239 = scmp.ne.s32.totalorder %s234, %s236
      %p240 = scmp.eq.s32.totalorder %s34, 0
      %p241 = por %p239, %p240
      %p242 = scmp.ne.s32.totalorder %s234, %s236
      %p243 = scmp.eq.s32.totalorder %s39, 15
      %p244 = por %p242, %p243
      %p245 = scmp.ne.s32.totalorder %s236, %s237
      %p246 = scmp.eq.s32.totalorder %s39, 0
      %p247 = por %p245, %p246
      %p248 = scmp.ne.s32.totalorder %s236, %s237
      %p249 = scmp.eq.s32.totalorder %s40, 15
      %p250 = por %p248, %p249
      %p252 = scmp.ne.s32.totalorder %s237, %s251
      %p253 = scmp.eq.s32.totalorder %s40, 0
      %p254 = por %p252, %p253
      %s256 = sadd.s32 %s255, 1
      %p259 = scmp.eq.s32.totalorder %s34, 15
      %p260 = scmp.ne.s32.totalorder %s255, %s257
      %p261 = scmp.eq.s32.totalorder %s34, 0
      %p262 = por %p260, %p261
      %p263 = scmp.ne.s32.totalorder %s255, %s257
      %p264 = scmp.eq.s32.totalorder %s39, 15
      %p265 = por %p263, %p264
      %p266 = scmp.ne.s32.totalorder %s257, %s258
      %p267 = scmp.eq.s32.totalorder %s39, 0
      %p268 = por %p266, %p267
      %p269 = scmp.ne.s32.totalorder %s257, %s258
      %p270 = scmp.eq.s32.totalorder %s40, 15
      %p271 = por %p269, %p270
      %p273 = scmp.ne.s32.totalorder %s258, %s272
      %p274 = scmp.eq.s32.totalorder %s40, 0
      %p275 = por %p273, %p274
      %s277 = sadd.s32 %s276, 1
      %p280 = scmp.eq.s32.totalorder %s34, 15
      %p281 = scmp.ne.s32.totalorder %s276, %s278
      %p282 = scmp.eq.s32.totalorder %s34, 0
      %p283 = por %p281, %p282
      %p284 = scmp.ne.s32.totalorder %s276, %s278
      %p285 = scmp.eq.s32.totalorder %s39, 15
      %p286 = por %p284, %p285
      %p287 = scmp.ne.s32.totalorder %s278, %s279
      %p288 = scmp.eq.s32.totalorder %s39, 0
      %p289 = por %p287, %p288
      %p290 = scmp.ne.s32.totalorder %s278, %s279
      %p291 = scmp.eq.s32.totalorder %s40, 15
      %p292 = por %p290, %p291
      %p294 = scmp.ne.s32.totalorder %s279, %s293
      %p295 = scmp.eq.s32.totalorder %s40, 0
      %p296 = por %p294, %p295
      %s298 = sadd.s32 %s297, 1
      %p301 = scmp.eq.s32.totalorder %s34, 15
      %p302 = scmp.ne.s32.totalorder %s297, %s299
      %p303 = scmp.eq.s32.totalorder %s34, 0
      %p304 = por %p302, %p303
      %p305 = scmp.ne.s32.totalorder %s297, %s299
      %p306 = scmp.eq.s32.totalorder %s39, 15
      %p307 = por %p305, %p306
      %p308 = scmp.ne.s32.totalorder %s299, %s300
      %p309 = scmp.eq.s32.totalorder %s39, 0
      %p310 = por %p308, %p309
      %p311 = scmp.ne.s32.totalorder %s299, %s300
      %p312 = scmp.eq.s32.totalorder %s40, 15
      %p313 = por %p311, %p312
      %p315 = scmp.ne.s32.totalorder %s300, %s314
      %p316 = scmp.eq.s32.totalorder %s40, 0
      %p317 = por %p315, %p316
      %s319 = sadd.s32 %s318, 1
      %p322 = scmp.eq.s32.totalorder %s34, 15
      %p323 = scmp.ne.s32.totalorder %s318, %s320
      %p324 = scmp.eq.s32.totalorder %s34, 0
      %p325 = por %p323, %p324
      %p326 = scmp.ne.s32.totalorder %s318, %s320
      %p327 = scmp.eq.s32.totalorder %s39, 15
      %p328 = por %p326, %p327
      %p329 = scmp.ne.s32.totalorder %s320, %s321
      %p330 = scmp.eq.s32.totalorder %s39, 0
      %p331 = por %p329, %p330
      %p332 = scmp.ne.s32.totalorder %s320, %s321
      %p333 = scmp.eq.s32.totalorder %s40, 15
      %p334 = por %p332, %p333
      %p336 = scmp.ne.s32.totalorder %s321, %s335
      %p337 = scmp.eq.s32.totalorder %s40, 0
      %p338 = por %p336, %p337
      %s340 = sadd.s32 %s339, 1
      %p343 = scmp.eq.s32.totalorder %s34, 15
      %p344 = scmp.ne.s32.totalorder %s339, %s341
      %p345 = scmp.eq.s32.totalorder %s34, 0
      %p346 = por %p344, %p345
      %p347 = scmp.ne.s32.totalorder %s339, %s341
      %p348 = scmp.eq.s32.totalorder %s39, 15
      %p349 = por %p347, %p348
      %p350 = scmp.ne.s32.totalorder %s341, %s342
      %p351 = scmp.eq.s32.totalorder %s39, 0
      %p352 = por %p350, %p351
      %p353 = scmp.ne.s32.totalorder %s341, %s342
      %p354 = scmp.eq.s32.totalorder %s40, 15
      %p355 = por %p353, %p354
      %p357 = scmp.ne.s32.totalorder %s342, %s356
      %p358 = scmp.eq.s32.totalorder %s40, 0
      %p359 = por %p357, %p358
      %s361 = sadd.s32 %s360, 1
      %p364 = scmp.eq.s32.totalorder %s34, 15
      %p365 = scmp.ne.s32.totalorder %s360, %s362
      %p366 = scmp.eq.s32.totalorder %s34, 0
      %p367 = por %p365, %p366
      %p368 = scmp.ne.s32.totalorder %s360, %s362
      %p369 = scmp.eq.s32.totalorder %s39, 15
      %p370 = por %p368, %p369
      %p371 = scmp.ne.s32.totalorder %s362, %s363
      %p372 = scmp.eq.s32.totalorder %s39, 0
      %p373 = por %p371, %p372
      %p374 = scmp.ne.s32.totalorder %s362, %s363
      %p375 = scmp.eq.s32.totalorder %s40, 15
      %p376 = por %p374, %p375
      %p378 = scmp.ne.s32.totalorder %s363, %s377
      %p379 = scmp.eq.s32.totalorder %s40, 0
      %p380 = por %p378, %p379
      %s381 = ssub.s32 %s41, %s60
      %s382 = ssub.s32 %s42, %s56
      %s383 = sor.u32 %s381, %s382
      %p384 = scmp.eq.s32.totalorder %s383, 0
      %s386 = sadd.s32 %s385, 1
      %s387 = scalar_select %p384, %s385, %s386
      %p390 = pneg %p384
      %p391 = scmp.eq.s32.totalorder %s34, 15
      %p392 = por %p390, %p391
      %p393 = scmp.ne.s32.totalorder %s385, %s388
      %p394 = scmp.eq.s32.totalorder %s34, 0
      %p395 = por %p393, %p394
      %p396 = scmp.ne.s32.totalorder %s385, %s388
      %p397 = scmp.eq.s32.totalorder %s39, 15
      %p398 = por %p396, %p397
      %p399 = scmp.ne.s32.totalorder %s388, %s389
      %p400 = scmp.eq.s32.totalorder %s39, 0
      %p401 = por %p399, %p400
      %p402 = scmp.ne.s32.totalorder %s388, %s389
      %p403 = scmp.eq.s32.totalorder %s40, 15
      %p404 = por %p402, %p403
      %p406 = scmp.ne.s32.totalorder %s389, %s405
      %p407 = scmp.eq.s32.totalorder %s40, 0
      %p408 = por %p406, %p407
      %p409 = scmp.le.s32.totalorder 1, %s34
      %p410 = scmp.lt.s32.totalorder %s34, 17
      %p411 = pnand %p409, %p410
      %p412 = pneg %p411
      // Predicated region
      $region9: #{tpu_custom_call.1} parent=5 // pred_check
        _
      $region10: #{tpu_custom_call.1} parent=5 // pred_check_branch
        %414 = sbr.rel (%p411) target = $region12
      $region11: #{tpu_custom_call.1} parent=5 // pred_region
        %s415 = ssub.s32 %s34, 1
        // Predicated region
        $region13: #{tpu_custom_call.1} parent=11 // pred_check
          %p416 = pneg %p100
        $region14: #{tpu_custom_call.1} parent=11 // pred_check_branch
          %418 = sbr.rel (%p416) target = $region16
        $region15: #{tpu_custom_call.1} parent=11 // pred_region
          %s420 = ssub.s32 16, 16
          %421 = vsyncadd [#allocation10], %s420
          %s423 = sshll.u32 [#allocation9], 4
          %s424 = int_to_ptr.vmem [resolvable:$true] %s423
          %426 = dma.hbm_to_vmem [thread:$0]  %s1, 16, %s424, [#allocation10]
        $region16: #{tpu_custom_call.1} parent=11 // pred_fallthru
          _
        // Predicated region
        $region17: #{tpu_custom_call.1} parent=11 // pred_check
          %p427 = pneg %p121
        $region18: #{tpu_custom_call.1} parent=11 // pred_check_branch
          %429 = sbr.rel (%p427) target = $region20
        $region19: #{tpu_custom_call.1} parent=11 // pred_region
          %s431 = ssub.s32 16, 16
          %432 = vsyncadd [#allocation10], %s431
          %s434 = sshll.u32 [#allocation11], 4
          %s435 = int_to_ptr.vmem [resolvable:$true] %s434
          %437 = dma.hbm_to_vmem [thread:$0]  %s2, 16, %s435, [#allocation10]
        $region20: #{tpu_custom_call.1} parent=11 // pred_fallthru
          _
        // Predicated region
        $region21: #{tpu_custom_call.1} parent=11 // pred_check
          %p438 = pneg %p142
        $region22: #{tpu_custom_call.1} parent=11 // pred_check_branch
          %440 = sbr.rel (%p438) target = $region24
        $region23: #{tpu_custom_call.1} parent=11 // pred_region
          %s442 = ssub.s32 16, 16
          %443 = vsyncadd [#allocation13], %s442
          %s445 = sshll.u32 [#allocation12], 4
          %s446 = int_to_ptr.vmem [resolvable:$true] %s445
          %448 = dma.hbm_to_vmem [thread:$0]  %s3, 16, %s446, [#allocation13]
        $region24: #{tpu_custom_call.1} parent=11 // pred_fallthru
          _
        // Predicated region
        $region25: #{tpu_custom_call.1} parent=11 // pred_check
          %p449 = pneg %p163
        $region26: #{tpu_custom_call.1} parent=11 // pred_check_branch
          %451 = sbr.rel (%p449) target = $region28
        $region27: #{tpu_custom_call.1} parent=11 // pred_region
          %s453 = ssub.s32 16, 16
          %454 = vsyncadd [#allocation13], %s453
          %s456 = sshll.u32 [#allocation14], 4
          %s457 = int_to_ptr.vmem [resolvable:$true] %s456
          %459 = dma.hbm_to_vmem [thread:$0]  %s4, 16, %s457, [#allocation13]
        $region28: #{tpu_custom_call.1} parent=11 // pred_fallthru
          _
        // Predicated region
        $region29: #{tpu_custom_call.1} parent=11 // pred_check
          %p460 = pneg %p184
        $region30: #{tpu_custom_call.1} parent=11 // pred_check_branch
          %462 = sbr.rel (%p460) target = $region32
        $region31: #{tpu_custom_call.1} parent=11 // pred_region
          %s464 = ssub.s32 4096, 4096
          %465 = vsyncadd [#allocation16], %s464
          %s466 = sshll.u32 [#allocation15], 4
          %s467 = int_to_ptr.vmem [resolvable:$true] %s466
          %472 = dma.hbm_to_vmem [thread:$0]  %s5, 4096, %s467, [#allocation16], 64, 64, 4
        $region32: #{tpu_custom_call.1} parent=11 // pred_fallthru
          _
        // Predicated region
        $region33: #{tpu_custom_call.1} parent=11 // pred_check
          %p473 = pneg %p205
        $region34: #{tpu_custom_call.1} parent=11 // pred_check_branch
          %475 = sbr.rel (%p473) target = $region36
        $region35: #{tpu_custom_call.1} parent=11 // pred_region
          %s477 = ssub.s32 64, 64
          %478 = vsyncadd [#allocation16], %s477
          %s479 = sshll.u32 [#allocation17], 4
          %s480 = int_to_ptr.vmem [resolvable:$true] %s479
          %485 = dma.hbm_to_vmem [thread:$0]  %s6, 64, %s480, [#allocation16], 16, 16, 1
        $region36: #{tpu_custom_call.1} parent=11 // pred_fallthru
          _
        // Predicated region
        $region37: #{tpu_custom_call.1} parent=11 // pred_check
          %p486 = pneg %p226
        $region38: #{tpu_custom_call.1} parent=11 // pred_check_branch
          %488 = sbr.rel (%p486) target = $region40
        $region39: #{tpu_custom_call.1} parent=11 // pred_region
          %s490 = ssub.s32 2048, 2048
          %491 = vsyncadd [#allocation19], %s490
          %s492 = sshll.u32 [#allocation18], 4
          %s493 = int_to_ptr.vmem [resolvable:$true] %s492
          %498 = dma.hbm_to_vmem [thread:$0]  %s7, 2048, %s493, [#allocation19], 128, 128, 8
        $region40: #{tpu_custom_call.1} parent=11 // pred_fallthru
          _
        // Predicated region
        $region41: #{tpu_custom_call.1} parent=11 // pred_check
          %p499 = pneg %p247
        $region42: #{tpu_custom_call.1} parent=11 // pred_check_branch
          %501 = sbr.rel (%p499) target = $region44
        $region43: #{tpu_custom_call.1} parent=11 // pred_region
          %s503 = ssub.s32 32, 32
          %504 = vsyncadd [#allocation19], %s503
          %s506 = sshll.u32 [#allocation20], 4
          %s507 = int_to_ptr.vmem [resolvable:$true] %s506
          %509 = dma.hbm_to_vmem [thread:$0]  %s8, 32, %s507, [#allocation19]
        $region44: #{tpu_custom_call.1} parent=11 // pred_fallthru
          _
        // Predicated region
        $region45: #{tpu_custom_call.1} parent=11 // pred_check
          %p510 = pneg %p268
        $region46: #{tpu_custom_call.1} parent=11 // pred_check_branch
          %512 = sbr.rel (%p510) target = $region48
        $region47: #{tpu_custom_call.1} parent=11 // pred_region
          %s514 = ssub.s32 1024, 1024
          %515 = vsyncadd [#allocation22], %s514
          %s516 = sshll.u32 [#allocation21], 4
          %s517 = int_to_ptr.vmem [resolvable:$true] %s516
          %522 = dma.hbm_to_vmem [thread:$0]  %s9, 1024, %s517, [#allocation22], 64, 64, 4
        $region48: #{tpu_custom_call.1} parent=11 // pred_fallthru
          _
        // Predicated region
        $region49: #{tpu_custom_call.1} parent=11 // pred_check
          %p523 = pneg %p289
        $region50: #{tpu_custom_call.1} parent=11 // pred_check_branch
          %525 = sbr.rel (%p523) target = $region52
        $region51: #{tpu_custom_call.1} parent=11 // pred_region
          %s527 = ssub.s32 16, 16
          %528 = vsyncadd [#allocation22], %s527
          %s530 = sshll.u32 [#allocation23], 4
          %s531 = int_to_ptr.vmem [resolvable:$true] %s530
          %533 = dma.hbm_to_vmem [thread:$0]  %s10, 16, %s531, [#allocation22]
        $region52: #{tpu_custom_call.1} parent=11 // pred_fallthru
          _
        // Predicated region
        $region53: #{tpu_custom_call.1} parent=11 // pred_check
          %p534 = pneg %p310
        $region54: #{tpu_custom_call.1} parent=11 // pred_check_branch
          %536 = sbr.rel (%p534) target = $region56
        $region55: #{tpu_custom_call.1} parent=11 // pred_region
          %s538 = ssub.s32 4096, 4096
          %539 = vsyncadd [#allocation25], %s538
          %s540 = sshll.u32 [#allocation24], 4
          %s541 = int_to_ptr.vmem [resolvable:$true] %s540
          %546 = dma.hbm_to_vmem [thread:$0]  %s11, 4096, %s541, [#allocation25], 256, 256, 16
        $region56: #{tpu_custom_call.1} parent=11 // pred_fallthru
          _
        // Predicated region
        $region57: #{tpu_custom_call.1} parent=11 // pred_check
          %p547 = pneg %p331
        $region58: #{tpu_custom_call.1} parent=11 // pred_check_branch
          %549 = sbr.rel (%p547) target = $region60
        $region59: #{tpu_custom_call.1} parent=11 // pred_region
          %s551 = ssub.s32 64, 64
          %552 = vsyncadd [#allocation25], %s551
          %s554 = sshll.u32 [#allocation26], 4
          %s555 = int_to_ptr.vmem [resolvable:$true] %s554
          %557 = dma.hbm_to_vmem [thread:$0]  %s12, 64, %s555, [#allocation25]
        $region60: #{tpu_custom_call.1} parent=11 // pred_fallthru
          _
        // Predicated region
        $region61: #{tpu_custom_call.1} parent=11 // pred_check
          %p558 = pneg %p352
        $region62: #{tpu_custom_call.1} parent=11 // pred_check_branch
          %560 = sbr.rel (%p558) target = $region64
        $region63: #{tpu_custom_call.1} parent=11 // pred_region
          %s562 = ssub.s32 4096, 4096
          %563 = vsyncadd [#allocation28], %s562
          %s564 = sshll.u32 [#allocation27], 4
          %s565 = int_to_ptr.vmem [resolvable:$true] %s564
          %570 = dma.hbm_to_vmem [thread:$0]  %s13, 4096, %s565, [#allocation28], 64, 64, 4
        $region64: #{tpu_custom_call.1} parent=11 // pred_fallthru
          _
        // Predicated region
        $region65: #{tpu_custom_call.1} parent=11 // pred_check
          %p571 = pneg %p373
        $region66: #{tpu_custom_call.1} parent=11 // pred_check_branch
          %573 = sbr.rel (%p571) target = $region68
        $region67: #{tpu_custom_call.1} parent=11 // pred_region
          %s575 = ssub.s32 16, 16
          %576 = vsyncadd [#allocation28], %s575
          %s578 = sshll.u32 [#allocation29], 4
          %s579 = int_to_ptr.vmem [resolvable:$true] %s578
          %581 = dma.hbm_to_vmem [thread:$0]  %s14, 16, %s579, [#allocation28]
        $region68: #{tpu_custom_call.1} parent=11 // pred_fallthru
          _
      $region12: #{tpu_custom_call.1} parent=5 // pred_fallthru
        _
      %p582 = scmp.lt.s32.totalorder %s34, 16
      // Predicated region
      $region69: #{tpu_custom_call.1} parent=5 // pred_check
        %p583 = pneg %p582
      $region70: #{tpu_custom_call.1} parent=5 // pred_check_branch
        %585 = sbr.rel (%p583) target = $region72
      $region71: #{tpu_custom_call.1} parent=5 // pred_region
        // Predicated region
        $region73: #{tpu_custom_call.1} parent=71 // pred_check
          %p586 = pneg %p73
        $region74: #{tpu_custom_call.1} parent=71 // pred_check_branch
          %588 = sbr.rel (%p586) target = $region76
        $region75: #{tpu_custom_call.1} parent=71 // pred_region
          %s589 = sand.u32 %s63, 1
          %s590 = scalar_lea.sflag [#allocation7], %s589
          %s591 = sand.u32 %s63, 1
          %s592 = smul.addr %s591, 64
          %s593 = scalar_lea.vmem [#allocation6], %s592
          %s595 = ssub.s32 1024, 1024
          %596 = vsyncadd %s590, %s595
          %s597 = smul.addr %s41, 8
          %s598 = smul.addr %s597, 128
          %s599 = scalar_lea.hbm %s0, %s598
          %s600 = sshll.u32 %s593, 4
          %s601 = int_to_ptr.vmem [resolvable:$true] %s600
          %606 = dma.hbm_to_vmem [thread:$0]  %s599, 1024, %s601, %s590, 128, 128, 8
        $region76: #{tpu_custom_call.1} parent=71 // pred_fallthru
          _
      $region72: #{tpu_custom_call.1} parent=5 // pred_fallthru
        _
      %p607 = scmp.le.s32.totalorder 1, %s34
      %p608 = scmp.lt.s32.totalorder %s34, 17
      %p609 = pnand %p607, %p608
      %p610 = pneg %p609
      // Predicated region
      $region77: #{tpu_custom_call.1} parent=5 // pred_check
        _
      $region78: #{tpu_custom_call.1} parent=5 // pred_check_branch
        %612 = sbr.rel (%p609) target = $region80
      $region79: #{tpu_custom_call.1} parent=5 // pred_region
        %s613 = ssub.s32 %s34, 1
        %s614 = sand.u32 %s66, 1
        %s615 = scalar_lea.sflag [#allocation7], %s614
        %s616 = sand.u32 %s66, 1
        %s617 = smul.addr %s616, 64
        %s618 = scalar_lea.vmem [#allocation6], %s617
        // Predicated region
        $region81: #{tpu_custom_call.1} parent=79 // pred_check
          %p619 = pneg %p79
        $region82: #{tpu_custom_call.1} parent=79 // pred_check_branch
          %621 = sbr.rel (%p619) target = $region84
        $region83: #{tpu_custom_call.1} parent=79 // pred_region
          %622 = dma.done %s615, 1024
        $region84: #{tpu_custom_call.1} parent=79 // pred_fallthru
          _
        // Predicated region
        $region85: #{tpu_custom_call.1} parent=79 // pred_check
          %p623 = pneg %p100
        $region86: #{tpu_custom_call.1} parent=79 // pred_check_branch
          %625 = sbr.rel (%p623) target = $region88
        $region87: #{tpu_custom_call.1} parent=79 // pred_region
          %626 = dma.done [#allocation10], 16
        $region88: #{tpu_custom_call.1} parent=79 // pred_fallthru
          _
        // Predicated region
        $region89: #{tpu_custom_call.1} parent=79 // pred_check
          %p627 = pneg %p121
        $region90: #{tpu_custom_call.1} parent=79 // pred_check_branch
          %629 = sbr.rel (%p627) target = $region92
        $region91: #{tpu_custom_call.1} parent=79 // pred_region
          %630 = dma.done [#allocation10], 16
        $region92: #{tpu_custom_call.1} parent=79 // pred_fallthru
          _
        // Predicated region
        $region93: #{tpu_custom_call.1} parent=79 // pred_check
          %p631 = pneg %p142
        $region94: #{tpu_custom_call.1} parent=79 // pred_check_branch
          %633 = sbr.rel (%p631) target = $region96
        $region95: #{tpu_custom_call.1} parent=79 // pred_region
          %634 = dma.done [#allocation13], 16
        $region96: #{tpu_custom_call.1} parent=79 // pred_fallthru
          _
        // Predicated region
        $region97: #{tpu_custom_call.1} parent=79 // pred_check
          %p635 = pneg %p163
        $region98: #{tpu_custom_call.1} parent=79 // pred_check_branch
          %637 = sbr.rel (%p635) target = $region100
        $region99: #{tpu_custom_call.1} parent=79 // pred_region
          %638 = dma.done [#allocation13], 16
        $region100: #{tpu_custom_call.1} parent=79 // pred_fallthru
          _
        // Predicated region
        $region101: #{tpu_custom_call.1} parent=79 // pred_check
          %p639 = pneg %p184
        $region102: #{tpu_custom_call.1} parent=79 // pred_check_branch
          %641 = sbr.rel (%p639) target = $region104
        $region103: #{tpu_custom_call.1} parent=79 // pred_region
          %642 = dma.done [#allocation16], 4096
        $region104: #{tpu_custom_call.1} parent=79 // pred_fallthru
          _
        // Predicated region
        $region105: #{tpu_custom_call.1} parent=79 // pred_check
          %p643 = pneg %p205
        $region106: #{tpu_custom_call.1} parent=79 // pred_check_branch
          %645 = sbr.rel (%p643) target = $region108
        $region107: #{tpu_custom_call.1} parent=79 // pred_region
          %646 = dma.done [#allocation16], 64
        $region108: #{tpu_custom_call.1} parent=79 // pred_fallthru
          _
        // Predicated region
        $region109: #{tpu_custom_call.1} parent=79 // pred_check
          %p647 = pneg %p226
        $region110: #{tpu_custom_call.1} parent=79 // pred_check_branch
          %649 = sbr.rel (%p647) target = $region112
        $region111: #{tpu_custom_call.1} parent=79 // pred_region
          %650 = dma.done [#allocation19], 2048
        $region112: #{tpu_custom_call.1} parent=79 // pred_fallthru
          _
        // Predicated region
        $region113: #{tpu_custom_call.1} parent=79 // pred_check
          %p651 = pneg %p247
        $region114: #{tpu_custom_call.1} parent=79 // pred_check_branch
          %653 = sbr.rel (%p651) target = $region116
        $region115: #{tpu_custom_call.1} parent=79 // pred_region
          %654 = dma.done [#allocation19], 32
        $region116: #{tpu_custom_call.1} parent=79 // pred_fallthru
          _
        // Predicated region
        $region117: #{tpu_custom_call.1} parent=79 // pred_check
          %p655 = pneg %p268
        $region118: #{tpu_custom_call.1} parent=79 // pred_check_branch
          %657 = sbr.rel (%p655) target = $region120
        $region119: #{tpu_custom_call.1} parent=79 // pred_region
          %658 = dma.done [#allocation22], 1024
        $region120: #{tpu_custom_call.1} parent=79 // pred_fallthru
          _
        // Predicated region
        $region121: #{tpu_custom_call.1} parent=79 // pred_check
          %p659 = pneg %p289
        $region122: #{tpu_custom_call.1} parent=79 // pred_check_branch
          %661 = sbr.rel (%p659) target = $region124
        $region123: #{tpu_custom_call.1} parent=79 // pred_region
          %662 = dma.done [#allocation22], 16
        $region124: #{tpu_custom_call.1} parent=79 // pred_fallthru
          _
        // Predicated region
        $region125: #{tpu_custom_call.1} parent=79 // pred_check
          %p663 = pneg %p310
        $region126: #{tpu_custom_call.1} parent=79 // pred_check_branch
          %665 = sbr.rel (%p663) target = $region128
        $region127: #{tpu_custom_call.1} parent=79 // pred_region
          %666 = dma.done [#allocation25], 4096
        $region128: #{tpu_custom_call.1} parent=79 // pred_fallthru
          _
        // Predicated region
        $region129: #{tpu_custom_call.1} parent=79 // pred_check
          %p667 = pneg %p331
        $region130: #{tpu_custom_call.1} parent=79 // pred_check_branch
          %669 = sbr.rel (%p667) target = $region132
        $region131: #{tpu_custom_call.1} parent=79 // pred_region
          %670 = dma.done [#allocation25], 64
        $region132: #{tpu_custom_call.1} parent=79 // pred_fallthru
          _
        // Predicated region
        $region133: #{tpu_custom_call.1} parent=79 // pred_check
          %p671 = pneg %p352
        $region134: #{tpu_custom_call.1} parent=79 // pred_check_branch
          %673 = sbr.rel (%p671) target = $region136
        $region135: #{tpu_custom_call.1} parent=79 // pred_region
          %674 = dma.done [#allocation28], 4096
        $region136: #{tpu_custom_call.1} parent=79 // pred_fallthru
          _
        // Predicated region
        $region137: #{tpu_custom_call.1} parent=79 // pred_check
          %p675 = pneg %p373
        $region138: #{tpu_custom_call.1} parent=79 // pred_check_branch
          %677 = sbr.rel (%p675) target = $region140
        $region139: #{tpu_custom_call.1} parent=79 // pred_region
          %678 = dma.done [#allocation28], 16
        $region140: #{tpu_custom_call.1} parent=79 // pred_fallthru
          _
        %s679 = sand.u32 %s66, 1
        %s680 = scalar_lea.sflag [#allocation7], %s679
        %s681 = sand.u32 %s66, 1
        %s682 = smul.addr %s681, 64
        %s683 = scalar_lea.vmem [#allocation6], %s682
        %p684 = pneg %p79
        %p685 = pneg %p76
        %p686 = pneg %p100
        %p687 = pneg %p97
        %p688 = pneg %p121
        %p689 = pneg %p118
        %p690 = pneg %p142
        %p691 = pneg %p139
        %p692 = pneg %p163
        %p693 = pneg %p160
        %p694 = pneg %p184
        %p695 = pneg %p181
        %p696 = pneg %p205
        %p697 = pneg %p202
        %p698 = pneg %p226
        %p699 = pneg %p223
        %p700 = pneg %p247
        %p701 = pneg %p244
        %p702 = pneg %p268
        %p703 = pneg %p265
        %p704 = pneg %p289
        %p705 = pneg %p286
        %p706 = pneg %p310
        %p707 = pneg %p307
        %p708 = pneg %p331
        %p709 = pneg %p328
        %p710 = pneg %p352
        %p711 = pneg %p349
        %p712 = pneg %p373
        %p713 = pneg %p370
        %p714 = pneg %p401
        %p715 = pneg %p398
        %s716 = sand.u32 %s388, 1
        %s717 = scalar_lea.sflag [#allocation8], %s716
        %s718 = sand.u32 %s388, 1
        %s719 = smul.addr %s718, 32
        %s720 = scalar_lea.vmem [#allocation30], %s719
        %s721 = smul.u32 4, %s45
        %v723 = vld [vmem:[#allocation9] sm:$0x1]
        %v724 = vld [vmem:[#allocation11] sm:$0x1]
        %s725 = smul.u32 %s45, 32
        %p726 = scmp.eq.s32.totalorder %s45, 0
        %p727 = scmp.eq.s32.totalorder %s46, 0
        %p728 = pnand %p726, %p727
        %p729 = pneg %p728
        // Predicated region
        $region141: #{tpu_custom_call.1} parent=79 // pred_check
          _
        $region142: #{tpu_custom_call.1} parent=79 // pred_check_branch
          %731 = sbr.rel (%p728) target = $region144
        $region143: #{tpu_custom_call.1} parent=79 // pred_region
          %v732 = vld [vmem:[%s618] sm:$0xff]
          %v733 = vld [vmem:[%s618 + $0x8] sm:$0xff]
          %v734 = vld [vmem:[%s618 + $0x10] sm:$0xff]
          %v735 = vld [vmem:[%s618 + $0x18] sm:$0xff]
          %v736 = vld [vmem:[%s618 + $0x20] sm:$0xff]
          %v737 = vld [vmem:[%s618 + $0x28] sm:$0xff]
          %v738 = vld [vmem:[%s618 + $0x30] sm:$0xff]
          %v739 = vld [vmem:[%s618 + $0x38] sm:$0xff]
          %740 = vadd.xlane.f32.xlu0 %v732
          %v741 = vpop.xlane.xlu0 %740
          %742 = vadd.xlane.f32.xlu0 %v733
          %v743 = vpop.xlane.xlu0 %742
          %744 = vadd.xlane.f32.xlu0 %v734
          %v745 = vpop.xlane.xlu0 %744
          %746 = vadd.xlane.f32.xlu0 %v735
          %v747 = vpop.xlane.xlu0 %746
          %748 = vadd.xlane.f32.xlu0 %v736
          %v749 = vpop.xlane.xlu0 %748
          %750 = vadd.xlane.f32.xlu0 %v737
          %v751 = vpop.xlane.xlu0 %750
          %752 = vadd.xlane.f32.xlu0 %v738
          %v753 = vpop.xlane.xlu0 %752
          %754 = vadd.xlane.f32.xlu0 %v739
          %v755 = vpop.xlane.xlu0 %754
          %v756 = vrcp.pop 128.0
          %v757 = vmul.f32 %v741, %v756
          %v758 = vmul.f32 %v743, %v756
          %v759 = vmul.f32 %v745, %v756
          %v760 = vmul.f32 %v747, %v756
          %v761 = vmul.f32 %v749, %v756
          %v762 = vmul.f32 %v751, %v756
          %v763 = vmul.f32 %v753, %v756
          %v764 = vmul.f32 %v755, %v756
          %v765 = vsub.f32 %v732, %v757
          %v766 = vsub.f32 %v733, %v758
          %v767 = vsub.f32 %v734, %v759
          %v768 = vsub.f32 %v735, %v760
          %v769 = vsub.f32 %v736, %v761
          %v770 = vsub.f32 %v737, %v762
          %v771 = vsub.f32 %v738, %v763
          %v772 = vsub.f32 %v739, %v764
          %v773 = vmul.f32 %v765, %v765
          %v774 = vmul.f32 %v766, %v766
          %v775 = vmul.f32 %v767, %v767
          %v776 = vmul.f32 %v768, %v768
          %v777 = vmul.f32 %v769, %v769
          %v778 = vmul.f32 %v770, %v770
          %v779 = vmul.f32 %v771, %v771
          %v780 = vmul.f32 %v772, %v772
          %781 = vadd.xlane.f32.xlu0 %v773
          %v782 = vpop.xlane.xlu0 %781
          %783 = vadd.xlane.f32.xlu0 %v774
          %v784 = vpop.xlane.xlu0 %783
          %785 = vadd.xlane.f32.xlu0 %v775
          %v786 = vpop.xlane.xlu0 %785
          %787 = vadd.xlane.f32.xlu0 %v776
          %v788 = vpop.xlane.xlu0 %787
          %789 = vadd.xlane.f32.xlu0 %v777
          %v790 = vpop.xlane.xlu0 %789
          %791 = vadd.xlane.f32.xlu0 %v778
          %v792 = vpop.xlane.xlu0 %791
          %793 = vadd.xlane.f32.xlu0 %v779
          %v794 = vpop.xlane.xlu0 %793
          %795 = vadd.xlane.f32.xlu0 %v780
          %v796 = vpop.xlane.xlu0 %795
          %v797 = vmul.f32 %v782, %v756
          %v798 = vmul.f32 %v784, %v756
          %v799 = vmul.f32 %v786, %v756
          %v800 = vmul.f32 %v788, %v756
          %v801 = vmul.f32 %v790, %v756
          %v802 = vmul.f32 %v792, %v756
          %v803 = vmul.f32 %v794, %v756
          %v804 = vmul.f32 %v796, %v756
          %v805 = vadd.f32 %v797, 1e-05
          %v806 = vadd.f32 %v798, 1e-05
          %v807 = vadd.f32 %v799, 1e-05
          %v808 = vadd.f32 %v800, 1e-05
          %v809 = vadd.f32 %v801, 1e-05
          %v810 = vadd.f32 %v802, 1e-05
          %v811 = vadd.f32 %v803, 1e-05
          %v812 = vadd.f32 %v804, 1e-05
          %v813 = vrsqrt.pop %v805
          %v814 = vrsqrt.pop %v806
          %v815 = vrsqrt.pop %v807
          %v816 = vrsqrt.pop %v808
          %v817 = vrsqrt.pop %v809
          %v818 = vrsqrt.pop %v810
          %v819 = vrsqrt.pop %v811
          %v820 = vrsqrt.pop %v812
          %v821 = vmul.f32 %v765, %v813
          %v822 = vmul.f32 %v766, %v814
          %v823 = vmul.f32 %v767, %v815
          %v824 = vmul.f32 %v768, %v816
          %v825 = vmul.f32 %v769, %v817
          %v826 = vmul.f32 %v770, %v818
          %v827 = vmul.f32 %v771, %v819
          %v828 = vmul.f32 %v772, %v820
          %v830 = vlaneseq
          %v831 = vshrl.u32 %v830, 7
          %v832 = vsub.s32 0, %v831
          %v833 = vrot.slane %v723, %v832
          %v835 = vmul.f32 %v821, %v833
          %v836 = vmul.f32 %v822, %v833
          %v837 = vmul.f32 %v823, %v833
          %v838 = vmul.f32 %v824, %v833
          %v839 = vmul.f32 %v825, %v833
          %v840 = vmul.f32 %v826, %v833
          %v841 = vmul.f32 %v827, %v833
          %v842 = vmul.f32 %v828, %v833
          %v844 = vlaneseq
          %v845 = vshrl.u32 %v844, 7
          %v846 = vsub.s32 0, %v845
          %v847 = vrot.slane %v724, %v846
          %v849 = vadd.f32 %v835, %v847
          %v850 = vadd.f32 %v836, %v847
          %v851 = vadd.f32 %v837, %v847
          %v852 = vadd.f32 %v838, %v847
          %v853 = vadd.f32 %v839, %v847
          %v854 = vadd.f32 %v840, %v847
          %v855 = vadd.f32 %v841, %v847
          %v856 = vadd.f32 %v842, %v847
          %v857 = vpack.c.bf16 %v850, %v849
          %v858 = vpack.c.bf16 %v852, %v851
          %v859 = vpack.c.bf16 %v854, %v853
          %v860 = vpack.c.bf16 %v856, %v855
          %v861 = vld [vmem:[#allocation18] sm:$0xff]
          %v862 = vld [vmem:[#allocation18 + $0x8] sm:$0xff]
          %v863 = vld [vmem:[#allocation18 + $0x10] sm:$0xff]
          %v864 = vld [vmem:[#allocation18 + $0x18] sm:$0xff]
          %v865 = vld [vmem:[#allocation18 + $0x20] sm:$0xff]
          %v866 = vld [vmem:[#allocation18 + $0x28] sm:$0xff]
          %v867 = vld [vmem:[#allocation18 + $0x30] sm:$0xff]
          %v868 = vld [vmem:[#allocation18 + $0x38] sm:$0xff]
          %v869 = vld [vmem:[#allocation18 + $0x40] sm:$0xff]
          %v870 = vld [vmem:[#allocation18 + $0x48] sm:$0xff]
          %v871 = vld [vmem:[#allocation18 + $0x50] sm:$0xff]
          %v872 = vld [vmem:[#allocation18 + $0x58] sm:$0xff]
          %v873 = vld [vmem:[#allocation18 + $0x60] sm:$0xff]
          %v874 = vld [vmem:[#allocation18 + $0x68] sm:$0xff]
          %v875 = vld [vmem:[#allocation18 + $0x70] sm:$0xff]
          %v876 = vld [vmem:[#allocation18 + $0x78] sm:$0xff]
          %v877 = vld [vmem:[#allocation20] sm:$0x3]
          %v879 = vlaneseq
          %v880 = vshrl.u32 %v879, 7
          %v881 = vsub.s32 0, %v880
          %v882 = vrot.slane %v877, %v881
          %v883 = vlaneseq
          %v884 = vshrl.u32 %v883, 7
          %v885 = vsub.s32 1, %v884
          %v886 = vrot.slane %v877, %v885
          %v905 = vunpack.c.l.b16 %v861
          %v906 = vunpack.c.h.b16 %v861
          %v907 = vunpack.c.l.b16 %v862
          %v908 = vunpack.c.h.b16 %v862
          %v909 = vunpack.c.l.b16 %v863
          %v910 = vunpack.c.h.b16 %v863
          %v911 = vunpack.c.l.b16 %v864
          %v912 = vunpack.c.h.b16 %v864
          %v913 = vunpack.c.l.b16 %v865
          %v914 = vunpack.c.h.b16 %v865
          %v915 = vunpack.c.l.b16 %v866
          %v916 = vunpack.c.h.b16 %v866
          %v917 = vunpack.c.l.b16 %v867
          %v918 = vunpack.c.h.b16 %v867
          %v919 = vunpack.c.l.b16 %v868
          %v920 = vunpack.c.h.b16 %v868
          %v921 = vunpack.c.l.b16 %v869
          %v922 = vunpack.c.h.b16 %v869
          %v923 = vunpack.c.l.b16 %v870
          %v924 = vunpack.c.h.b16 %v870
          %v925 = vunpack.c.l.b16 %v871
          %v926 = vunpack.c.h.b16 %v871
          %v927 = vunpack.c.l.b16 %v872
          %v928 = vunpack.c.h.b16 %v872
          %v929 = vunpack.c.l.b16 %v873
          %v930 = vunpack.c.h.b16 %v873
          %v931 = vunpack.c.l.b16 %v874
          %v932 = vunpack.c.h.b16 %v874
          %v933 = vunpack.c.l.b16 %v875
          %v934 = vunpack.c.h.b16 %v875
          %v935 = vunpack.c.l.b16 %v876
          %v936 = vunpack.c.h.b16 %v876
          %v937 = vpack.c.b16 %v907, %v905
          %v938 = vpack.c.b16 %v908, %v906
          %v939 = vpack.c.b16 %v911, %v909
          %v940 = vpack.c.b16 %v912, %v910
          %v941 = vpack.c.b16 %v915, %v913
          %v942 = vpack.c.b16 %v916, %v914
          %v943 = vpack.c.b16 %v919, %v917
          %v944 = vpack.c.b16 %v920, %v918
          %v945 = vpack.c.b16 %v923, %v921
          %v946 = vpack.c.b16 %v924, %v922
          %v947 = vpack.c.b16 %v927, %v925
          %v948 = vpack.c.b16 %v928, %v926
          %v949 = vpack.c.b16 %v931, %v929
          %v950 = vpack.c.b16 %v932, %v930
          %v951 = vpack.c.b16 %v935, %v933
          %v952 = vpack.c.b16 %v936, %v934
          %969 = vmatprep.subr.bf16.mxu0 %v938
          %970 = vmatpush1.bf16.msra.mxu0 %v937
          %971 = vmatprep.subr.bf16.mxu0 %v940
          %972 = vmatpush1.bf16.msra.mxu0 %v939
          %973 = vmatprep.subr.bf16.mxu0 %v942
          %974 = vmatpush1.bf16.msra.mxu0 %v941
          %975 = vmatprep.subr.bf16.mxu0 %v944
          %976 = vmatpush1.bf16.msra.mxu0 %v943
          %977 = vmatprep.subr.bf16.mxu0 %v946
          %978 = vmatpush1.bf16.msra.mxu0 %v945
          %979 = vmatprep.subr.bf16.mxu0 %v948
          %980 = vmatpush1.bf16.msra.mxu0 %v947
          %981 = vmatprep.subr.bf16.mxu0 %v950
          %982 = vmatpush1.bf16.msra.mxu0 %v949
          %983 = vmatprep.subr.bf16.mxu0 %v952
          %984 = vmatpush1.bf16.msra.mxu0 %v951
          %985 = vmatprep.subr.bf16.mxu0 0
          %986 = vmatpush1.bf16.msra.mxu0 0
          %987 = vmatprep.subr.bf16.mxu0 0
          %988 = vmatpush1.bf16.msra.mxu0 0
          %989 = vmatprep.subr.bf16.mxu0 0
          %990 = vmatpush1.bf16.msra.mxu0 0
          %991 = vmatprep.subr.bf16.mxu0 0
          %992 = vmatpush1.bf16.msra.mxu0 0
          %993 = vmatprep.subr.bf16.mxu0 0
          %994 = vmatpush1.bf16.msra.mxu0 0
          %995 = vmatprep.subr.bf16.mxu0 0
          %996 = vmatpush1.bf16.msra.mxu0 0
          %997 = vmatprep.subr.bf16.mxu0 0
          %998 = vmatpush1.bf16.msra.mxu0 0
          %999 = vmatprep.subr.bf16.mxu0 0
          %1000 = vmatpush1.bf16.msra.mxu0 0
          %1001 = vmatprep.mubr.bf16.mxu0 0
          %1002 = vmatmul.mubr.bf16.gmra.mrb[0].mxu0 %v857
          %v1003 = vpop.f32.mrb[0].mxu0
          %v1004 = vadd.f32 %v882, %v1003
          %v1005 = vpop.f32.mrb[0].mxu0
          %v1006 = vadd.f32 %v886, %v1005
          %v1007 = vpop.f32.mrb[0].mxu0
          %v1008 = vadd.f32 %v882, %v1007
          %v1009 = vpop.f32.mrb[0].mxu0
          %v1010 = vadd.f32 %v886, %v1009
          %1011 = vmatprep.mubr.bf16.mxu0 0
          %1012 = vmatmul.mubr.bf16.gmra.mrb[0].mxu0 %v858
          %v1013 = vpop.f32.mrb[0].mxu0
          %v1014 = vadd.f32 %v882, %v1013
          %v1015 = vpop.f32.mrb[0].mxu0
          %v1016 = vadd.f32 %v886, %v1015
          %v1017 = vpop.f32.mrb[0].mxu0
          %v1018 = vadd.f32 %v882, %v1017
          %v1019 = vpop.f32.mrb[0].mxu0
          %v1020 = vadd.f32 %v886, %v1019
          %1021 = vmatprep.mubr.bf16.mxu0 0
          %1022 = vmatmul.mubr.bf16.gmra.mrb[0].mxu0 %v859
          %v1023 = vpop.f32.mrb[0].mxu0
          %v1024 = vadd.f32 %v882, %v1023
          %v1025 = vpop.f32.mrb[0].mxu0
          %v1026 = vadd.f32 %v886, %v1025
          %v1027 = vpop.f32.mrb[0].mxu0
          %v1028 = vadd.f32 %v882, %v1027
          %v1029 = vpop.f32.mrb[0].mxu0
          %v1030 = vadd.f32 %v886, %v1029
          %1031 = vmatprep.mubr.bf16.mxu0 0
          %1032 = vmatmul.mubr.bf16.gmra.mrb[0].mxu0 %v860
          %v1033 = vpop.f32.mrb[0].mxu0
          %v1034 = vadd.f32 %v882, %v1033
          %v1035 = vpop.f32.mrb[0].mxu0
          %v1036 = vadd.f32 %v886, %v1035
          %v1037 = vpop.f32.mrb[0].mxu0
          %v1038 = vadd.f32 %v882, %v1037
          %v1039 = vpop.f32.mrb[0].mxu0
          %v1040 = vadd.f32 %v886, %v1039
          %1041 = vdwg.mxu0
          %1042 = vxpose.xlu0.b32.start [1/16] %v1004, 128
          %1043 = vxpose.xlu0.b32.cont [2/16] %v1008, 128
          %1044 = vxpose.xlu0.b32.cont [3/16] %v1014, 128
          %1045 = vxpose.xlu0.b32.cont [4/16] %v1018, 128
          %1046 = vxpose.xlu0.b32.cont [5/16] %v1024, 128
          %1047 = vxpose.xlu0.b32.cont [6/16] %v1028, 128
          %1048 = vxpose.xlu0.b32.cont [7/16] %v1034, 128
          %1049 = vxpose.xlu0.b32.cont [8/16] %v1038, 128
          %1050 = vxpose.xlu0.b32.cont [9/16] 0.0, 128
          %1051 = vxpose.xlu0.b32.cont [10/16] 0.0, 128
          %1052 = vxpose.xlu0.b32.cont [11/16] 0.0, 128
          %1053 = vxpose.xlu0.b32.cont [12/16] 0.0, 128
          %1054 = vxpose.xlu0.b32.cont [13/16] 0.0, 128
          %1055 = vxpose.xlu0.b32.cont [14/16] 0.0, 128
          %1056 = vxpose.xlu0.b32.cont [15/16] 0.0, 128
          %1057 = vxpose.xlu0.b32.end [16/16] 0.0, 128
          %v1058 = vpop.trf.xlu0
          %v1059 = vpop.trf.xlu0
          %v1060 = vpop.trf.xlu0
          %v1061 = vpop.trf.xlu0
          %v1062 = vpop.trf.xlu0
          %v1063 = vpop.trf.xlu0
          %v1064 = vpop.trf.xlu0
          %v1065 = vpop.trf.xlu0
          %v1066 = vpop.trf.xlu0
          %v1067 = vpop.trf.xlu0
          %v1068 = vpop.trf.xlu0
          %v1069 = vpop.trf.xlu0
          %v1070 = vpop.trf.xlu0
          %v1071 = vpop.trf.xlu0
          %v1072 = vpop.trf.xlu0
          %v1073 = vpop.trf.xlu0
          %1074 = vxpose.xlu0.b32.start [1/16] %v1006, 128
          %1075 = vxpose.xlu0.b32.cont [2/16] %v1010, 128
          %1076 = vxpose.xlu0.b32.cont [3/16] %v1016, 128
          %1077 = vxpose.xlu0.b32.cont [4/16] %v1020, 128
          %1078 = vxpose.xlu0.b32.cont [5/16] %v1026, 128
          %1079 = vxpose.xlu0.b32.cont [6/16] %v1030, 128
          %1080 = vxpose.xlu0.b32.cont [7/16] %v1036, 128
          %1081 = vxpose.xlu0.b32.cont [8/16] %v1040, 128
          %1082 = vxpose.xlu0.b32.cont [9/16] 0.0, 128
          %1083 = vxpose.xlu0.b32.cont [10/16] 0.0, 128
          %1084 = vxpose.xlu0.b32.cont [11/16] 0.0, 128
          %1085 = vxpose.xlu0.b32.cont [12/16] 0.0, 128
          %1086 = vxpose.xlu0.b32.cont [13/16] 0.0, 128
          %1087 = vxpose.xlu0.b32.cont [14/16] 0.0, 128
          %1088 = vxpose.xlu0.b32.cont [15/16] 0.0, 128
          %1089 = vxpose.xlu0.b32.end [16/16] 0.0, 128
          %v1090 = vpop.trf.xlu0
          %v1091 = vpop.trf.xlu0
          %v1092 = vpop.trf.xlu0
          %v1093 = vpop.trf.xlu0
          %v1094 = vpop.trf.xlu0
          %v1095 = vpop.trf.xlu0
          %v1096 = vpop.trf.xlu0
          %v1097 = vpop.trf.xlu0
          %v1098 = vpop.trf.xlu0
          %v1099 = vpop.trf.xlu0
          %v1100 = vpop.trf.xlu0
          %v1101 = vpop.trf.xlu0
          %v1102 = vpop.trf.xlu0
          %v1103 = vpop.trf.xlu0
          %v1104 = vpop.trf.xlu0
          %v1105 = vpop.trf.xlu0
          %v1106 = vpack.c.bf16 %v1059, %v1058
          %v1107 = vpack.c.bf16 %v1061, %v1060
          %v1108 = vpack.c.bf16 %v1063, %v1062
          %v1109 = vpack.c.bf16 %v1065, %v1064
          %v1110 = vpack.c.bf16 %v1067, %v1066
          %v1111 = vpack.c.bf16 %v1069, %v1068
          %v1112 = vpack.c.bf16 %v1071, %v1070
          %v1113 = vpack.c.bf16 %v1073, %v1072
          %vm1114 = vcmask 523264
          %1115 = vst.msk [vmem:[#allocation2] sm:$0xff] %vm1114, %v1106
          %1116 = vst.msk [vmem:[#allocation2 + $0x8] sm:$0xff] %vm1114, %v1107
          %1117 = vst.msk [vmem:[#allocation2 + $0x10] sm:$0xff] %vm1114, %v1108
          %1118 = vst.msk [vmem:[#allocation2 + $0x18] sm:$0xff] %vm1114, %v1109
          %1119 = vst.msk [vmem:[#allocation2 + $0x20] sm:$0xff] %vm1114, %v1110
          %1120 = vst.msk [vmem:[#allocation2 + $0x28] sm:$0xff] %vm1114, %v1111
          %1121 = vst.msk [vmem:[#allocation2 + $0x30] sm:$0xff] %vm1114, %v1112
          %1122 = vst.msk [vmem:[#allocation2 + $0x38] sm:$0xff] %vm1114, %v1113
          %v1123 = vpack.c.bf16 %v1091, %v1090
          %v1124 = vpack.c.bf16 %v1093, %v1092
          %v1125 = vpack.c.bf16 %v1095, %v1094
          %v1126 = vpack.c.bf16 %v1097, %v1096
          %v1127 = vpack.c.bf16 %v1099, %v1098
          %v1128 = vpack.c.bf16 %v1101, %v1100
          %v1129 = vpack.c.bf16 %v1103, %v1102
          %v1130 = vpack.c.bf16 %v1105, %v1104
          %1131 = vst.msk [vmem:[#allocation3] sm:$0xff] %vm1114, %v1123
          %1132 = vst.msk [vmem:[#allocation3 + $0x8] sm:$0xff] %vm1114, %v1124
          %1133 = vst.msk [vmem:[#allocation3 + $0x10] sm:$0xff] %vm1114, %v1125
          %1134 = vst.msk [vmem:[#allocation3 + $0x18] sm:$0xff] %vm1114, %v1126
          %1135 = vst.msk [vmem:[#allocation3 + $0x20] sm:$0xff] %vm1114, %v1127
          %1136 = vst.msk [vmem:[#allocation3 + $0x28] sm:$0xff] %vm1114, %v1128
          %1137 = vst.msk [vmem:[#allocation3 + $0x30] sm:$0xff] %vm1114, %v1129
          %1138 = vst.msk [vmem:[#allocation3 + $0x38] sm:$0xff] %vm1114, %v1130
        $region144: #{tpu_custom_call.1} parent=79 // pred_fallthru
          _
        // Predicated region
        $region145: #{tpu_custom_call.1} parent=79 // pred_check
          %p1139 = pneg %p727
        $region146: #{tpu_custom_call.1} parent=79 // pred_check_branch
          %1141 = sbr.rel (%p1139) target = $region148
        $region147: #{tpu_custom_call.1} parent=79 // pred_region
          %s1142 = scalar_lea.vmem %s618, %s725 [#allocation6]
          %v1143 = vld [vmem:[%s1142] sm:$0xff]
          %v1144 = vld [vmem:[%s1142 + $0x8] sm:$0xff]
          %v1145 = vld [vmem:[%s1142 + $0x10] sm:$0xff]
          %v1146 = vld [vmem:[%s1142 + $0x18] sm:$0xff]
          %1147 = vadd.xlane.f32.xlu0 %v1143
          %v1148 = vpop.xlane.xlu0 %1147
          %1149 = vadd.xlane.f32.xlu0 %v1144
          %v1150 = vpop.xlane.xlu0 %1149
          %1151 = vadd.xlane.f32.xlu0 %v1145
          %v1152 = vpop.xlane.xlu0 %1151
          %1153 = vadd.xlane.f32.xlu0 %v1146
          %v1154 = vpop.xlane.xlu0 %1153
          %v1155 = vrcp.pop 128.0
          %v1156 = vmul.f32 %v1148, %v1155
          %v1157 = vmul.f32 %v1150, %v1155
          %v1158 = vmul.f32 %v1152, %v1155
          %v1159 = vmul.f32 %v1154, %v1155
          %v1160 = vsub.f32 %v1143, %v1156
          %v1161 = vsub.f32 %v1144, %v1157
          %v1162 = vsub.f32 %v1145, %v1158
          %v1163 = vsub.f32 %v1146, %v1159
          %v1164 = vmul.f32 %v1160, %v1160
          %v1165 = vmul.f32 %v1161, %v1161
          %v1166 = vmul.f32 %v1162, %v1162
          %v1167 = vmul.f32 %v1163, %v1163
          %1168 = vadd.xlane.f32.xlu0 %v1164
          %v1169 = vpop.xlane.xlu0 %1168
          %1170 = vadd.xlane.f32.xlu0 %v1165
          %v1171 = vpop.xlane.xlu0 %1170
          %1172 = vadd.xlane.f32.xlu0 %v1166
          %v1173 = vpop.xlane.xlu0 %1172
          %1174 = vadd.xlane.f32.xlu0 %v1167
          %v1175 = vpop.xlane.xlu0 %1174
          %v1176 = vmul.f32 %v1169, %v1155
          %v1177 = vmul.f32 %v1171, %v1155
          %v1178 = vmul.f32 %v1173, %v1155
          %v1179 = vmul.f32 %v1175, %v1155
          %v1180 = vadd.f32 %v1176, 1e-05
          %v1181 = vadd.f32 %v1177, 1e-05
          %v1182 = vadd.f32 %v1178, 1e-05
          %v1183 = vadd.f32 %v1179, 1e-05
          %v1184 = vrsqrt.pop %v1180
          %v1185 = vrsqrt.pop %v1181
          %v1186 = vrsqrt.pop %v1182
          %v1187 = vrsqrt.pop %v1183
          %v1188 = vmul.f32 %v1160, %v1184
          %v1189 = vmul.f32 %v1161, %v1185
          %v1190 = vmul.f32 %v1162, %v1186
          %v1191 = vmul.f32 %v1163, %v1187
          %v1193 = vlaneseq
          %v1194 = vshrl.u32 %v1193, 7
          %v1195 = vsub.s32 0, %v1194
          %v1196 = vrot.slane %v723, %v1195
          %v1198 = vmul.f32 %v1188, %v1196
          %v1199 = vmul.f32 %v1189, %v1196
          %v1200 = vmul.f32 %v1190, %v1196
          %v1201 = vmul.f32 %v1191, %v1196
          %v1203 = vlaneseq
          %v1204 = vshrl.u32 %v1203, 7
          %v1205 = vsub.s32 0, %v1204
          %v1206 = vrot.slane %v724, %v1205
          %v1208 = vadd.f32 %v1198, %v1206
          %v1209 = vadd.f32 %v1199, %v1206
          %v1210 = vadd.f32 %v1200, %v1206
          %v1211 = vadd.f32 %v1201, %v1206
          %v1212 = vpack.c.bf16 %v1209, %v1208
          %v1213 = vpack.c.bf16 %v1211, %v1210
          %1214 = vst [vmem:[#allocation4] sm:$0xff] %v1212
          %1215 = vst [vmem:[#allocation4 + $0x8] sm:$0xff] %v1213
          %1216 = vst [vmem:[#allocation5] sm:$0xff] 0.0
          %1217 = vst [vmem:[#allocation5 + $0x8] sm:$0xff] 0.0
          %1218 = vst [vmem:[#allocation5 + $0x10] sm:$0xff] 0.0
          %1219 = vst [vmem:[#allocation5 + $0x18] sm:$0xff] 0.0
        $region148: #{tpu_custom_call.1} parent=79 // pred_fallthru
          _
        %s1220 = smul.u32 %s46, 32
        %v1221 = vld [vmem:[#allocation4] sm:$0xff]
        %v1222 = vld [vmem:[#allocation4 + $0x8] sm:$0xff]
        %s1223 = smul.u32 %s46, 16
        %s1224 = smul.addr %s1223, 4
        %s1225 = scalar_lea.vmem [#allocation15], %s1224
        %v1226 = vld [vmem:[%s1225] sm:$0xf]
        %v1227 = vld [vmem:[%s1225 + $0x4] sm:$0xf]
        %v1228 = vld [vmem:[%s1225 + $0x8] sm:$0xf]
        %v1229 = vld [vmem:[%s1225 + $0xc] sm:$0xf]
        %v1230 = vld [vmem:[%s1225 + $0x10] sm:$0xf]
        %v1231 = vld [vmem:[%s1225 + $0x14] sm:$0xf]
        %v1232 = vld [vmem:[%s1225 + $0x18] sm:$0xf]
        %v1233 = vld [vmem:[%s1225 + $0x1c] sm:$0xf]
        %v1234 = vld [vmem:[%s1225 + $0x20] sm:$0xf]
        %v1235 = vld [vmem:[%s1225 + $0x24] sm:$0xf]
        %v1236 = vld [vmem:[%s1225 + $0x28] sm:$0xf]
        %v1237 = vld [vmem:[%s1225 + $0x2c] sm:$0xf]
        %v1238 = vld [vmem:[%s1225 + $0x30] sm:$0xf]
        %v1239 = vld [vmem:[%s1225 + $0x34] sm:$0xf]
        %v1240 = vld [vmem:[%s1225 + $0x38] sm:$0xf]
        %v1241 = vld [vmem:[%s1225 + $0x3c] sm:$0xf]
        %s1242 = scalar_lea.vmem [#allocation17], %s46
        %v1243 = vld [vmem:[%s1242] sm:$0x1]
        %v1245 = vlaneseq
        %v1246 = vshrl.u32 %v1245, 7
        %v1247 = vsub.s32 0, %v1246
        %v1248 = vrot.slane %v1243, %v1247
        %v1266 = vunpack.c.l.b16 %v1226
        %v1267 = vunpack.c.l.b16 %v1227
        %v1268 = vunpack.c.l.b16 %v1228
        %v1269 = vunpack.c.l.b16 %v1229
        %v1270 = vunpack.c.l.b16 %v1230
        %v1271 = vunpack.c.l.b16 %v1231
        %v1272 = vunpack.c.l.b16 %v1232
        %v1273 = vunpack.c.l.b16 %v1233
        %v1274 = vunpack.c.l.b16 %v1234
        %v1275 = vunpack.c.l.b16 %v1235
        %v1276 = vunpack.c.l.b16 %v1236
        %v1277 = vunpack.c.l.b16 %v1237
        %v1278 = vunpack.c.l.b16 %v1238
        %v1279 = vunpack.c.l.b16 %v1239
        %v1280 = vunpack.c.l.b16 %v1240
        %v1281 = vunpack.c.l.b16 %v1241
        %v1282 = vpack.c.b16 %v1267, %v1266
        %v1283 = vpack.c.b16 %v1269, %v1268
        %v1284 = vpack.c.b16 %v1271, %v1270
        %v1285 = vpack.c.b16 %v1273, %v1272
        %v1286 = vpack.c.b16 %v1275, %v1274
        %v1287 = vpack.c.b16 %v1277, %v1276
        %v1288 = vpack.c.b16 %v1279, %v1278
        %v1289 = vpack.c.b16 %v1281, %v1280
        %1298 = vmatprep.subr.bf16.mxu0 0
        %1299 = vmatpush1.bf16.msra.mxu0 %v1282
        %1300 = vmatprep.subr.bf16.mxu0 0
        %1301 = vmatpush1.bf16.msra.mxu0 %v1283
        %1302 = vmatprep.subr.bf16.mxu0 0
        %1303 = vmatpush1.bf16.msra.mxu0 %v1284
        %1304 = vmatprep.subr.bf16.mxu0 0
        %1305 = vmatpush1.bf16.msra.mxu0 %v1285
        %1306 = vmatprep.subr.bf16.mxu0 0
        %1307 = vmatpush1.bf16.msra.mxu0 %v1286
        %1308 = vmatprep.subr.bf16.mxu0 0
        %1309 = vmatpush1.bf16.msra.mxu0 %v1287
        %1310 = vmatprep.subr.bf16.mxu0 0
        %1311 = vmatpush1.bf16.msra.mxu0 %v1288
        %1312 = vmatprep.subr.bf16.mxu0 0
        %1313 = vmatpush1.bf16.msra.mxu0 %v1289
        %1314 = vmatprep.subr.bf16.mxu0 0
        %1315 = vmatpush1.bf16.msra.mxu0 0
        %1316 = vmatprep.subr.bf16.mxu0 0
        %1317 = vmatpush1.bf16.msra.mxu0 0
        %1318 = vmatprep.subr.bf16.mxu0 0
        %1319 = vmatpush1.bf16.msra.mxu0 0
        %1320 = vmatprep.subr.bf16.mxu0 0
        %1321 = vmatpush1.bf16.msra.mxu0 0
        %1322 = vmatprep.subr.bf16.mxu0 0
        %1323 = vmatpush1.bf16.msra.mxu0 0
        %1324 = vmatprep.subr.bf16.mxu0 0
        %1325 = vmatpush1.bf16.msra.mxu0 0
        %1326 = vmatprep.subr.bf16.mxu0 0
        %1327 = vmatpush1.bf16.msra.mxu0 0
        %1328 = vmatprep.subr.bf16.mxu0 0
        %1329 = vmatpush1.bf16.msra.mxu0 0
        %1330 = vmatprep.mubr.bf16.mxu0 0
        %1331 = vmatmul.mubr.bf16.gmra.mrb[0].mxu0 %v1221
        %v1332 = vpop.f32.mrb[0].mxu0
        %v1333 = vadd.f32 %v1248, %v1332
        %v1334 = vpop.f32.mrb[0].mxu0
        %v1335 = vpop.f32.mrb[0].mxu0
        %v1336 = vadd.f32 %v1248, %v1335
        %v1337 = vpop.f32.mrb[0].mxu0
        %1338 = vmatprep.mubr.bf16.mxu0 0
        %1339 = vmatmul.mubr.bf16.gmra.mrb[0].mxu0 %v1222
        %v1340 = vpop.f32.mrb[0].mxu0
        %v1341 = vadd.f32 %v1248, %v1340
        %v1342 = vpop.f32.mrb[0].mxu0
        %v1343 = vpop.f32.mrb[0].mxu0
        %v1344 = vadd.f32 %v1248, %v1343
        %v1345 = vpop.f32.mrb[0].mxu0
        %1346 = vdwg.mxu0
        %v1347 = vpack.c.bf16 %v1336, %v1333
        %v1348 = vpack.c.bf16 %v1344, %v1341
        %s1349 = sshra.s32 %s1220, 4
        %s1350 = sand.u32 %s1220, 15
        %s1351 = smul.addr %s1349, 8
        %s1352 = scalar_lea.vmem [#allocation2], %s1351
        %v1353 = vld [vmem:[%s1352] sm:$0xff]
        %v1354 = vld [vmem:[%s1352 + $0x8] sm:$0xff]
        %s1355 = smul.addr %s1349, 8
        %s1356 = scalar_lea.vmem [#allocation3], %s1355
        %v1357 = vld [vmem:[%s1356] sm:$0xff]
        %v1358 = vld [vmem:[%s1356 + $0x8] sm:$0xff]
        %vm1359 = vcmask 261120
        %v1361 = vsel %vm1359, %v1347, 0
        %v1364 = vsel %vm1359, %v1348, 0
        %1366 = vmatprep.subr.bf16.mxu0 0
        %1367 = vmatpush1.bf16.msra.mxu0 %v1353
        %1368 = vmatprep.subr.bf16.mxu0 0
        %1369 = vmatpush1.bf16.msra.mxu0 %v1354
        %1370 = vmatprep.subr.bf16.mxu0 0
        %1371 = vmatpush1.bf16.msra.mxu0 0
        %1372 = vmatprep.subr.bf16.mxu0 0
        %1373 = vmatpush1.bf16.msra.mxu0 0
        %1374 = vmatprep.subr.bf16.mxu0 0
        %1375 = vmatpush1.bf16.msra.mxu0 0
        %1376 = vmatprep.subr.bf16.mxu0 0
        %1377 = vmatpush1.bf16.msra.mxu0 0
        %1378 = vmatprep.subr.bf16.mxu0 0
        %1379 = vmatpush1.bf16.msra.mxu0 0
        %1380 = vmatprep.subr.bf16.mxu0 0
        %1381 = vmatpush1.bf16.msra.mxu0 0
        %1382 = vmatprep.subr.bf16.mxu0 0
        %1383 = vmatpush1.bf16.msra.mxu0 0
        %1384 = vmatprep.subr.bf16.mxu0 0
        %1385 = vmatpush1.bf16.msra.mxu0 0
        %1386 = vmatprep.subr.bf16.mxu0 0
        %1387 = vmatpush1.bf16.msra.mxu0 0
        %1388 = vmatprep.subr.bf16.mxu0 0
        %1389 = vmatpush1.bf16.msra.mxu0 0
        %1390 = vmatprep.subr.bf16.mxu0 0
        %1391 = vmatpush1.bf16.msra.mxu0 0
        %1392 = vmatprep.subr.bf16.mxu0 0
        %1393 = vmatpush1.bf16.msra.mxu0 0
        %1394 = vmatprep.subr.bf16.mxu0 0
        %1395 = vmatpush1.bf16.msra.mxu0 0
        %1396 = vmatprep.subr.bf16.mxu0 0
        %1397 = vmatpush1.bf16.msra.mxu0 0
        %1398 = vmatprep.mubr.bf16.mxu0 0
        %1399 = vmatmul.mubr.bf16.gmra.mrb[0].mxu0 %v1361
        %v1400 = vpop.f32.mrb[0].mxu0
        %v1401 = vadd.f32 0.0, %v1400
        %v1402 = vpop.f32.mrb[0].mxu0
        %v1403 = vpop.f32.mrb[0].mxu0
        %v1404 = vadd.f32 0.0, %v1403
        %v1405 = vpop.f32.mrb[0].mxu0
        %1406 = vmatprep.mubr.bf16.mxu0 0
        %1407 = vmatmul.mubr.bf16.gmra.mrb[0].mxu0 %v1364
        %v1408 = vpop.f32.mrb[0].mxu0
        %v1409 = vadd.f32 0.0, %v1408
        %v1410 = vpop.f32.mrb[0].mxu0
        %v1411 = vpop.f32.mrb[0].mxu0
        %v1412 = vadd.f32 0.0, %v1411
        %v1413 = vpop.f32.mrb[0].mxu0
        %1414 = vdwg.mxu0
        %vm1415 = vcmask 523264
        %v1416 = vsel %vm1415, %v1401, -inf
        %1417 = vmax.xlane.f32.xlu0 %v1416
        %v1418 = vpop.xlane.xlu0 %1417
        %v1419 = vsel %vm1415, %v1404, -inf
        %1420 = vmax.xlane.f32.xlu0 %v1419
        %v1421 = vpop.xlane.xlu0 %1420
        %v1422 = vsel %vm1415, %v1409, -inf
        %1423 = vmax.xlane.f32.xlu0 %v1422
        %v1424 = vpop.xlane.xlu0 %1423
        %v1425 = vsel %vm1415, %v1412, -inf
        %1426 = vmax.xlane.f32.xlu0 %v1425
        %v1427 = vpop.xlane.xlu0 %1426
        %v1428 = vsub.f32 %v1401, %v1418
        %v1429 = vsub.f32 %v1404, %v1421
        %v1430 = vsub.f32 %v1409, %v1424
        %v1431 = vsub.f32 %v1412, %v1427
        %v1432 = vmul.f32 %v1428, 1.442695
        %v1433 = vpow.pop %v1432
        %v1434 = vmul.f32 %v1429, 1.442695
        %v1435 = vpow.pop %v1434
        %v1436 = vmul.f32 %v1430, 1.442695
        %v1437 = vpow.pop %v1436
        %v1438 = vmul.f32 %v1431, 1.442695
        %v1439 = vpow.pop %v1438
        %v1440 = vsel %vm1415, %v1433, 0.0
        %1441 = vadd.xlane.f32.xlu0 %v1440
        %v1442 = vpop.xlane.xlu0 %1441
        %v1443 = vsel %vm1415, %v1435, 0.0
        %1444 = vadd.xlane.f32.xlu0 %v1443
        %v1445 = vpop.xlane.xlu0 %1444
        %v1446 = vsel %vm1415, %v1437, 0.0
        %1447 = vadd.xlane.f32.xlu0 %v1446
        %v1448 = vpop.xlane.xlu0 %1447
        %v1449 = vsel %vm1415, %v1439, 0.0
        %1450 = vadd.xlane.f32.xlu0 %v1449
        %v1451 = vpop.xlane.xlu0 %1450
        %v1452 = vrcp.pop %v1442
        %v1453 = vrcp.pop %v1445
        %v1454 = vrcp.pop %v1448
        %v1455 = vrcp.pop %v1451
        %v1456 = vmul.f32 %v1433, %v1452
        %v1457 = vmul.f32 %v1435, %v1453
        %v1458 = vmul.f32 %v1437, %v1454
        %v1459 = vmul.f32 %v1439, %v1455
        %v1460 = vpack.c.bf16 %v1457, %v1456
        %v1461 = vpack.c.bf16 %v1459, %v1458
        %v1463 = vsel %vm1415, %v1460, 0
        %v1466 = vsel %vm1415, %v1461, 0
        %v1469 = vsel %vm1415, %v1357, 0
        %v1472 = vsel %vm1415, %v1358, 0
        %1474 = vmatprep.subr.bf16.mxu0 0
        %1475 = vmatpush1.bf16.xpose.msra.mxu0 %v1469
        %1476 = vmatprep.subr.bf16.mxu0 0
        %1477 = vmatpush1.bf16.xpose.msra.mxu0 %v1472
        %1478 = vmatprep.subr.bf16.mxu0 0
        %1479 = vmatpush1.bf16.xpose.msra.mxu0 0
        %1480 = vmatprep.subr.bf16.mxu0 0
        %1481 = vmatpush1.bf16.xpose.msra.mxu0 0
        %1482 = vmatprep.subr.bf16.mxu0 0
        %1483 = vmatpush1.bf16.xpose.msra.mxu0 0
        %1484 = vmatprep.subr.bf16.mxu0 0
        %1485 = vmatpush1.bf16.xpose.msra.mxu0 0
        %1486 = vmatprep.subr.bf16.mxu0 0
        %1487 = vmatpush1.bf16.xpose.msra.mxu0 0
        %1488 = vmatprep.subr.bf16.mxu0 0
        %1489 = vmatpush1.bf16.xpose.msra.mxu0 0
        %1490 = vmatprep.subr.bf16.mxu0 0
        %1491 = vmatpush1.bf16.xpose.msra.mxu0 0
        %1492 = vmatprep.subr.bf16.mxu0 0
        %1493 = vmatpush1.bf16.xpose.msra.mxu0 0
        %1494 = vmatprep.subr.bf16.mxu0 0
        %1495 = vmatpush1.bf16.xpose.msra.mxu0 0
        %1496 = vmatprep.subr.bf16.mxu0 0
        %1497 = vmatpush1.bf16.xpose.msra.mxu0 0
        %1498 = vmatprep.subr.bf16.mxu0 0
        %1499 = vmatpush1.bf16.xpose.msra.mxu0 0
        %1500 = vmatprep.subr.bf16.mxu0 0
        %1501 = vmatpush1.bf16.xpose.msra.mxu0 0
        %1502 = vmatprep.subr.bf16.mxu0 0
        %1503 = vmatpush1.bf16.xpose.msra.mxu0 0
        %1504 = vmatprep.subr.bf16.mxu0 0
        %1505 = vmatpush1.bf16.xpose.msra.mxu0 0
        %1506 = vmatprep.mubr.bf16.mxu0 0
        %1507 = vmatmul.mubr.bf16.gmra.mrb[0].mxu0 %v1463
        %v1508 = vpop.f32.mrb[0].mxu0
        %v1509 = vadd.f32 0.0, %v1508
        %v1510 = vpop.f32.mrb[0].mxu0
        %v1511 = vpop.f32.mrb[0].mxu0
        %v1512 = vadd.f32 0.0, %v1511
        %v1513 = vpop.f32.mrb[0].mxu0
        %1514 = vmatprep.mubr.bf16.mxu0 0
        %1515 = vmatmul.mubr.bf16.gmra.mrb[0].mxu0 %v1466
        %v1516 = vpop.f32.mrb[0].mxu0
        %v1517 = vadd.f32 0.0, %v1516
        %v1518 = vpop.f32.mrb[0].mxu0
        %v1519 = vpop.f32.mrb[0].mxu0
        %v1520 = vadd.f32 0.0, %v1519
        %v1521 = vpop.f32.mrb[0].mxu0
        %1522 = vdwg.mxu0
        %v1523 = vld [vmem:[#allocation5] sm:$0xff]
        %v1524 = vld [vmem:[#allocation5 + $0x8] sm:$0xff]
        %v1525 = vld [vmem:[#allocation5 + $0x10] sm:$0xff]
        %v1526 = vld [vmem:[#allocation5 + $0x18] sm:$0xff]
        %v1527 = vpack.c.bf16 %v1512, %v1509
        %v1528 = vpack.c.bf16 %v1520, %v1517
        %s1529 = smul.u32 %s46, 4
        %s1530 = smul.addr %s1529, 4
        %s1531 = scalar_lea.vmem [#allocation21], %s1530
        %v1532 = vld [vmem:[%s1531] sm:$0xf]
        %v1533 = vld [vmem:[%s1531 + $0x4] sm:$0xf]
        %v1534 = vld [vmem:[%s1531 + $0x8] sm:$0xf]
        %v1535 = vld [vmem:[%s1531 + $0xc] sm:$0xf]
        %v1540 = vunpack.c.l.b16 %v1532
        %v1541 = vunpack.c.l.b16 %v1533
        %v1542 = vunpack.c.l.b16 %v1534
        %v1543 = vunpack.c.l.b16 %v1535
        %v1544 = vpack.c.b16 %v1541, %v1540
        %v1545 = vpack.c.b16 %v1543, %v1542
        %v1549 = vsel %vm1359, %v1527, 0
        %v1552 = vsel %vm1359, %v1528, 0
        %1554 = vmatprep.subr.bf16.mxu0 0
        %1555 = vmatpush1.bf16.msra.mxu0 %v1544
        %1556 = vmatprep.subr.bf16.mxu0 0
        %1557 = vmatpush1.bf16.msra.mxu0 %v1545
        %1558 = vmatprep.subr.bf16.mxu0 0
        %1559 = vmatpush1.bf16.msra.mxu0 0
        %1560 = vmatprep.subr.bf16.mxu0 0
        %1561 = vmatpush1.bf16.msra.mxu0 0
        %1562 = vmatprep.subr.bf16.mxu0 0
        %1563 = vmatpush1.bf16.msra.mxu0 0
        %1564 = vmatprep.subr.bf16.mxu0 0
        %1565 = vmatpush1.bf16.msra.mxu0 0
        %1566 = vmatprep.subr.bf16.mxu0 0
        %1567 = vmatpush1.bf16.msra.mxu0 0
        %1568 = vmatprep.subr.bf16.mxu0 0
        %1569 = vmatpush1.bf16.msra.mxu0 0
        %1570 = vmatprep.subr.bf16.mxu0 0
        %1571 = vmatpush1.bf16.msra.mxu0 0
        %1572 = vmatprep.subr.bf16.mxu0 0
        %1573 = vmatpush1.bf16.msra.mxu0 0
        %1574 = vmatprep.subr.bf16.mxu0 0
        %1575 = vmatpush1.bf16.msra.mxu0 0
        %1576 = vmatprep.subr.bf16.mxu0 0
        %1577 = vmatpush1.bf16.msra.mxu0 0
        %1578 = vmatprep.subr.bf16.mxu0 0
        %1579 = vmatpush1.bf16.msra.mxu0 0
        %1580 = vmatprep.subr.bf16.mxu0 0
        %1581 = vmatpush1.bf16.msra.mxu0 0
        %1582 = vmatprep.subr.bf16.mxu0 0
        %1583 = vmatpush1.bf16.msra.mxu0 0
        %1584 = vmatprep.subr.bf16.mxu0 0
        %1585 = vmatpush1.bf16.msra.mxu0 0
        %1586 = vmatprep.mubr.bf16.mxu0 0
        %1587 = vmatmul.mubr.bf16.gmra.mrb[0].mxu0 %v1549
        %v1588 = vpop.f32.mrb[0].mxu0
        %v1589 = vadd.f32 0.0, %v1588
        %v1590 = vpop.f32.mrb[0].mxu0
        %v1591 = vpop.f32.mrb[0].mxu0
        %v1592 = vadd.f32 0.0, %v1591
        %v1593 = vpop.f32.mrb[0].mxu0
        %1594 = vmatprep.mubr.bf16.mxu0 0
        %1595 = vmatmul.mubr.bf16.gmra.mrb[0].mxu0 %v1552
        %v1596 = vpop.f32.mrb[0].mxu0
        %v1597 = vadd.f32 0.0, %v1596
        %v1598 = vpop.f32.mrb[0].mxu0
        %v1599 = vpop.f32.mrb[0].mxu0
        %v1600 = vadd.f32 0.0, %v1599
        %v1601 = vpop.f32.mrb[0].mxu0
        %1602 = vdwg.mxu0
        %v1603 = vadd.f32 %v1523, %v1589
        %v1604 = vadd.f32 %v1524, %v1592
        %v1605 = vadd.f32 %v1525, %v1597
        %v1606 = vadd.f32 %v1526, %v1600
        %1607 = vst [vmem:[#allocation5] sm:$0xff] %v1603
        %1608 = vst [vmem:[#allocation5 + $0x8] sm:$0xff] %v1604
        %1609 = vst [vmem:[#allocation5 + $0x10] sm:$0xff] %v1605
        %1610 = vst [vmem:[#allocation5 + $0x18] sm:$0xff] %v1606
        %p1611 = scmp.eq.s32.totalorder %s46, 3
        // Predicated region
        $region149: #{tpu_custom_call.1} parent=79 // pred_check
          %p1612 = pneg %p1611
        $region150: #{tpu_custom_call.1} parent=79 // pred_check_branch
          %1614 = sbr.rel (%p1612) target = $region152
        $region151: #{tpu_custom_call.1} parent=79 // pred_region
          %s1615 = scalar_lea.vmem %s618, %s725 [#allocation6]
          %v1616 = vld [vmem:[%s1615] sm:$0xff]
          %v1617 = vld [vmem:[%s1615 + $0x8] sm:$0xff]
          %v1618 = vld [vmem:[%s1615 + $0x10] sm:$0xff]
          %v1619 = vld [vmem:[%s1615 + $0x18] sm:$0xff]
          %v1620 = vld [vmem:[#allocation5] sm:$0xff]
          %v1621 = vld [vmem:[#allocation5 + $0x8] sm:$0xff]
          %v1622 = vld [vmem:[#allocation5 + $0x10] sm:$0xff]
          %v1623 = vld [vmem:[#allocation5 + $0x18] sm:$0xff]
          %v1624 = vadd.f32 %v1616, %v1620
          %v1625 = vadd.f32 %v1617, %v1621
          %v1626 = vadd.f32 %v1618, %v1622
          %v1627 = vadd.f32 %v1619, %v1623
          %v1628 = vld [vmem:[#allocation23] sm:$0x1]
          %v1630 = vlaneseq
          %v1631 = vshrl.u32 %v1630, 7
          %v1632 = vsub.s32 0, %v1631
          %v1633 = vrot.slane %v1628, %v1632
          %v1635 = vadd.f32 %v1624, %v1633
          %v1636 = vadd.f32 %v1625, %v1633
          %v1637 = vadd.f32 %v1626, %v1633
          %v1638 = vadd.f32 %v1627, %v1633
          %v1639 = vld [vmem:[#allocation12] sm:$0x1]
          %v1640 = vld [vmem:[#allocation14] sm:$0x1]
          %1641 = vadd.xlane.f32.xlu0 %v1635
          %v1642 = vpop.xlane.xlu0 %1641
          %1643 = vadd.xlane.f32.xlu0 %v1636
          %v1644 = vpop.xlane.xlu0 %1643
          %1645 = vadd.xlane.f32.xlu0 %v1637
          %v1646 = vpop.xlane.xlu0 %1645
          %1647 = vadd.xlane.f32.xlu0 %v1638
          %v1648 = vpop.xlane.xlu0 %1647
          %v1649 = vrcp.pop 128.0
          %v1650 = vmul.f32 %v1642, %v1649
          %v1651 = vmul.f32 %v1644, %v1649
          %v1652 = vmul.f32 %v1646, %v1649
          %v1653 = vmul.f32 %v1648, %v1649
          %v1654 = vsub.f32 %v1635, %v1650
          %v1655 = vsub.f32 %v1636, %v1651
          %v1656 = vsub.f32 %v1637, %v1652
          %v1657 = vsub.f32 %v1638, %v1653
          %v1658 = vmul.f32 %v1654, %v1654
          %v1659 = vmul.f32 %v1655, %v1655
          %v1660 = vmul.f32 %v1656, %v1656
          %v1661 = vmul.f32 %v1657, %v1657
          %1662 = vadd.xlane.f32.xlu0 %v1658
          %v1663 = vpop.xlane.xlu0 %1662
          %1664 = vadd.xlane.f32.xlu0 %v1659
          %v1665 = vpop.xlane.xlu0 %1664
          %1666 = vadd.xlane.f32.xlu0 %v1660
          %v1667 = vpop.xlane.xlu0 %1666
          %1668 = vadd.xlane.f32.xlu0 %v1661
          %v1669 = vpop.xlane.xlu0 %1668
          %v1670 = vmul.f32 %v1663, %v1649
          %v1671 = vmul.f32 %v1665, %v1649
          %v1672 = vmul.f32 %v1667, %v1649
          %v1673 = vmul.f32 %v1669, %v1649
          %v1674 = vadd.f32 %v1670, 1e-05
          %v1675 = vadd.f32 %v1671, 1e-05
          %v1676 = vadd.f32 %v1672, 1e-05
          %v1677 = vadd.f32 %v1673, 1e-05
          %v1678 = vrsqrt.pop %v1674
          %v1679 = vrsqrt.pop %v1675
          %v1680 = vrsqrt.pop %v1676
          %v1681 = vrsqrt.pop %v1677
          %v1682 = vmul.f32 %v1654, %v1678
          %v1683 = vmul.f32 %v1655, %v1679
          %v1684 = vmul.f32 %v1656, %v1680
          %v1685 = vmul.f32 %v1657, %v1681
          %v1687 = vlaneseq
          %v1688 = vshrl.u32 %v1687, 7
          %v1689 = vsub.s32 0, %v1688
          %v1690 = vrot.slane %v1639, %v1689
          %v1692 = vmul.f32 %v1682, %v1690
          %v1693 = vmul.f32 %v1683, %v1690
          %v1694 = vmul.f32 %v1684, %v1690
          %v1695 = vmul.f32 %v1685, %v1690
          %v1697 = vlaneseq
          %v1698 = vshrl.u32 %v1697, 7
          %v1699 = vsub.s32 0, %v1698
          %v1700 = vrot.slane %v1640, %v1699
          %v1702 = vadd.f32 %v1692, %v1700
          %v1703 = vadd.f32 %v1693, %v1700
          %v1704 = vadd.f32 %v1694, %v1700
          %v1705 = vadd.f32 %v1695, %v1700
          %v1706 = vpack.c.bf16 %v1703, %v1702
          %v1707 = vpack.c.bf16 %v1705, %v1704
          %v1708 = vld [vmem:[#allocation24] sm:$0xff]
          %v1709 = vld [vmem:[#allocation24 + $0x8] sm:$0xff]
          %v1710 = vld [vmem:[#allocation24 + $0x10] sm:$0xff]
          %v1711 = vld [vmem:[#allocation24 + $0x18] sm:$0xff]
          %v1712 = vld [vmem:[#allocation24 + $0x20] sm:$0xff]
          %v1713 = vld [vmem:[#allocation24 + $0x28] sm:$0xff]
          %v1714 = vld [vmem:[#allocation24 + $0x30] sm:$0xff]
          %v1715 = vld [vmem:[#allocation24 + $0x38] sm:$0xff]
          %v1716 = vld [vmem:[#allocation24 + $0x40] sm:$0xff]
          %v1717 = vld [vmem:[#allocation24 + $0x48] sm:$0xff]
          %v1718 = vld [vmem:[#allocation24 + $0x50] sm:$0xff]
          %v1719 = vld [vmem:[#allocation24 + $0x58] sm:$0xff]
          %v1720 = vld [vmem:[#allocation24 + $0x60] sm:$0xff]
          %v1721 = vld [vmem:[#allocation24 + $0x68] sm:$0xff]
          %v1722 = vld [vmem:[#allocation24 + $0x70] sm:$0xff]
          %v1723 = vld [vmem:[#allocation24 + $0x78] sm:$0xff]
          %v1724 = vld [vmem:[#allocation24 + $0x80] sm:$0xff]
          %v1725 = vld [vmem:[#allocation24 + $0x88] sm:$0xff]
          %v1726 = vld [vmem:[#allocation24 + $0x90] sm:$0xff]
          %v1727 = vld [vmem:[#allocation24 + $0x98] sm:$0xff]
          %v1728 = vld [vmem:[#allocation24 + $0xa0] sm:$0xff]
          %v1729 = vld [vmem:[#allocation24 + $0xa8] sm:$0xff]
          %v1730 = vld [vmem:[#allocation24 + $0xb0] sm:$0xff]
          %v1731 = vld [vmem:[#allocation24 + $0xb8] sm:$0xff]
          %v1732 = vld [vmem:[#allocation24 + $0xc0] sm:$0xff]
          %v1733 = vld [vmem:[#allocation24 + $0xc8] sm:$0xff]
          %v1734 = vld [vmem:[#allocation24 + $0xd0] sm:$0xff]
          %v1735 = vld [vmem:[#allocation24 + $0xd8] sm:$0xff]
          %v1736 = vld [vmem:[#allocation24 + $0xe0] sm:$0xff]
          %v1737 = vld [vmem:[#allocation24 + $0xe8] sm:$0xff]
          %v1738 = vld [vmem:[#allocation24 + $0xf0] sm:$0xff]
          %v1739 = vld [vmem:[#allocation24 + $0xf8] sm:$0xff]
          %v1740 = vld [vmem:[#allocation26] sm:$0xf]
          %v1742 = vlaneseq
          %v1743 = vshrl.u32 %v1742, 7
          %v1744 = vsub.s32 0, %v1743
          %v1745 = vrot.slane %v1740, %v1744
          %v1746 = vlaneseq
          %v1747 = vshrl.u32 %v1746, 7
          %v1748 = vsub.s32 1, %v1747
          %v1749 = vrot.slane %v1740, %v1748
          %v1750 = vlaneseq
          %v1751 = vshrl.u32 %v1750, 7
          %v1752 = vsub.s32 2, %v1751
          %v1753 = vrot.slane %v1740, %v1752
          %v1754 = vlaneseq
          %v1755 = vshrl.u32 %v1754, 7
          %v1756 = vsub.s32 3, %v1755
          %v1757 = vrot.slane %v1740, %v1756
          %v1794 = vunpack.c.l.b16 %v1708
          %v1795 = vunpack.c.h.b16 %v1708
          %v1796 = vunpack.c.l.b16 %v1709
          %v1797 = vunpack.c.h.b16 %v1709
          %v1798 = vunpack.c.l.b16 %v1710
          %v1799 = vunpack.c.h.b16 %v1710
          %v1800 = vunpack.c.l.b16 %v1711
          %v1801 = vunpack.c.h.b16 %v1711
          %v1802 = vunpack.c.l.b16 %v1712
          %v1803 = vunpack.c.h.b16 %v1712
          %v1804 = vunpack.c.l.b16 %v1713
          %v1805 = vunpack.c.h.b16 %v1713
          %v1806 = vunpack.c.l.b16 %v1714
          %v1807 = vunpack.c.h.b16 %v1714
          %v1808 = vunpack.c.l.b16 %v1715
          %v1809 = vunpack.c.h.b16 %v1715
          %v1810 = vunpack.c.l.b16 %v1716
          %v1811 = vunpack.c.h.b16 %v1716
          %v1812 = vunpack.c.l.b16 %v1717
          %v1813 = vunpack.c.h.b16 %v1717
          %v1814 = vunpack.c.l.b16 %v1718
          %v1815 = vunpack.c.h.b16 %v1718
          %v1816 = vunpack.c.l.b16 %v1719
          %v1817 = vunpack.c.h.b16 %v1719
          %v1818 = vunpack.c.l.b16 %v1720
          %v1819 = vunpack.c.h.b16 %v1720
          %v1820 = vunpack.c.l.b16 %v1721
          %v1821 = vunpack.c.h.b16 %v1721
          %v1822 = vunpack.c.l.b16 %v1722
          %v1823 = vunpack.c.h.b16 %v1722
          %v1824 = vunpack.c.l.b16 %v1723
          %v1825 = vunpack.c.h.b16 %v1723
          %v1826 = vunpack.c.l.b16 %v1724
          %v1827 = vunpack.c.h.b16 %v1724
          %v1828 = vunpack.c.l.b16 %v1725
          %v1829 = vunpack.c.h.b16 %v1725
          %v1830 = vunpack.c.l.b16 %v1726
          %v1831 = vunpack.c.h.b16 %v1726
          %v1832 = vunpack.c.l.b16 %v1727
          %v1833 = vunpack.c.h.b16 %v1727
          %v1834 = vunpack.c.l.b16 %v1728
          %v1835 = vunpack.c.h.b16 %v1728
          %v1836 = vunpack.c.l.b16 %v1729
          %v1837 = vunpack.c.h.b16 %v1729
          %v1838 = vunpack.c.l.b16 %v1730
          %v1839 = vunpack.c.h.b16 %v1730
          %v1840 = vunpack.c.l.b16 %v1731
          %v1841 = vunpack.c.h.b16 %v1731
          %v1842 = vunpack.c.l.b16 %v1732
          %v1843 = vunpack.c.h.b16 %v1732
          %v1844 = vunpack.c.l.b16 %v1733
          %v1845 = vunpack.c.h.b16 %v1733
          %v1846 = vunpack.c.l.b16 %v1734
          %v1847 = vunpack.c.h.b16 %v1734
          %v1848 = vunpack.c.l.b16 %v1735
          %v1849 = vunpack.c.h.b16 %v1735
          %v1850 = vunpack.c.l.b16 %v1736
          %v1851 = vunpack.c.h.b16 %v1736
          %v1852 = vunpack.c.l.b16 %v1737
          %v1853 = vunpack.c.h.b16 %v1737
          %v1854 = vunpack.c.l.b16 %v1738
          %v1855 = vunpack.c.h.b16 %v1738
          %v1856 = vunpack.c.l.b16 %v1739
          %v1857 = vunpack.c.h.b16 %v1739
          %v1858 = vpack.c.b16 %v1798, %v1794
          %v1859 = vpack.c.b16 %v1799, %v1795
          %v1860 = vpack.c.b16 %v1800, %v1796
          %v1861 = vpack.c.b16 %v1801, %v1797
          %v1862 = vpack.c.b16 %v1806, %v1802
          %v1863 = vpack.c.b16 %v1807, %v1803
          %v1864 = vpack.c.b16 %v1808, %v1804
          %v1865 = vpack.c.b16 %v1809, %v1805
          %v1866 = vpack.c.b16 %v1814, %v1810
          %v1867 = vpack.c.b16 %v1815, %v1811
          %v1868 = vpack.c.b16 %v1816, %v1812
          %v1869 = vpack.c.b16 %v1817, %v1813
          %v1870 = vpack.c.b16 %v1822, %v1818
          %v1871 = vpack.c.b16 %v1823, %v1819
          %v1872 = vpack.c.b16 %v1824, %v1820
          %v1873 = vpack.c.b16 %v1825, %v1821
          %v1874 = vpack.c.b16 %v1830, %v1826
          %v1875 = vpack.c.b16 %v1831, %v1827
          %v1876 = vpack.c.b16 %v1832, %v1828
          %v1877 = vpack.c.b16 %v1833, %v1829
          %v1878 = vpack.c.b16 %v1838, %v1834
          %v1879 = vpack.c.b16 %v1839, %v1835
          %v1880 = vpack.c.b16 %v1840, %v1836
          %v1881 = vpack.c.b16 %v1841, %v1837
          %v1882 = vpack.c.b16 %v1846, %v1842
          %v1883 = vpack.c.b16 %v1847, %v1843
          %v1884 = vpack.c.b16 %v1848, %v1844
          %v1885 = vpack.c.b16 %v1849, %v1845
          %v1886 = vpack.c.b16 %v1854, %v1850
          %v1887 = vpack.c.b16 %v1855, %v1851
          %v1888 = vpack.c.b16 %v1856, %v1852
          %v1889 = vpack.c.b16 %v1857, %v1853
          %1922 = vmatprep.subr.bf16.mxu0 %v1859
          %1923 = vmatpush1.bf16.msra.mxu0 %v1858
          %1924 = vmatprep.subr.bf16.mxu0 %v1863
          %1925 = vmatpush1.bf16.msra.mxu0 %v1862
          %1926 = vmatprep.subr.bf16.mxu0 %v1867
          %1927 = vmatpush1.bf16.msra.mxu0 %v1866
          %1928 = vmatprep.subr.bf16.mxu0 %v1871
          %1929 = vmatpush1.bf16.msra.mxu0 %v1870
          %1930 = vmatprep.subr.bf16.mxu0 %v1875
          %1931 = vmatpush1.bf16.msra.mxu0 %v1874
          %1932 = vmatprep.subr.bf16.mxu0 %v1879
          %1933 = vmatpush1.bf16.msra.mxu0 %v1878
          %1934 = vmatprep.subr.bf16.mxu0 %v1883
          %1935 = vmatpush1.bf16.msra.mxu0 %v1882
          %1936 = vmatprep.subr.bf16.mxu0 %v1887
          %1937 = vmatpush1.bf16.msra.mxu0 %v1886
          %1938 = vmatprep.subr.bf16.mxu0 0
          %1939 = vmatpush1.bf16.msra.mxu0 0
          %1940 = vmatprep.subr.bf16.mxu0 0
          %1941 = vmatpush1.bf16.msra.mxu0 0
          %1942 = vmatprep.subr.bf16.mxu0 0
          %1943 = vmatpush1.bf16.msra.mxu0 0
          %1944 = vmatprep.subr.bf16.mxu0 0
          %1945 = vmatpush1.bf16.msra.mxu0 0
          %1946 = vmatprep.subr.bf16.mxu0 0
          %1947 = vmatpush1.bf16.msra.mxu0 0
          %1948 = vmatprep.subr.bf16.mxu0 0
          %1949 = vmatpush1.bf16.msra.mxu0 0
          %1950 = vmatprep.subr.bf16.mxu0 0
          %1951 = vmatpush1.bf16.msra.mxu0 0
          %1952 = vmatprep.subr.bf16.mxu0 0
          %1953 = vmatpush1.bf16.msra.mxu0 0
          %1954 = vmatprep.mubr.bf16.mxu0 0
          %1955 = vmatmul.mubr.bf16.gmra.mrb[0].mxu0 %v1706
          %v1956 = vpop.f32.mrb[0].mxu0
          %v1957 = vadd.f32 %v1745, %v1956
          %v1958 = vpop.f32.mrb[0].mxu0
          %v1959 = vadd.f32 %v1749, %v1958
          %v1960 = vpop.f32.mrb[0].mxu0
          %v1961 = vadd.f32 %v1745, %v1960
          %v1962 = vpop.f32.mrb[0].mxu0
          %v1963 = vadd.f32 %v1749, %v1962
          %1964 = vmatprep.mubr.bf16.mxu0 0
          %1965 = vmatmul.mubr.bf16.gmra.mrb[0].mxu0 %v1707
          %v1966 = vpop.f32.mrb[0].mxu0
          %v1967 = vadd.f32 %v1745, %v1966
          %v1968 = vpop.f32.mrb[0].mxu0
          %v1969 = vadd.f32 %v1749, %v1968
          %v1970 = vpop.f32.mrb[0].mxu0
          %v1971 = vadd.f32 %v1745, %v1970
          %v1972 = vpop.f32.mrb[0].mxu0
          %v1973 = vadd.f32 %v1749, %v1972
          %1974 = vdwg.mxu0
          %1975 = vmatprep.subr.bf16.mxu0 %v1861
          %1976 = vmatpush1.bf16.msra.mxu0 %v1860
          %1977 = vmatprep.subr.bf16.mxu0 %v1865
          %1978 = vmatpush1.bf16.msra.mxu0 %v1864
          %1979 = vmatprep.subr.bf16.mxu0 %v1869
          %1980 = vmatpush1.bf16.msra.mxu0 %v1868
          %1981 = vmatprep.subr.bf16.mxu0 %v1873
          %1982 = vmatpush1.bf16.msra.mxu0 %v1872
          %1983 = vmatprep.subr.bf16.mxu0 %v1877
          %1984 = vmatpush1.bf16.msra.mxu0 %v1876
          %1985 = vmatprep.subr.bf16.mxu0 %v1881
          %1986 = vmatpush1.bf16.msra.mxu0 %v1880
          %1987 = vmatprep.subr.bf16.mxu0 %v1885
          %1988 = vmatpush1.bf16.msra.mxu0 %v1884
          %1989 = vmatprep.subr.bf16.mxu0 %v1889
          %1990 = vmatpush1.bf16.msra.mxu0 %v1888
          %1991 = vmatprep.subr.bf16.mxu0 0
          %1992 = vmatpush1.bf16.msra.mxu0 0
          %1993 = vmatprep.subr.bf16.mxu0 0
          %1994 = vmatpush1.bf16.msra.mxu0 0
          %1995 = vmatprep.subr.bf16.mxu0 0
          %1996 = vmatpush1.bf16.msra.mxu0 0
          %1997 = vmatprep.subr.bf16.mxu0 0
          %1998 = vmatpush1.bf16.msra.mxu0 0
          %1999 = vmatprep.subr.bf16.mxu0 0
          %2000 = vmatpush1.bf16.msra.mxu0 0
          %2001 = vmatprep.subr.bf16.mxu0 0
          %2002 = vmatpush1.bf16.msra.mxu0 0
          %2003 = vmatprep.subr.bf16.mxu0 0
          %2004 = vmatpush1.bf16.msra.mxu0 0
          %2005 = vmatprep.subr.bf16.mxu0 0
          %2006 = vmatpush1.bf16.msra.mxu0 0
          %2007 = vmatprep.mubr.bf16.mxu0 0
          %2008 = vmatmul.mubr.bf16.gmra.mrb[0].mxu0 %v1706
          %v2009 = vpop.f32.mrb[0].mxu0
          %v2010 = vadd.f32 %v1753, %v2009
          %v2011 = vpop.f32.mrb[0].mxu0
          %v2012 = vadd.f32 %v1757, %v2011
          %v2013 = vpop.f32.mrb[0].mxu0
          %v2014 = vadd.f32 %v1753, %v2013
          %v2015 = vpop.f32.mrb[0].mxu0
          %v2016 = vadd.f32 %v1757, %v2015
          %2017 = vmatprep.mubr.bf16.mxu0 0
          %2018 = vmatmul.mubr.bf16.gmra.mrb[0].mxu0 %v1707
          %v2019 = vpop.f32.mrb[0].mxu0
          %v2020 = vadd.f32 %v1753, %v2019
          %v2021 = vpop.f32.mrb[0].mxu0
          %v2022 = vadd.f32 %v1757, %v2021
          %v2023 = vpop.f32.mrb[0].mxu0
          %v2024 = vadd.f32 %v1753, %v2023
          %v2025 = vpop.f32.mrb[0].mxu0
          %v2026 = vadd.f32 %v1757, %v2025
          %2027 = vdwg.mxu0
          %v2028 = vmul.f32 %v1957, 0.5
          %v2029 = vmul.f32 %v1959, 0.5
          %v2030 = vmul.f32 %v2010, 0.5
          %v2031 = vmul.f32 %v2012, 0.5
          %v2032 = vmul.f32 %v1961, 0.5
          %v2033 = vmul.f32 %v1963, 0.5
          %v2034 = vmul.f32 %v2014, 0.5
          %v2035 = vmul.f32 %v2016, 0.5
          %v2036 = vmul.f32 %v1967, 0.5
          %v2037 = vmul.f32 %v1969, 0.5
          %v2038 = vmul.f32 %v2020, 0.5
          %v2039 = vmul.f32 %v2022, 0.5
          %v2040 = vmul.f32 %v1971, 0.5
          %v2041 = vmul.f32 %v1973, 0.5
          %v2042 = vmul.f32 %v2024, 0.5
          %v2043 = vmul.f32 %v2026, 0.5
          %v2044 = vmul.f32 %v1957, 0.70710677
          %v2045 = vmul.f32 %v1959, 0.70710677
          %v2046 = vmul.f32 %v2010, 0.70710677
          %v2047 = vmul.f32 %v2012, 0.70710677
          %v2048 = vmul.f32 %v1961, 0.70710677
          %v2049 = vmul.f32 %v1963, 0.70710677
          %v2050 = vmul.f32 %v2014, 0.70710677
          %v2051 = vmul.f32 %v2016, 0.70710677
          %v2052 = vmul.f32 %v1967, 0.70710677
          %v2053 = vmul.f32 %v1969, 0.70710677
          %v2054 = vmul.f32 %v2020, 0.70710677
          %v2055 = vmul.f32 %v2022, 0.70710677
          %v2056 = vmul.f32 %v1971, 0.70710677
          %v2057 = vmul.f32 %v1973, 0.70710677
          %v2058 = vmul.f32 %v2024, 0.70710677
          %v2059 = vmul.f32 %v2026, 0.70710677
          %v2060 = verf.f32.pop %v2044
          %v2061 = verf.f32.pop %v2045
          %v2062 = verf.f32.pop %v2046
          %v2063 = verf.f32.pop %v2047
          %v2064 = verf.f32.pop %v2048
          %v2065 = verf.f32.pop %v2049
          %v2066 = verf.f32.pop %v2050
          %v2067 = verf.f32.pop %v2051
          %v2068 = verf.f32.pop %v2052
          %v2069 = verf.f32.pop %v2053
          %v2070 = verf.f32.pop %v2054
          %v2071 = verf.f32.pop %v2055
          %v2072 = verf.f32.pop %v2056
          %v2073 = verf.f32.pop %v2057
          %v2074 = verf.f32.pop %v2058
          %v2075 = verf.f32.pop %v2059
          %v2076 = vadd.f32 %v2060, 1.0
          %v2077 = vadd.f32 %v2061, 1.0
          %v2078 = vadd.f32 %v2062, 1.0
          %v2079 = vadd.f32 %v2063, 1.0
          %v2080 = vadd.f32 %v2064, 1.0
          %v2081 = vadd.f32 %v2065, 1.0
          %v2082 = vadd.f32 %v2066, 1.0
          %v2083 = vadd.f32 %v2067, 1.0
          %v2084 = vadd.f32 %v2068, 1.0
          %v2085 = vadd.f32 %v2069, 1.0
          %v2086 = vadd.f32 %v2070, 1.0
          %v2087 = vadd.f32 %v2071, 1.0
          %v2088 = vadd.f32 %v2072, 1.0
          %v2089 = vadd.f32 %v2073, 1.0
          %v2090 = vadd.f32 %v2074, 1.0
          %v2091 = vadd.f32 %v2075, 1.0
          %v2092 = vmul.f32 %v2028, %v2076
          %v2093 = vmul.f32 %v2029, %v2077
          %v2094 = vmul.f32 %v2030, %v2078
          %v2095 = vmul.f32 %v2031, %v2079
          %v2096 = vmul.f32 %v2032, %v2080
          %v2097 = vmul.f32 %v2033, %v2081
          %v2098 = vmul.f32 %v2034, %v2082
          %v2099 = vmul.f32 %v2035, %v2083
          %v2100 = vmul.f32 %v2036, %v2084
          %v2101 = vmul.f32 %v2037, %v2085
          %v2102 = vmul.f32 %v2038, %v2086
          %v2103 = vmul.f32 %v2039, %v2087
          %v2104 = vmul.f32 %v2040, %v2088
          %v2105 = vmul.f32 %v2041, %v2089
          %v2106 = vmul.f32 %v2042, %v2090
          %v2107 = vmul.f32 %v2043, %v2091
          %v2108 = vpack.c.bf16 %v2096, %v2092
          %v2109 = vpack.c.bf16 %v2097, %v2093
          %v2110 = vpack.c.bf16 %v2098, %v2094
          %v2111 = vpack.c.bf16 %v2099, %v2095
          %v2112 = vpack.c.bf16 %v2104, %v2100
          %v2113 = vpack.c.bf16 %v2105, %v2101
          %v2114 = vpack.c.bf16 %v2106, %v2102
          %v2115 = vpack.c.bf16 %v2107, %v2103
          %v2116 = vld [vmem:[#allocation27] sm:$0xf]
          %v2117 = vld [vmem:[#allocation27 + $0x4] sm:$0xf]
          %v2118 = vld [vmem:[#allocation27 + $0x8] sm:$0xf]
          %v2119 = vld [vmem:[#allocation27 + $0xc] sm:$0xf]
          %v2120 = vld [vmem:[#allocation27 + $0x10] sm:$0xf]
          %v2121 = vld [vmem:[#allocation27 + $0x14] sm:$0xf]
          %v2122 = vld [vmem:[#allocation27 + $0x18] sm:$0xf]
          %v2123 = vld [vmem:[#allocation27 + $0x1c] sm:$0xf]
          %v2124 = vld [vmem:[#allocation27 + $0x20] sm:$0xf]
          %v2125 = vld [vmem:[#allocation27 + $0x24] sm:$0xf]
          %v2126 = vld [vmem:[#allocation27 + $0x28] sm:$0xf]
          %v2127 = vld [vmem:[#allocation27 + $0x2c] sm:$0xf]
          %v2128 = vld [vmem:[#allocation27 + $0x30] sm:$0xf]
          %v2129 = vld [vmem:[#allocation27 + $0x34] sm:$0xf]
          %v2130 = vld [vmem:[#allocation27 + $0x38] sm:$0xf]
          %v2131 = vld [vmem:[#allocation27 + $0x3c] sm:$0xf]
          %v2132 = vld [vmem:[#allocation27 + $0x40] sm:$0xf]
          %v2133 = vld [vmem:[#allocation27 + $0x44] sm:$0xf]
          %v2134 = vld [vmem:[#allocation27 + $0x48] sm:$0xf]
          %v2135 = vld [vmem:[#allocation27 + $0x4c] sm:$0xf]
          %v2136 = vld [vmem:[#allocation27 + $0x50] sm:$0xf]
          %v2137 = vld [vmem:[#allocation27 + $0x54] sm:$0xf]
          %v2138 = vld [vmem:[#allocation27 + $0x58] sm:$0xf]
          %v2139 = vld [vmem:[#allocation27 + $0x5c] sm:$0xf]
          %v2140 = vld [vmem:[#allocation27 + $0x60] sm:$0xf]
          %v2141 = vld [vmem:[#allocation27 + $0x64] sm:$0xf]
          %v2142 = vld [vmem:[#allocation27 + $0x68] sm:$0xf]
          %v2143 = vld [vmem:[#allocation27 + $0x6c] sm:$0xf]
          %v2144 = vld [vmem:[#allocation27 + $0x70] sm:$0xf]
          %v2145 = vld [vmem:[#allocation27 + $0x74] sm:$0xf]
          %v2146 = vld [vmem:[#allocation27 + $0x78] sm:$0xf]
          %v2147 = vld [vmem:[#allocation27 + $0x7c] sm:$0xf]
          %v2148 = vld [vmem:[#allocation27 + $0x80] sm:$0xf]
          %v2149 = vld [vmem:[#allocation27 + $0x84] sm:$0xf]
          %v2150 = vld [vmem:[#allocation27 + $0x88] sm:$0xf]
          %v2151 = vld [vmem:[#allocation27 + $0x8c] sm:$0xf]
          %v2152 = vld [vmem:[#allocation27 + $0x90] sm:$0xf]
          %v2153 = vld [vmem:[#allocation27 + $0x94] sm:$0xf]
          %v2154 = vld [vmem:[#allocation27 + $0x98] sm:$0xf]
          %v2155 = vld [vmem:[#allocation27 + $0x9c] sm:$0xf]
          %v2156 = vld [vmem:[#allocation27 + $0xa0] sm:$0xf]
          %v2157 = vld [vmem:[#allocation27 + $0xa4] sm:$0xf]
          %v2158 = vld [vmem:[#allocation27 + $0xa8] sm:$0xf]
          %v2159 = vld [vmem:[#allocation27 + $0xac] sm:$0xf]
          %v2160 = vld [vmem:[#allocation27 + $0xb0] sm:$0xf]
          %v2161 = vld [vmem:[#allocation27 + $0xb4] sm:$0xf]
          %v2162 = vld [vmem:[#allocation27 + $0xb8] sm:$0xf]
          %v2163 = vld [vmem:[#allocation27 + $0xbc] sm:$0xf]
          %v2164 = vld [vmem:[#allocation27 + $0xc0] sm:$0xf]
          %v2165 = vld [vmem:[#allocation27 + $0xc4] sm:$0xf]
          %v2166 = vld [vmem:[#allocation27 + $0xc8] sm:$0xf]
          %v2167 = vld [vmem:[#allocation27 + $0xcc] sm:$0xf]
          %v2168 = vld [vmem:[#allocation27 + $0xd0] sm:$0xf]
          %v2169 = vld [vmem:[#allocation27 + $0xd4] sm:$0xf]
          %v2170 = vld [vmem:[#allocation27 + $0xd8] sm:$0xf]
          %v2171 = vld [vmem:[#allocation27 + $0xdc] sm:$0xf]
          %v2172 = vld [vmem:[#allocation27 + $0xe0] sm:$0xf]
          %v2173 = vld [vmem:[#allocation27 + $0xe4] sm:$0xf]
          %v2174 = vld [vmem:[#allocation27 + $0xe8] sm:$0xf]
          %v2175 = vld [vmem:[#allocation27 + $0xec] sm:$0xf]
          %v2176 = vld [vmem:[#allocation27 + $0xf0] sm:$0xf]
          %v2177 = vld [vmem:[#allocation27 + $0xf4] sm:$0xf]
          %v2178 = vld [vmem:[#allocation27 + $0xf8] sm:$0xf]
          %v2179 = vld [vmem:[#allocation27 + $0xfc] sm:$0xf]
          %v2180 = vld [vmem:[#allocation29] sm:$0x1]
          %v2182 = vlaneseq
          %v2183 = vshrl.u32 %v2182, 7
          %v2184 = vsub.s32 0, %v2183
          %v2185 = vrot.slane %v2180, %v2184
          %v2251 = vunpack.c.l.b16 %v2116
          %v2252 = vunpack.c.l.b16 %v2117
          %v2253 = vunpack.c.l.b16 %v2118
          %v2254 = vunpack.c.l.b16 %v2119
          %v2255 = vunpack.c.l.b16 %v2120
          %v2256 = vunpack.c.l.b16 %v2121
          %v2257 = vunpack.c.l.b16 %v2122
          %v2258 = vunpack.c.l.b16 %v2123
          %v2259 = vunpack.c.l.b16 %v2124
          %v2260 = vunpack.c.l.b16 %v2125
          %v2261 = vunpack.c.l.b16 %v2126
          %v2262 = vunpack.c.l.b16 %v2127
          %v2263 = vunpack.c.l.b16 %v2128
          %v2264 = vunpack.c.l.b16 %v2129
          %v2265 = vunpack.c.l.b16 %v2130
          %v2266 = vunpack.c.l.b16 %v2131
          %v2267 = vunpack.c.l.b16 %v2132
          %v2268 = vunpack.c.l.b16 %v2133
          %v2269 = vunpack.c.l.b16 %v2134
          %v2270 = vunpack.c.l.b16 %v2135
          %v2271 = vunpack.c.l.b16 %v2136
          %v2272 = vunpack.c.l.b16 %v2137
          %v2273 = vunpack.c.l.b16 %v2138
          %v2274 = vunpack.c.l.b16 %v2139
          %v2275 = vunpack.c.l.b16 %v2140
          %v2276 = vunpack.c.l.b16 %v2141
          %v2277 = vunpack.c.l.b16 %v2142
          %v2278 = vunpack.c.l.b16 %v2143
          %v2279 = vunpack.c.l.b16 %v2144
          %v2280 = vunpack.c.l.b16 %v2145
          %v2281 = vunpack.c.l.b16 %v2146
          %v2282 = vunpack.c.l.b16 %v2147
          %v2283 = vunpack.c.l.b16 %v2148
          %v2284 = vunpack.c.l.b16 %v2149
          %v2285 = vunpack.c.l.b16 %v2150
          %v2286 = vunpack.c.l.b16 %v2151
          %v2287 = vunpack.c.l.b16 %v2152
          %v2288 = vunpack.c.l.b16 %v2153
          %v2289 = vunpack.c.l.b16 %v2154
          %v2290 = vunpack.c.l.b16 %v2155
          %v2291 = vunpack.c.l.b16 %v2156
          %v2292 = vunpack.c.l.b16 %v2157
          %v2293 = vunpack.c.l.b16 %v2158
          %v2294 = vunpack.c.l.b16 %v2159
          %v2295 = vunpack.c.l.b16 %v2160
          %v2296 = vunpack.c.l.b16 %v2161
          %v2297 = vunpack.c.l.b16 %v2162
          %v2298 = vunpack.c.l.b16 %v2163
          %v2299 = vunpack.c.l.b16 %v2164
          %v2300 = vunpack.c.l.b16 %v2165
          %v2301 = vunpack.c.l.b16 %v2166
          %v2302 = vunpack.c.l.b16 %v2167
          %v2303 = vunpack.c.l.b16 %v2168
          %v2304 = vunpack.c.l.b16 %v2169
          %v2305 = vunpack.c.l.b16 %v2170
          %v2306 = vunpack.c.l.b16 %v2171
          %v2307 = vunpack.c.l.b16 %v2172
          %v2308 = vunpack.c.l.b16 %v2173
          %v2309 = vunpack.c.l.b16 %v2174
          %v2310 = vunpack.c.l.b16 %v2175
          %v2311 = vunpack.c.l.b16 %v2176
          %v2312 = vunpack.c.l.b16 %v2177
          %v2313 = vunpack.c.l.b16 %v2178
          %v2314 = vunpack.c.l.b16 %v2179
          %v2315 = vpack.c.b16 %v2252, %v2251
          %v2316 = vpack.c.b16 %v2254, %v2253
          %v2317 = vpack.c.b16 %v2256, %v2255
          %v2318 = vpack.c.b16 %v2258, %v2257
          %v2319 = vpack.c.b16 %v2260, %v2259
          %v2320 = vpack.c.b16 %v2262, %v2261
          %v2321 = vpack.c.b16 %v2264, %v2263
          %v2322 = vpack.c.b16 %v2266, %v2265
          %v2323 = vpack.c.b16 %v2268, %v2267
          %v2324 = vpack.c.b16 %v2270, %v2269
          %v2325 = vpack.c.b16 %v2272, %v2271
          %v2326 = vpack.c.b16 %v2274, %v2273
          %v2327 = vpack.c.b16 %v2276, %v2275
          %v2328 = vpack.c.b16 %v2278, %v2277
          %v2329 = vpack.c.b16 %v2280, %v2279
          %v2330 = vpack.c.b16 %v2282, %v2281
          %v2331 = vpack.c.b16 %v2284, %v2283
          %v2332 = vpack.c.b16 %v2286, %v2285
          %v2333 = vpack.c.b16 %v2288, %v2287
          %v2334 = vpack.c.b16 %v2290, %v2289
          %v2335 = vpack.c.b16 %v2292, %v2291
          %v2336 = vpack.c.b16 %v2294, %v2293
          %v2337 = vpack.c.b16 %v2296, %v2295
          %v2338 = vpack.c.b16 %v2298, %v2297
          %v2339 = vpack.c.b16 %v2300, %v2299
          %v2340 = vpack.c.b16 %v2302, %v2301
          %v2341 = vpack.c.b16 %v2304, %v2303
          %v2342 = vpack.c.b16 %v2306, %v2305
          %v2343 = vpack.c.b16 %v2308, %v2307
          %v2344 = vpack.c.b16 %v2310, %v2309
          %v2345 = vpack.c.b16 %v2312, %v2311
          %v2346 = vpack.c.b16 %v2314, %v2313
          %2379 = vmatprep.subr.bf16.mxu0 0
          %2380 = vmatpush1.bf16.msra.mxu0 %v2315
          %2381 = vmatprep.subr.bf16.mxu0 0
          %2382 = vmatpush1.bf16.msra.mxu0 %v2316
          %2383 = vmatprep.subr.bf16.mxu0 0
          %2384 = vmatpush1.bf16.msra.mxu0 %v2317
          %2385 = vmatprep.subr.bf16.mxu0 0
          %2386 = vmatpush1.bf16.msra.mxu0 %v2318
          %2387 = vmatprep.subr.bf16.mxu0 0
          %2388 = vmatpush1.bf16.msra.mxu0 %v2319
          %2389 = vmatprep.subr.bf16.mxu0 0
          %2390 = vmatpush1.bf16.msra.mxu0 %v2320
          %2391 = vmatprep.subr.bf16.mxu0 0
          %2392 = vmatpush1.bf16.msra.mxu0 %v2321
          %2393 = vmatprep.subr.bf16.mxu0 0
          %2394 = vmatpush1.bf16.msra.mxu0 %v2322
          %2395 = vmatprep.subr.bf16.mxu0 0
          %2396 = vmatpush1.bf16.msra.mxu0 %v2323
          %2397 = vmatprep.subr.bf16.mxu0 0
          %2398 = vmatpush1.bf16.msra.mxu0 %v2324
          %2399 = vmatprep.subr.bf16.mxu0 0
          %2400 = vmatpush1.bf16.msra.mxu0 %v2325
          %2401 = vmatprep.subr.bf16.mxu0 0
          %2402 = vmatpush1.bf16.msra.mxu0 %v2326
          %2403 = vmatprep.subr.bf16.mxu0 0
          %2404 = vmatpush1.bf16.msra.mxu0 %v2327
          %2405 = vmatprep.subr.bf16.mxu0 0
          %2406 = vmatpush1.bf16.msra.mxu0 %v2328
          %2407 = vmatprep.subr.bf16.mxu0 0
          %2408 = vmatpush1.bf16.msra.mxu0 %v2329
          %2409 = vmatprep.subr.bf16.mxu0 0
          %2410 = vmatpush1.bf16.msra.mxu0 %v2330
          %2411 = vmatprep.mubr.bf16.mxu0 %v2109
          %2412 = vmatmul.mubr.bf16.gmra.mrb[0].mxu0 %v2108
          %v2413 = vpop.f32.mrb[0].mxu0
          %v2414 = vadd.f32 %v2185, %v2413
          %v2415 = vpop.f32.mrb[0].mxu0
          %v2416 = vpop.f32.mrb[0].mxu0
          %v2417 = vadd.f32 %v2185, %v2416
          %v2418 = vpop.f32.mrb[0].mxu0
          %2419 = vmatprep.mubr.bf16.mxu0 %v2113
          %2420 = vmatmul.mubr.bf16.gmra.mrb[0].mxu0 %v2112
          %v2421 = vpop.f32.mrb[0].mxu0
          %v2422 = vadd.f32 %v2185, %v2421
          %v2423 = vpop.f32.mrb[0].mxu0
          %v2424 = vpop.f32.mrb[0].mxu0
          %v2425 = vadd.f32 %v2185, %v2424
          %v2426 = vpop.f32.mrb[0].mxu0
          %2427 = vdwg.mxu0
          %2428 = vmatprep.subr.bf16.mxu0 0
          %2429 = vmatpush1.bf16.msra.mxu0 %v2331
          %2430 = vmatprep.subr.bf16.mxu0 0
          %2431 = vmatpush1.bf16.msra.mxu0 %v2332
          %2432 = vmatprep.subr.bf16.mxu0 0
          %2433 = vmatpush1.bf16.msra.mxu0 %v2333
          %2434 = vmatprep.subr.bf16.mxu0 0
          %2435 = vmatpush1.bf16.msra.mxu0 %v2334
          %2436 = vmatprep.subr.bf16.mxu0 0
          %2437 = vmatpush1.bf16.msra.mxu0 %v2335
          %2438 = vmatprep.subr.bf16.mxu0 0
          %2439 = vmatpush1.bf16.msra.mxu0 %v2336
          %2440 = vmatprep.subr.bf16.mxu0 0
          %2441 = vmatpush1.bf16.msra.mxu0 %v2337
          %2442 = vmatprep.subr.bf16.mxu0 0
          %2443 = vmatpush1.bf16.msra.mxu0 %v2338
          %2444 = vmatprep.subr.bf16.mxu0 0
          %2445 = vmatpush1.bf16.msra.mxu0 %v2339
          %2446 = vmatprep.subr.bf16.mxu0 0
          %2447 = vmatpush1.bf16.msra.mxu0 %v2340
          %2448 = vmatprep.subr.bf16.mxu0 0
          %2449 = vmatpush1.bf16.msra.mxu0 %v2341
          %2450 = vmatprep.subr.bf16.mxu0 0
          %2451 = vmatpush1.bf16.msra.mxu0 %v2342
          %2452 = vmatprep.subr.bf16.mxu0 0
          %2453 = vmatpush1.bf16.msra.mxu0 %v2343
          %2454 = vmatprep.subr.bf16.mxu0 0
          %2455 = vmatpush1.bf16.msra.mxu0 %v2344
          %2456 = vmatprep.subr.bf16.mxu0 0
          %2457 = vmatpush1.bf16.msra.mxu0 %v2345
          %2458 = vmatprep.subr.bf16.mxu0 0
          %2459 = vmatpush1.bf16.msra.mxu0 %v2346
          %2460 = vmatprep.mubr.bf16.mxu0 %v2111
          %2461 = vmatmul.mubr.bf16.gmra.mrb[0].mxu0 %v2110
          %v2462 = vpop.f32.mrb[0].mxu0
          %v2463 = vadd.f32 %v2414, %v2462
          %v2464 = vpop.f32.mrb[0].mxu0
          %v2465 = vpop.f32.mrb[0].mxu0
          %v2466 = vadd.f32 %v2417, %v2465
          %v2467 = vpop.f32.mrb[0].mxu0
          %2468 = vmatprep.mubr.bf16.mxu0 %v2115
          %2469 = vmatmul.mubr.bf16.gmra.mrb[0].mxu0 %v2114
          %v2470 = vpop.f32.mrb[0].mxu0
          %v2471 = vadd.f32 %v2422, %v2470
          %v2472 = vpop.f32.mrb[0].mxu0
          %v2473 = vpop.f32.mrb[0].mxu0
          %v2474 = vadd.f32 %v2425, %v2473
          %v2475 = vpop.f32.mrb[0].mxu0
          %2476 = vdwg.mxu0
          %v2477 = vadd.f32 %v1635, %v2463
          %v2478 = vadd.f32 %v1636, %v2466
          %v2479 = vadd.f32 %v1637, %v2471
          %v2480 = vadd.f32 %v1638, %v2474
          %2481 = vst [vmem:[%s720] sm:$0xff] %v2477
          %2482 = vst [vmem:[%s720 + $0x8] sm:$0xff] %v2478
          %2483 = vst [vmem:[%s720 + $0x10] sm:$0xff] %v2479
          %2484 = vst [vmem:[%s720 + $0x18] sm:$0xff] %v2480
        $region152: #{tpu_custom_call.1} parent=79 // pred_fallthru
          _
        %s2485 = sand.u32 %s388, 1
        %s2486 = scalar_lea.sflag [#allocation8], %s2485
        %s2487 = sand.u32 %s388, 1
        %s2488 = smul.addr %s2487, 32
        %s2489 = scalar_lea.vmem [#allocation30], %s2488
        // Predicated region
        $region153: #{tpu_custom_call.1} parent=79 // pred_check
          %p2490 = pneg %p398
        $region154: #{tpu_custom_call.1} parent=79 // pred_check_branch
          %2492 = sbr.rel (%p2490) target = $region156
        $region155: #{tpu_custom_call.1} parent=79 // pred_region
          %s2493 = smul.u32 4, %s45
          %s2495 = ssub.s32 512, 512
          %2496 = vsyncadd %s2486, %s2495
          %s2497 = smul.addr %s44, 8
          %s2498 = sadd.s32 %s2493, %s2497
          %s2499 = smul.addr %s2498, 128
          %s2500 = scalar_lea.hbm %s15, %s2499
          %s2501 = sshll.u32 %s2489, 4
          %s2502 = int_to_ptr.vmem [resolvable:$true] %s2501
          %2507 = dma.vmem_to_hbm [thread:$0]  %s2502, 512, %s2500, %s2486, 128, 128, 8
        $region156: #{tpu_custom_call.1} parent=79 // pred_fallthru
          _
      $region80: #{tpu_custom_call.1} parent=5 // pred_fallthru
        _
      %p2508 = scmp.le.s32.totalorder 2, %s34
      // Predicated region
      $region157: #{tpu_custom_call.1} parent=5 // pred_check
        %p2509 = pneg %p2508
      $region158: #{tpu_custom_call.1} parent=5 // pred_check_branch
        %2511 = sbr.rel (%p2509) target = $region160
      $region159: #{tpu_custom_call.1} parent=5 // pred_region
        %s2512 = ssub.s32 %s34, 2
        // Predicated region
        $region161: #{tpu_custom_call.1} parent=159 // pred_check
          %p2513 = pneg %p404
        $region162: #{tpu_custom_call.1} parent=159 // pred_check_branch
          %2515 = sbr.rel (%p2513) target = $region164
        $region163: #{tpu_custom_call.1} parent=159 // pred_region
          %s2516 = sand.u32 %s389, 1
          %s2517 = scalar_lea.sflag [#allocation8], %s2516
          %s2518 = sand.u32 %s389, 1
          %s2519 = smul.addr %s2518, 32
          %s2520 = scalar_lea.vmem [#allocation30], %s2519
          %2521 = dma.done %s2517, 512
        $region164: #{tpu_custom_call.1} parent=159 // pred_fallthru
          _
      $region160: #{tpu_custom_call.1} parent=5 // pred_fallthru
        _
    $region6: #{tpu_custom_call.1} parent=1 // loop_footer
      %s38 = sadd.s32 1, %s34
    $region7: #{tpu_custom_call.1} parent=1 // loop_footer_branch
      %33 = sbr.rel target = $region3
    $region8: #{tpu_custom_call.1} parent=1 // loop_exit
      _
    %2522 = vsyncpa [#allocation7], 1
    %s2523 = scalar_lea.sflag [#allocation7], 1
    %2524 = vsyncpa %s2523, 1
    %2525 = vsyncpa [#allocation10], 1
    %2526 = vsyncpa [#allocation13], 1
    %2527 = vsyncpa [#allocation16], 1
    %2528 = vsyncpa [#allocation19], 1
    %2529 = vsyncpa [#allocation22], 1
    %2530 = vsyncpa [#allocation25], 1
    %2531 = vsyncpa [#allocation28], 1
    %2532 = vsyncpa [#allocation8], 1
    %s2533 = scalar_lea.sflag [#allocation8], 1
    %2534 = vsyncpa %s2533, 1

</llo_original>
